<compile_context>
chip_gen: v7x
topology: tpu7x:2x2x1
jax: 0.10.0
libtpu: 0.0.40
codegen_flags: <defaults>
</compile_context>

<pallas_src>
import functools

import jax
import jax.numpy as jnp
from jax import lax
from jax.experimental import pallas as pl
from jax.experimental.pallas import tpu as pltpu

# ----------------------------- small (lane-dense) synthetic config -----------
BATCH = 2
SEQ = 128
VOCAB = 256
HIDDEN = 128
NUM_HEADS = 2
HEAD_DIM = HIDDEN // NUM_HEADS
INTERMEDIATE = 512
NUM_LAYERS = 2
MAX_POS = 160
PAD_TOKEN_ID = 1
LN_EPS = 1e-5

_VMEM_LIMIT = 32 * 1024 * 1024


def _ln_rows(y, gamma, beta):
    """Row-wise layernorm in f32 (y, gamma, beta already f32)."""
    mu = jnp.mean(y, axis=-1, keepdims=True)
    yc = y - mu
    var = jnp.mean(yc * yc, axis=-1, keepdims=True)
    return yc * lax.rsqrt(var + LN_EPS) * gamma + beta


# ----------------------------- kernels ---------------------------------------
def _embed_ln_kernel(w_ref, p_ref, t_ref, g_ref, b_ref, o_ref):
    y = (w_ref[...].astype(jnp.float32)
         + p_ref[...].astype(jnp.float32)
         + t_ref[...].astype(jnp.float32))
    o_ref[...] = _ln_rows(y, g_ref[...], b_ref[...]).astype(o_ref.dtype)


def _layer_kernel(x_ref, mask_ref, wqkv_ref, bqkv_ref, wo_ref, bo_ref,
                  ln1g_ref, ln1b_ref, wi_ref, bi_ref, wo2_ref, bo2_ref,
                  ln2g_ref, ln2b_ref, o_ref, *, num_heads, head_dim, scale):
    """One full encoder layer for one batch element, entirely in VMEM."""
    hidden = num_heads * head_dim
    x = x_ref[0]                                           # [S, H] bf16

    # ---- fused Q/K/V projection (single [H, 3H] matmul on the MXU) ----
    qkv = jnp.dot(x, wqkv_ref[...],
                  preferred_element_type=jnp.float32) + bqkv_ref[...]
    qkv = qkv.astype(jnp.bfloat16)                         # [S, 3H]
    q = qkv[:, 0:hidden]
    k = qkv[:, hidden:2 * hidden]
    v = qkv[:, 2 * hidden:3 * hidden]

    # additive mask built in-kernel from the {0,1} attention mask
    add_mask = (1.0 - mask_ref[0]) * (-1e9)                # [1, S] f32

    # ---- multi-head attention (heads unrolled; f32 softmax) ----
    ctxs = []
    for h in range(num_heads):
        sl = slice(h * head_dim, (h + 1) * head_dim)
        qh, kh, vh = q[:, sl], k[:, sl], v[:, sl]
        s = lax.dot_general(qh, kh, (((1,), (1,)), ((), ())),
                            preferred_element_type=jnp.float32)   # [S, S]
        s = s * scale + add_mask
        s = s - jnp.max(s, axis=-1, keepdims=True)
        p = jnp.exp(s)
        p = p * pl.reciprocal(jnp.sum(p, axis=-1, keepdims=True), approx=True)
        ctxs.append(jnp.dot(p.astype(vh.dtype), vh,
                            preferred_element_type=jnp.float32))
    ctx = jnp.concatenate(ctxs, axis=-1).astype(jnp.bfloat16)     # [S, H]

    # ---- attention output projection + bias + residual + LayerNorm ----
    y = (jnp.dot(ctx, wo_ref[...], preferred_element_type=jnp.float32)
         + bo_ref[...] + x.astype(jnp.float32))
    x1 = _ln_rows(y, ln1g_ref[...], ln1b_ref[...])                # f32 [S, H]
    x1b = x1.astype(jnp.bfloat16)

    # ---- FFN (wi + bias + GELU + wo2 + bias + residual + LayerNorm) ----
    # TODO(synk): HF RoBERTa uses exact erf GELU; tanh approximation kept for
    # guaranteed Mosaic lowering.
    hmid = (jnp.dot(x1b, wi_ref[...], preferred_element_type=jnp.float32)
            + bi_ref[...])
    hmid = jax.nn.gelu(hmid, approximate=True)
    y2 = jnp.dot(hmid.astype(wo2_ref.dtype), wo2_ref[...],
                 preferred_element_type=jnp.float32)
    y2 = y2 + bo2_ref[...] + x1
    o_ref[0] = _ln_rows(y2, ln2g_ref[...], ln2b_ref[...]).astype(o_ref.dtype)


def _pooler_l2_kernel(x_ref, w_ref, b_ref, o_ref):
    y = jnp.dot(x_ref[...], w_ref[...],
                preferred_element_type=jnp.float32) + b_ref[...]
    y = jnp.tanh(y)
    # F.normalize(dim=-1): x / max(||x||_2, 1e-12)
    nrm = jnp.sqrt(jnp.sum(y * y, axis=-1, keepdims=True))
    o_ref[...] = y / jnp.maximum(nrm, 1e-12)


# ----------------------------- pallas_call wrappers ---------------------------
def embed_ln(word, pos, type_emb, gamma, beta, *, tm=128):
    m, h = word.shape
    return pl.pallas_call(
        _embed_ln_kernel,
        out_shape=jax.ShapeDtypeStruct((m, h), jnp.bfloat16),
        grid_spec=pltpu.PrefetchScalarGridSpec(
            num_scalar_prefetch=0, grid=(m // tm,),
            in_specs=[
                pl.BlockSpec((tm, h), lambda i: (i, 0)),
                pl.BlockSpec((tm, h), lambda i: (i, 0)),
                pl.BlockSpec((1, h), lambda i: (0, 0)),
                pl.BlockSpec((1, h), lambda i: (0, 0)),
                pl.BlockSpec((1, h), lambda i: (0, 0)),
            ],
            out_specs=pl.BlockSpec((tm, h), lambda i: (i, 0)),
        ),
        compiler_params=pltpu.CompilerParams(
            dimension_semantics=("parallel",),
            vmem_limit_bytes=_VMEM_LIMIT),
    )(word, pos, type_emb, gamma, beta)


def transformer_layer(x, mask_f, lp):
    """x: [B, S, H] bf16, mask_f: [B, 1, S] f32."""
    # TODO(synk): at real RoBERTa-large shapes (H=1024, I=4096, S up to 512)
    # the weights/activations would need K/N tiling with a VMEM accumulator to
    # respect v7x's 64 MiB VMEM; at these toy shapes the full layer fits.
    b, s, h = x.shape
    inter = lp["wi"].shape[1]
    kern = functools.partial(_layer_kernel, num_heads=NUM_HEADS,
                             head_dim=HEAD_DIM, scale=1.0 / (HEAD_DIM ** 0.5))
    return pl.pallas_call(
        kern,
        out_shape=jax.ShapeDtypeStruct((b, s, h), jnp.bfloat16),
        grid_spec=pltpu.PrefetchScalarGridSpec(
            num_scalar_prefetch=0, grid=(b,),
            in_specs=[
                pl.BlockSpec((1, s, h), lambda i: (i, 0, 0)),
                pl.BlockSpec((1, 1, s), lambda i: (i, 0, 0)),
                pl.BlockSpec((h, 3 * h), lambda i: (0, 0)),
                pl.BlockSpec((1, 3 * h), lambda i: (0, 0)),
                pl.BlockSpec((h, h), lambda i: (0, 0)),
                pl.BlockSpec((1, h), lambda i: (0, 0)),
                pl.BlockSpec((1, h), lambda i: (0, 0)),
                pl.BlockSpec((1, h), lambda i: (0, 0)),
                pl.BlockSpec((h, inter), lambda i: (0, 0)),
                pl.BlockSpec((1, inter), lambda i: (0, 0)),
                pl.BlockSpec((inter, h), lambda i: (0, 0)),
                pl.BlockSpec((1, h), lambda i: (0, 0)),
                pl.BlockSpec((1, h), lambda i: (0, 0)),
                pl.BlockSpec((1, h), lambda i: (0, 0)),
            ],
            out_specs=pl.BlockSpec((1, s, h), lambda i: (i, 0, 0)),
        ),
        compiler_params=pltpu.CompilerParams(
            dimension_semantics=("parallel",),
            vmem_limit_bytes=_VMEM_LIMIT),
    )(x, mask_f, lp["wqkv"], lp["bqkv"], lp["wo"], lp["bo"],
      lp["ln1_g"], lp["ln1_b"], lp["wi"], lp["bi"], lp["wo2"], lp["bo2"],
      lp["ln2_g"], lp["ln2_b"])


def pooler_normalize(cls, w, b):
    bsz, h = cls.shape
    return pl.pallas_call(
        _pooler_l2_kernel,
        out_shape=jax.ShapeDtypeStruct((bsz, h), jnp.float32),
        compiler_params=pltpu.CompilerParams(vmem_limit_bytes=_VMEM_LIMIT),
    )(cls, w, b)


# ----------------------------- parameters ------------------------------------
def init_params(key):
    ks = iter(jax.random.split(key, 4 + NUM_LAYERS * 4))

    def w(shape, scale=0.02):
        return (scale * jax.random.normal(next(ks), shape)).astype(jnp.bfloat16)

    word_emb = w((VOCAB, HIDDEN)).at[PAD_TOKEN_ID].set(0)
    pos_emb = w((MAX_POS, HIDDEN)).at[PAD_TOKEN_ID].set(0)

    params = {
        "word_emb": word_emb,
        "pos_emb": pos_emb,
        "type_emb": w((1, HIDDEN)),
        "emb_ln_g": jnp.ones((1, HIDDEN), jnp.float32),
        "emb_ln_b": jnp.zeros((1, HIDDEN), jnp.float32),
        "pooler_w": w((HIDDEN, HIDDEN)),
        "pooler_b": jnp.zeros((1, HIDDEN), jnp.float32),
        "layers": [],
    }
    for _ in range(NUM_LAYERS):
        params["layers"].append({
            "wqkv": w((HIDDEN, 3 * HIDDEN)),
            "bqkv": jnp.zeros((1, 3 * HIDDEN), jnp.float32),
            "wo": w((HIDDEN, HIDDEN)),
            "bo": jnp.zeros((1, HIDDEN), jnp.float32),
            "ln1_g": jnp.ones((1, HIDDEN), jnp.float32),
            "ln1_b": jnp.zeros((1, HIDDEN), jnp.float32),
            "wi": w((HIDDEN, INTERMEDIATE)),
            "bi": jnp.zeros((1, INTERMEDIATE), jnp.float32),
            "wo2": w((INTERMEDIATE, HIDDEN)),
            "bo2": jnp.zeros((1, HIDDEN), jnp.float32),
            "ln2_g": jnp.ones((1, HIDDEN), jnp.float32),
            "ln2_b": jnp.zeros((1, HIDDEN), jnp.float32),
        })
    return params


# ----------------------------- forward pass -----------------------------------
def easyrec_forward(params, input_ids, attention_mask):
    """input_ids: [B, S] int32, attention_mask: [B, S] (1 = keep, 0 = pad)."""
    b, s = input_ids.shape
    m = b * s

    # RoBERTa create_position_ids_from_input_ids: cumsum of mask + padding_idx;
    # padded positions map to the (zeroed) padding_idx row.
    mask_i = attention_mask.astype(jnp.int32)
    pos_ids = jnp.cumsum(mask_i, axis=1) * mask_i + PAD_TOKEN_ID

    # TODO(synk): at real vocab (50k x 1024) the gather would use
    # PrefetchScalarGridSpec scalar-prefetch + pl.Element rows on an HBM table;
    # at this toy vocab the XLA gather is glue.
    word = params["word_emb"][input_ids].reshape(m, HIDDEN)
    pos = params["pos_emb"][pos_ids].reshape(m, HIDDEN)
    x = embed_ln(word, pos, params["type_emb"],
                 params["emb_ln_g"], params["emb_ln_b"])            # [M, H] bf16
    x = x.reshape(b, s, HIDDEN)

    mask_f = attention_mask.astype(jnp.float32).reshape(b, 1, s)    # [B, 1, S]

    # one fused pallas_call per encoder layer
    for lp in params["layers"]:
        x = transformer_layer(x, mask_f, lp)                        # [B, S, H]

    # pooler: dense(tanh) on [CLS] token, then F.normalize(dim=-1)
    cls = x[:, 0, :]                                                # [B, H]
    return pooler_normalize(cls, params["pooler_w"], params["pooler_b"])


# TODO(synk): HF tokenizer (string -> input_ids) and pretrained-checkpoint
# loading have no Pallas equivalent; the kernel consumes token ids directly.

if __name__ == "__main__":
    key = jax.random.PRNGKey(0)
    pkey, ikey = jax.random.split(key)
    params = init_params(pkey)

    input_ids = jax.random.randint(ikey, (BATCH, SEQ), 0, VOCAB, dtype=jnp.int32)
    # second sequence has 32 padded positions at the end
    attention_mask = jnp.concatenate(
        [jnp.ones((1, SEQ), jnp.int32),
         jnp.concatenate([jnp.ones((1, SEQ - 32), jnp.int32),
                          jnp.zeros((1, 32), jnp.int32)], axis=1)],
        axis=0)
    input_ids = jnp.where(attention_mask == 1, input_ids, PAD_TOKEN_ID)

    fwd = jax.jit(easyrec_forward)
    emb = fwd(params, input_ids, attention_mask)
    emb = jax.block_until_ready(emb)

    assert emb.shape == (BATCH, HIDDEN)
    assert emb.dtype == jnp.float32
    norms = jnp.linalg.norm(emb, axis=-1)
    assert bool(jnp.all(jnp.abs(norms - 1.0) < 1e-4)), "output not unit-normalized"
    assert bool(jnp.all(jnp.isfinite(emb))), "non-finite output"
    print("KERNEL_OK")
</pallas_src>

<mosaic_0001>
module attributes {stable_mosaic.version = 11 : i64} {
  func.func @_embed_ln_kernel(%arg0: i32, %arg1: memref<128x128xbf16, #tpu.memory_space<vmem>>, %arg2: memref<128x128xbf16, #tpu.memory_space<vmem>>, %arg3: memref<1x128xbf16, #tpu.memory_space<vmem>>, %arg4: memref<1x128xf32, #tpu.memory_space<vmem>>, %arg5: memref<1x128xf32, #tpu.memory_space<vmem>>, %arg6: memref<128x128xbf16, #tpu.memory_space<vmem>>) attributes {dimension_semantics = [#tpu.dimension_semantics<parallel>], iteration_bounds = array<i64: 2>, scalar_prefetch = 0 : i64, scratch_operands = 0 : i64, tpu.core_type = #tpu.core_type<tc>, window_params = [{transform_indices = @transform_0, window_bounds = array<i64: 128, 128>}, {transform_indices = @transform_1, window_bounds = array<i64: 128, 128>}, {pipeline_mode = #tpu.pipeline_mode<synchronous>, transform_indices = @transform_2, window_bounds = array<i64: 1, 128>}, {pipeline_mode = #tpu.pipeline_mode<synchronous>, transform_indices = @transform_3, window_bounds = array<i64: 1, 128>}, {pipeline_mode = #tpu.pipeline_mode<synchronous>, transform_indices = @transform_4, window_bounds = array<i64: 1, 128>}, {transform_indices = @transform_5, window_bounds = array<i64: 128, 128>}]} {
    %c0 = arith.constant 0 : index
    %c0_0 = arith.constant 0 : index
    %0 = vector.load %arg1[%c0, %c0_0] : memref<128x128xbf16, #tpu.memory_space<vmem>>, vector<128x128xbf16>
    %1 = arith.extf %0 : vector<128x128xbf16> to vector<128x128xf32>
    %c0_1 = arith.constant 0 : index
    %c0_2 = arith.constant 0 : index
    %2 = vector.load %arg2[%c0_1, %c0_2] : memref<128x128xbf16, #tpu.memory_space<vmem>>, vector<128x128xbf16>
    %3 = arith.extf %2 : vector<128x128xbf16> to vector<128x128xf32>
    %4 = arith.addf %1, %3 : vector<128x128xf32>
    %c0_3 = arith.constant 0 : index
    %c0_4 = arith.constant 0 : index
    %5 = vector.load %arg3[%c0_3, %c0_4] : memref<1x128xbf16, #tpu.memory_space<vmem>>, vector<1x128xbf16>
    %6 = arith.extf %5 : vector<1x128xbf16> to vector<1x128xf32>
    %7 = vector.broadcast %6 : vector<1x128xf32> to vector<128x128xf32>
    %8 = arith.addf %4, %7 : vector<128x128xf32>
    %c0_5 = arith.constant 0 : index
    %c0_6 = arith.constant 0 : index
    %9 = vector.load %arg4[%c0_5, %c0_6] : memref<1x128xf32, #tpu.memory_space<vmem>>, vector<1x128xf32>
    %c0_7 = arith.constant 0 : index
    %c0_8 = arith.constant 0 : index
    %10 = vector.load %arg5[%c0_7, %c0_8] : memref<1x128xf32, #tpu.memory_space<vmem>>, vector<1x128xf32>
    %cst = arith.constant dense<0.000000e+00> : vector<128xf32>
    %11 = vector.multi_reduction <add>, %8, %cst [1] : vector<128x128xf32> to vector<128xf32>
    %12 = vector.shape_cast %11 : vector<128xf32> to vector<128x1xf32>
    %cst_9 = arith.constant 1.280000e+02 : f32
    %13 = vector.broadcast %cst_9 : f32 to vector<128x1xf32>
    %14 = arith.divf %12, %13 : vector<128x1xf32>
    %15 = vector.broadcast %14 : vector<128x1xf32> to vector<128x128xf32>
    %16 = arith.subf %8, %15 : vector<128x128xf32>
    %17 = arith.mulf %16, %16 : vector<128x128xf32>
    %cst_10 = arith.constant dense<0.000000e+00> : vector<128xf32>
    %18 = vector.multi_reduction <add>, %17, %cst_10 [1] : vector<128x128xf32> to vector<128xf32>
    %19 = vector.shape_cast %18 : vector<128xf32> to vector<128x1xf32>
    %cst_11 = arith.constant 1.280000e+02 : f32
    %20 = vector.broadcast %cst_11 : f32 to vector<128x1xf32>
    %21 = arith.divf %19, %20 : vector<128x1xf32>
    %cst_12 = arith.constant 9.99999974E-6 : f32
    %22 = vector.broadcast %cst_12 : f32 to vector<128x1xf32>
    %23 = arith.addf %21, %22 : vector<128x1xf32>
    %24 = math.rsqrt %23 : vector<128x1xf32>
    %25 = vector.broadcast %24 : vector<128x1xf32> to vector<128x128xf32>
    %26 = arith.mulf %16, %25 : vector<128x128xf32>
    %27 = vector.broadcast %9 : vector<1x128xf32> to vector<128x128xf32>
    %28 = arith.mulf %26, %27 : vector<128x128xf32>
    %29 = vector.broadcast %10 : vector<1x128xf32> to vector<128x128xf32>
    %30 = arith.addf %28, %29 : vector<128x128xf32>
    %31 = arith.truncf %30 : vector<128x128xf32> to vector<128x128xbf16>
    %c0_13 = arith.constant 0 : index
    %c0_14 = arith.constant 0 : index
    %32 = vector.load %arg6[%c0_13, %c0_14] : memref<128x128xbf16, #tpu.memory_space<vmem>>, vector<128x128xbf16>
    tpu.vector_store %arg6[%c0_13, %c0_14], %31 {strides = array<i32>} : memref<128x128xbf16, #tpu.memory_space<vmem>>, vector<128x128xbf16>,
    return
  }
  func.func @transform_0(%arg0: i32) -> (i32, i32) {
    %c0_i32 = arith.constant 0 : i32
    %c0_i32_0 = arith.constant 0 : i32
    return %arg0, %c0_i32 : i32, i32
  }
  func.func @transform_1(%arg0: i32) -> (i32, i32) {
    %c0_i32 = arith.constant 0 : i32
    %c0_i32_0 = arith.constant 0 : i32
    return %arg0, %c0_i32 : i32, i32
  }
  func.func @transform_2(%arg0: i32) -> (i32, i32) {
    %c0_i32 = arith.constant 0 : i32
    %c0_i32_0 = arith.constant 0 : i32
    %c0_i32_1 = arith.constant 0 : i32
    return %c0_i32, %c0_i32_0 : i32, i32
  }
  func.func @transform_3(%arg0: i32) -> (i32, i32) {
    %c0_i32 = arith.constant 0 : i32
    %c0_i32_0 = arith.constant 0 : i32
    %c0_i32_1 = arith.constant 0 : i32
    return %c0_i32, %c0_i32_0 : i32, i32
  }
  func.func @transform_4(%arg0: i32) -> (i32, i32) {
    %c0_i32 = arith.constant 0 : i32
    %c0_i32_0 = arith.constant 0 : i32
    %c0_i32_1 = arith.constant 0 : i32
    return %c0_i32, %c0_i32_0 : i32, i32
  }
  func.func @transform_5(%arg0: i32) -> (i32, i32) {
    %c0_i32 = arith.constant 0 : i32
    %c0_i32_0 = arith.constant 0 : i32
    return %arg0, %c0_i32 : i32, i32
  }
}

module attributes {stable_mosaic.version = 11 : i64} {
  func.func @_layer_kernel(%arg0: i32, %arg1: memref<1x128x128xbf16, #tpu.memory_space<vmem>>, %arg2: memref<1x1x128xf32, #tpu.memory_space<vmem>>, %arg3: memref<128x384xbf16, #tpu.memory_space<vmem>>, %arg4: memref<1x384xf32, #tpu.memory_space<vmem>>, %arg5: memref<128x128xbf16, #tpu.memory_space<vmem>>, %arg6: memref<1x128xf32, #tpu.memory_space<vmem>>, %arg7: memref<1x128xf32, #tpu.memory_space<vmem>>, %arg8: memref<1x128xf32, #tpu.memory_space<vmem>>, %arg9: memref<128x512xbf16, #tpu.memory_space<vmem>>, %arg10: memref<1x512xf32, #tpu.memory_space<vmem>>, %arg11: memref<512x128xbf16, #tpu.memory_space<vmem>>, %arg12: memref<1x128xf32, #tpu.memory_space<vmem>>, %arg13: memref<1x128xf32, #tpu.memory_space<vmem>>, %arg14: memref<1x128xf32, #tpu.memory_space<vmem>>, %arg15: memref<1x128x128xbf16, #tpu.memory_space<vmem>>) attributes {dimension_semantics = [#tpu.dimension_semantics<parallel>], iteration_bounds = array<i64: 2>, scalar_prefetch = 0 : i64, scratch_operands = 0 : i64, tpu.core_type = #tpu.core_type<tc>, window_params = [{transform_indices = @transform_0, window_bounds = array<i64: 1, 128, 128>}, {transform_indices = @transform_1, window_bounds = array<i64: 1, 1, 128>}, {pipeline_mode = #tpu.pipeline_mode<synchronous>, transform_indices = @transform_2, window_bounds = array<i64: 128, 384>}, {pipeline_mode = #tpu.pipeline_mode<synchronous>, transform_indices = @transform_3, window_bounds = array<i64: 1, 384>}, {pipeline_mode = #tpu.pipeline_mode<synchronous>, transform_indices = @transform_4, window_bounds = array<i64: 128, 128>}, {pipeline_mode = #tpu.pipeline_mode<synchronous>, transform_indices = @transform_5, window_bounds = array<i64: 1, 128>}, {pipeline_mode = #tpu.pipeline_mode<synchronous>, transform_indices = @transform_6, window_bounds = array<i64: 1, 128>}, {pipeline_mode = #tpu.pipeline_mode<synchronous>, transform_indices = @transform_7, window_bounds = array<i64: 1, 128>}, {pipeline_mode = #tpu.pipeline_mode<synchronous>, transform_indices = @transform_8, window_bounds = array<i64: 128, 512>}, {pipeline_mode = #tpu.pipeline_mode<synchronous>, transform_indices = @transform_9, window_bounds = array<i64: 1, 512>}, {pipeline_mode = #tpu.pipeline_mode<synchronous>, transform_indices = @transform_10, window_bounds = array<i64: 512, 128>}, {pipeline_mode = #tpu.pipeline_mode<synchronous>, transform_indices = @transform_11, window_bounds = array<i64: 1, 128>}, {pipeline_mode = #tpu.pipeline_mode<synchronous>, transform_indices = @transform_12, window_bounds = array<i64: 1, 128>}, {pipeline_mode = #tpu.pipeline_mode<synchronous>, transform_indices = @transform_13, window_bounds = array<i64: 1, 128>}, {transform_indices = @transform_14, window_bounds = array<i64: 1, 128, 128>}]} {
    %c0 = arith.constant 0 : index
    %c0_0 = arith.constant 0 : index
    %c0_1 = arith.constant 0 : index
    %0 = vector.load %arg1[%c0, %c0_0, %c0_1] : memref<1x128x128xbf16, #tpu.memory_space<vmem>>, vector<1x128x128xbf16>
    %1 = vector.shape_cast %0 : vector<1x128x128xbf16> to vector<128x128xbf16>
    %c0_2 = arith.constant 0 : index
    %c0_3 = arith.constant 0 : index
    %2 = vector.load %arg3[%c0_2, %c0_3] : memref<128x384xbf16, #tpu.memory_space<vmem>>, vector<128x384xbf16>
    %cst = arith.constant dense<0.000000e+00> : vector<128x384xf32>
    %3 = tpu.matmul %1, %2, %cst {dimension_numbers = #tpu.dot_dimension_numbers<[1], [0], [0], [1], [0, 0, 1, 1], [], []>} : vector<128x128xbf16>, vector<128x384xbf16>, vector<128x384xf32> -> vector<128x384xf32>
    %c0_4 = arith.constant 0 : index
    %c0_5 = arith.constant 0 : index
    %4 = vector.load %arg4[%c0_4, %c0_5] : memref<1x384xf32, #tpu.memory_space<vmem>>, vector<1x384xf32>
    %5 = vector.broadcast %4 : vector<1x384xf32> to vector<128x384xf32>
    %6 = arith.addf %3, %5 : vector<128x384xf32>
    %7 = arith.truncf %6 : vector<128x384xf32> to vector<128x384xbf16>
    %8 = vector.extract_strided_slice %7 {offsets = [0, 0], sizes = [128, 128], strides = [1, 1]} : vector<128x384xbf16> to vector<128x128xbf16>
    %9 = vector.extract_strided_slice %7 {offsets = [0, 128], sizes = [128, 128], strides = [1, 1]} : vector<128x384xbf16> to vector<128x128xbf16>
    %10 = vector.extract_strided_slice %7 {offsets = [0, 256], sizes = [128, 128], strides = [1, 1]} : vector<128x384xbf16> to vector<128x128xbf16>
    %c0_6 = arith.constant 0 : index
    %c0_7 = arith.constant 0 : index
    %c0_8 = arith.constant 0 : index
    %11 = vector.load %arg2[%c0_6, %c0_7, %c0_8] : memref<1x1x128xf32, #tpu.memory_space<vmem>>, vector<1x1x128xf32>
    %12 = vector.shape_cast %11 : vector<1x1x128xf32> to vector<1x128xf32>
    %cst_9 = arith.constant 1.000000e+00 : f32
    %13 = vector.broadcast %cst_9 : f32 to vector<1x128xf32>
    %14 = arith.subf %13, %12 : vector<1x128xf32>
    %cst_10 = arith.constant -1.000000e+09 : f32
    %15 = vector.broadcast %cst_10 : f32 to vector<1x128xf32>
    %16 = arith.mulf %14, %15 : vector<1x128xf32>
    %17 = vector.extract_strided_slice %8 {offsets = [0, 0], sizes = [128, 64], strides = [1, 1]} : vector<128x128xbf16> to vector<128x64xbf16>
    %18 = vector.extract_strided_slice %9 {offsets = [0, 0], sizes = [128, 64], strides = [1, 1]} : vector<128x128xbf16> to vector<128x64xbf16>
    %19 = vector.extract_strided_slice %10 {offsets = [0, 0], sizes = [128, 64], strides = [1, 1]} : vector<128x128xbf16> to vector<128x64xbf16>
    %cst_11 = arith.constant dense<0.000000e+00> : vector<128x128xf32>
    %20 = tpu.matmul %17, %18, %cst_11 {dimension_numbers = #tpu.dot_dimension_numbers<[1], [1], [0], [0], [0, 0, 1, 0], [], []>} : vector<128x64xbf16>, vector<128x64xbf16>, vector<128x128xf32> -> vector<128x128xf32>
    %cst_12 = arith.constant 1.250000e-01 : f32
    %21 = vector.broadcast %cst_12 : f32 to vector<128x128xf32>
    %22 = arith.mulf %20, %21 : vector<128x128xf32>
    %23 = vector.broadcast %16 : vector<1x128xf32> to vector<128x128xf32>
    %24 = arith.addf %22, %23 : vector<128x128xf32>
    %cst_13 = arith.constant dense<0xFF800000> : vector<128xf32>
    %25 = vector.multi_reduction <maximumf>, %24, %cst_13 [1] : vector<128x128xf32> to vector<128xf32>
    %26 = vector.shape_cast %25 : vector<128xf32> to vector<128x1xf32>
    %27 = vector.broadcast %26 : vector<128x1xf32> to vector<128x128xf32>
    %28 = arith.subf %24, %27 : vector<128x128xf32>
    %29 = math.exp %28 : vector<128x128xf32>
    %cst_14 = arith.constant dense<0.000000e+00> : vector<128xf32>
    %30 = vector.multi_reduction <add>, %29, %cst_14 [1] : vector<128x128xf32> to vector<128xf32>
    %31 = vector.shape_cast %30 : vector<128xf32> to vector<128x1xf32>
    %32 = tpu.reciprocal %31 {approx = true} : vector<128x1xf32> -> vector<128x1xf32>
    %33 = vector.broadcast %32 : vector<128x1xf32> to vector<128x128xf32>
    %34 = arith.mulf %29, %33 : vector<128x128xf32>
    %35 = arith.truncf %34 : vector<128x128xf32> to vector<128x128xbf16>
    %cst_15 = arith.constant dense<0.000000e+00> : vector<128x64xf32>
    %36 = tpu.matmul %35, %19, %cst_15 {dimension_numbers = #tpu.dot_dimension_numbers<[1], [0], [0], [1], [0, 0, 1, 1], [], []>} : vector<128x128xbf16>, vector<128x64xbf16>, vector<128x64xf32> -> vector<128x64xf32>
    %37 = vector.extract_strided_slice %8 {offsets = [0, 64], sizes = [128, 64], strides = [1, 1]} : vector<128x128xbf16> to vector<128x64xbf16>
    %38 = vector.extract_strided_slice %9 {offsets = [0, 64], sizes = [128, 64], strides = [1, 1]} : vector<128x128xbf16> to vector<128x64xbf16>
    %39 = vector.extract_strided_slice %10 {offsets = [0, 64], sizes = [128, 64], strides = [1, 1]} : vector<128x128xbf16> to vector<128x64xbf16>
    %cst_16 = arith.constant dense<0.000000e+00> : vector<128x128xf32>
    %40 = tpu.matmul %37, %38, %cst_16 {dimension_numbers = #tpu.dot_dimension_numbers<[1], [1], [0], [0], [0, 0, 1, 0], [], []>} : vector<128x64xbf16>, vector<128x64xbf16>, vector<128x128xf32> -> vector<128x128xf32>
    %cst_17 = arith.constant 1.250000e-01 : f32
    %41 = vector.broadcast %cst_17 : f32 to vector<128x128xf32>
    %42 = arith.mulf %40, %41 : vector<128x128xf32>
    %43 = vector.broadcast %16 : vector<1x128xf32> to vector<128x128xf32>
    %44 = arith.addf %42, %43 : vector<128x128xf32>
    %cst_18 = arith.constant dense<0xFF800000> : vector<128xf32>
    %45 = vector.multi_reduction <maximumf>, %44, %cst_18 [1] : vector<128x128xf32> to vector<128xf32>
    %46 = vector.shape_cast %45 : vector<128xf32> to vector<128x1xf32>
    %47 = vector.broadcast %46 : vector<128x1xf32> to vector<128x128xf32>
    %48 = arith.subf %44, %47 : vector<128x128xf32>
    %49 = math.exp %48 : vector<128x128xf32>
    %cst_19 = arith.constant dense<0.000000e+00> : vector<128xf32>
    %50 = vector.multi_reduction <add>, %49, %cst_19 [1] : vector<128x128xf32> to vector<128xf32>
    %51 = vector.shape_cast %50 : vector<128xf32> to vector<128x1xf32>
    %52 = tpu.reciprocal %51 {approx = true} : vector<128x1xf32> -> vector<128x1xf32>
    %53 = vector.broadcast %52 : vector<128x1xf32> to vector<128x128xf32>
    %54 = arith.mulf %49, %53 : vector<128x128xf32>
    %55 = arith.truncf %54 : vector<128x128xf32> to vector<128x128xbf16>
    %cst_20 = arith.constant dense<0.000000e+00> : vector<128x64xf32>
    %56 = tpu.matmul %55, %39, %cst_20 {dimension_numbers = #tpu.dot_dimension_numbers<[1], [0], [0], [1], [0, 0, 1, 1], [], []>} : vector<128x128xbf16>, vector<128x64xbf16>, vector<128x64xf32> -> vector<128x64xf32>
    %57 = tpu.concatenate %36, %56 in 1 : vector<128x64xf32>, vector<128x64xf32> -> vector<128x128xf32>
    %58 = arith.truncf %57 : vector<128x128xf32> to vector<128x128xbf16>
    %c0_21 = arith.constant 0 : index
    %c0_22 = arith.constant 0 : index
    %59 = vector.load %arg5[%c0_21, %c0_22] : memref<128x128xbf16, #tpu.memory_space<vmem>>, vector<128x128xbf16>
    %cst_23 = arith.constant dense<0.000000e+00> : vector<128x128xf32>
    %60 = tpu.matmul %58, %59, %cst_23 {dimension_numbers = #tpu.dot_dimension_numbers<[1], [0], [0], [1], [0, 0, 1, 1], [], []>} : vector<128x128xbf16>, vector<128x128xbf16>, vector<128x128xf32> -> vector<128x128xf32>
    %c0_24 = arith.constant 0 : index
    %c0_25 = arith.constant 0 : index
    %61 = vector.load %arg6[%c0_24, %c0_25] : memref<1x128xf32, #tpu.memory_space<vmem>>, vector<1x128xf32>
    %62 = vector.broadcast %61 : vector<1x128xf32> to vector<128x128xf32>
    %63 = arith.addf %60, %62 : vector<128x128xf32>
    %64 = arith.extf %1 : vector<128x128xbf16> to vector<128x128xf32>
    %65 = arith.addf %63, %64 : vector<128x128xf32>
    %c0_26 = arith.constant 0 : index
    %c0_27 = arith.constant 0 : index
    %66 = vector.load %arg7[%c0_26, %c0_27] : memref<1x128xf32, #tpu.memory_space<vmem>>, vector<1x128xf32>
    %c0_28 = arith.constant 0 : index
    %c0_29 = arith.constant 0 : index
    %67 = vector.load %arg8[%c0_28, %c0_29] : memref<1x128xf32, #tpu.memory_space<vmem>>, vector<1x128xf32>
    %cst_30 = arith.constant dense<0.000000e+00> : vector<128xf32>
    %68 = vector.multi_reduction <add>, %65, %cst_30 [1] : vector<128x128xf32> to vector<128xf32>
    %69 = vector.shape_cast %68 : vector<128xf32> to vector<128x1xf32>
    %cst_31 = arith.constant 1.280000e+02 : f32
    %70 = vector.broadcast %cst_31 : f32 to vector<128x1xf32>
    %71 = arith.divf %69, %70 : vector<128x1xf32>
    %72 = vector.broadcast %71 : vector<128x1xf32> to vector<128x128xf32>
    %73 = arith.subf %65, %72 : vector<128x128xf32>
    %74 = arith.mulf %73, %73 : vector<128x128xf32>
    %cst_32 = arith.constant dense<0.000000e+00> : vector<128xf32>
    %75 = vector.multi_reduction <add>, %74, %cst_32 [1] : vector<128x128xf32> to vector<128xf32>
    %76 = vector.shape_cast %75 : vector<128xf32> to vector<128x1xf32>
    %cst_33 = arith.constant 1.280000e+02 : f32
    %77 = vector.broadcast %cst_33 : f32 to vector<128x1xf32>
    %78 = arith.divf %76, %77 : vector<128x1xf32>
    %cst_34 = arith.constant 9.99999974E-6 : f32
    %79 = vector.broadcast %cst_34 : f32 to vector<128x1xf32>
    %80 = arith.addf %78, %79 : vector<128x1xf32>
    %81 = math.rsqrt %80 : vector<128x1xf32>
    %82 = vector.broadcast %81 : vector<128x1xf32> to vector<128x128xf32>
    %83 = arith.mulf %73, %82 : vector<128x128xf32>
    %84 = vector.broadcast %66 : vector<1x128xf32> to vector<128x128xf32>
    %85 = arith.mulf %83, %84 : vector<128x128xf32>
    %86 = vector.broadcast %67 : vector<1x128xf32> to vector<128x128xf32>
    %87 = arith.addf %85, %86 : vector<128x128xf32>
    %88 = arith.truncf %87 : vector<128x128xf32> to vector<128x128xbf16>
    %c0_35 = arith.constant 0 : index
    %c0_36 = arith.constant 0 : index
    %89 = vector.load %arg9[%c0_35, %c0_36] : memref<128x512xbf16, #tpu.memory_space<vmem>>, vector<128x512xbf16>
    %cst_37 = arith.constant dense<0.000000e+00> : vector<128x512xf32>
    %90 = tpu.matmul %88, %89, %cst_37 {dimension_numbers = #tpu.dot_dimension_numbers<[1], [0], [0], [1], [0, 0, 1, 1], [], []>} : vector<128x128xbf16>, vector<128x512xbf16>, vector<128x512xf32> -> vector<128x512xf32>
    %c0_38 = arith.constant 0 : index
    %c0_39 = arith.constant 0 : index
    %91 = vector.load %arg10[%c0_38, %c0_39] : memref<1x512xf32, #tpu.memory_space<vmem>>, vector<1x512xf32>
    %92 = vector.broadcast %91 : vector<1x512xf32> to vector<128x512xf32>
    %93 = arith.addf %90, %92 : vector<128x512xf32>
    %94 = arith.mulf %93, %93 : vector<128x512xf32>
    %95 = arith.mulf %93, %94 : vector<128x512xf32>
    %cst_40 = arith.constant 4.471500e-02 : f32
    %96 = vector.broadcast %cst_40 : f32 to vector<128x512xf32>
    %97 = arith.mulf %96, %95 : vector<128x512xf32>
    %98 = arith.addf %93, %97 : vector<128x512xf32>
    %cst_41 = arith.constant 0.797884583 : f32
    %99 = vector.broadcast %cst_41 : f32 to vector<128x512xf32>
    %100 = arith.mulf %99, %98 : vector<128x512xf32>
    %101 = math.tanh %100 : vector<128x512xf32>
    %cst_42 = arith.constant 1.000000e+00 : f32
    %102 = vector.broadcast %cst_42 : f32 to vector<128x512xf32>
    %103 = arith.addf %102, %101 : vector<128x512xf32>
    %cst_43 = arith.constant 5.000000e-01 : f32
    %104 = vector.broadcast %cst_43 : f32 to vector<128x512xf32>
    %105 = arith.mulf %104, %103 : vector<128x512xf32>
    %106 = arith.mulf %93, %105 : vector<128x512xf32>
    %107 = arith.truncf %106 : vector<128x512xf32> to vector<128x512xbf16>
    %c0_44 = arith.constant 0 : index
    %c0_45 = arith.constant 0 : index
    %108 = vector.load %arg11[%c0_44, %c0_45] : memref<512x128xbf16, #tpu.memory_space<vmem>>, vector<512x128xbf16>
    %cst_46 = arith.constant dense<0.000000e+00> : vector<128x128xf32>
    %109 = tpu.matmul %107, %108, %cst_46 {dimension_numbers = #tpu.dot_dimension_numbers<[1], [0], [0], [1], [0, 0, 1, 1], [], []>} : vector<128x512xbf16>, vector<512x128xbf16>, vector<128x128xf32> -> vector<128x128xf32>
    %c0_47 = arith.constant 0 : index
    %c0_48 = arith.constant 0 : index
    %110 = vector.load %arg12[%c0_47, %c0_48] : memref<1x128xf32, #tpu.memory_space<vmem>>, vector<1x128xf32>
    %111 = vector.broadcast %110 : vector<1x128xf32> to vector<128x128xf32>
    %112 = arith.addf %109, %111 : vector<128x128xf32>
    %113 = arith.addf %112, %87 : vector<128x128xf32>
    %c0_49 = arith.constant 0 : index
    %c0_50 = arith.constant 0 : index
    %114 = vector.load %arg13[%c0_49, %c0_50] : memref<1x128xf32, #tpu.memory_space<vmem>>, vector<1x128xf32>
    %c0_51 = arith.constant 0 : index
    %c0_52 = arith.constant 0 : index
    %115 = vector.load %arg14[%c0_51, %c0_52] : memref<1x128xf32, #tpu.memory_space<vmem>>, vector<1x128xf32>
    %cst_53 = arith.constant dense<0.000000e+00> : vector<128xf32>
    %116 = vector.multi_reduction <add>, %113, %cst_53 [1] : vector<128x128xf32> to vector<128xf32>
    %117 = vector.shape_cast %116 : vector<128xf32> to vector<128x1xf32>
    %cst_54 = arith.constant 1.280000e+02 : f32
    %118 = vector.broadcast %cst_54 : f32 to vector<128x1xf32>
    %119 = arith.divf %117, %118 : vector<128x1xf32>
    %120 = vector.broadcast %119 : vector<128x1xf32> to vector<128x128xf32>
    %121 = arith.subf %113, %120 : vector<128x128xf32>
    %122 = arith.mulf %121, %121 : vector<128x128xf32>
    %cst_55 = arith.constant dense<0.000000e+00> : vector<128xf32>
    %123 = vector.multi_reduction <add>, %122, %cst_55 [1] : vector<128x128xf32> to vector<128xf32>
    %124 = vector.shape_cast %123 : vector<128xf32> to vector<128x1xf32>
    %cst_56 = arith.constant 1.280000e+02 : f32
    %125 = vector.broadcast %cst_56 : f32 to vector<128x1xf32>
    %126 = arith.divf %124, %125 : vector<128x1xf32>
    %cst_57 = arith.constant 9.99999974E-6 : f32
    %127 = vector.broadcast %cst_57 : f32 to vector<128x1xf32>
    %128 = arith.addf %126, %127 : vector<128x1xf32>
    %129 = math.rsqrt %128 : vector<128x1xf32>
    %130 = vector.broadcast %129 : vector<128x1xf32> to vector<128x128xf32>
    %131 = arith.mulf %121, %130 : vector<128x128xf32>
    %132 = vector.broadcast %114 : vector<1x128xf32> to vector<128x128xf32>
    %133 = arith.mulf %131, %132 : vector<128x128xf32>
    %134 = vector.broadcast %115 : vector<1x128xf32> to vector<128x128xf32>
    %135 = arith.addf %133, %134 : vector<128x128xf32>
    %136 = arith.truncf %135 : vector<128x128xf32> to vector<128x128xbf16>
    %c0_58 = arith.constant 0 : index
    %c0_59 = arith.constant 0 : index
    %c0_60 = arith.constant 0 : index
    %137 = vector.load %arg15[%c0_58, %c0_59, %c0_60] : memref<1x128x128xbf16, #tpu.memory_space<vmem>>, vector<1x128x128xbf16>
    %138 = vector.shape_cast %137 : vector<1x128x128xbf16> to vector<128x128xbf16>
    %139 = vector.shape_cast %136 : vector<128x128xbf16> to vector<1x128x128xbf16>
    tpu.vector_store %arg15[%c0_58, %c0_59, %c0_60], %139 {strides = array<i32>} : memref<1x128x128xbf16, #tpu.memory_space<vmem>>, vector<1x128x128xbf16>,
    return
  }
  func.func @transform_0(%arg0: i32) -> (i32, i32, i32) {
    %c0_i32 = arith.constant 0 : i32
    %c0_i32_0 = arith.constant 0 : i32
    %c0_i32_1 = arith.constant 0 : i32
    return %arg0, %c0_i32, %c0_i32_0 : i32, i32, i32
  }
  func.func @transform_1(%arg0: i32) -> (i32, i32, i32) {
    %c0_i32 = arith.constant 0 : i32
    %c0_i32_0 = arith.constant 0 : i32
    %c0_i32_1 = arith.constant 0 : i32
    return %arg0, %c0_i32, %c0_i32_0 : i32, i32, i32
  }
  func.func @transform_2(%arg0: i32) -> (i32, i32) {
    %c0_i32 = arith.constant 0 : i32
    %c0_i32_0 = arith.constant 0 : i32
    %c0_i32_1 = arith.constant 0 : i32
    return %c0_i32, %c0_i32_0 : i32, i32
  }
  func.func @transform_3(%arg0: i32) -> (i32, i32) {
    %c0_i32 = arith.constant 0 : i32
    %c0_i32_0 = arith.constant 0 : i32
    %c0_i32_1 = arith.constant 0 : i32
    return %c0_i32, %c0_i32_0 : i32, i32
  }
  func.func @transform_4(%arg0: i32) -> (i32, i32) {
    %c0_i32 = arith.constant 0 : i32
    %c0_i32_0 = arith.constant 0 : i32
    %c0_i32_1 = arith.constant 0 : i32
    return %c0_i32, %c0_i32_0 : i32, i32
  }
  func.func @transform_5(%arg0: i32) -> (i32, i32) {
    %c0_i32 = arith.constant 0 : i32
    %c0_i32_0 = arith.constant 0 : i32
    %c0_i32_1 = arith.constant 0 : i32
    return %c0_i32, %c0_i32_0 : i32, i32
  }
  func.func @transform_6(%arg0: i32) -> (i32, i32) {
    %c0_i32 = arith.constant 0 : i32
    %c0_i32_0 = arith.constant 0 : i32
    %c0_i32_1 = arith.constant 0 : i32
    return %c0_i32, %c0_i32_0 : i32, i32
  }
  func.func @transform_7(%arg0: i32) -> (i32, i32) {
    %c0_i32 = arith.constant 0 : i32
    %c0_i32_0 = arith.constant 0 : i32
    %c0_i32_1 = arith.constant 0 : i32
    return %c0_i32, %c0_i32_0 : i32, i32
  }
  func.func @transform_8(%arg0: i32) -> (i32, i32) {
    %c0_i32 = arith.constant 0 : i32
    %c0_i32_0 = arith.constant 0 : i32
    %c0_i32_1 = arith.constant 0 : i32
    return %c0_i32, %c0_i32_0 : i32, i32
  }
  func.func @transform_9(%arg0: i32) -> (i32, i32) {
    %c0_i32 = arith.constant 0 : i32
    %c0_i32_0 = arith.constant 0 : i32
    %c0_i32_1 = arith.constant 0 : i32
    return %c0_i32, %c0_i32_0 : i32, i32
  }
  func.func @transform_10(%arg0: i32) -> (i32, i32) {
    %c0_i32 = arith.constant 0 : i32
    %c0_i32_0 = arith.constant 0 : i32
    %c0_i32_1 = arith.constant 0 : i32
    return %c0_i32, %c0_i32_0 : i32, i32
  }
  func.func @transform_11(%arg0: i32) -> (i32, i32) {
    %c0_i32 = arith.constant 0 : i32
    %c0_i32_0 = arith.constant 0 : i32
    %c0_i32_1 = arith.constant 0 : i32
    return %c0_i32, %c0_i32_0 : i32, i32
  }
  func.func @transform_12(%arg0: i32) -> (i32, i32) {
    %c0_i32 = arith.constant 0 : i32
    %c0_i32_0 = arith.constant 0 : i32
    %c0_i32_1 = arith.constant 0 : i32
    return %c0_i32, %c0_i32_0 : i32, i32
  }
  func.func @transform_13(%arg0: i32) -> (i32, i32) {
    %c0_i32 = arith.constant 0 : i32
    %c0_i32_0 = arith.constant 0 : i32
    %c0_i32_1 = arith.constant 0 : i32
    return %c0_i32, %c0_i32_0 : i32, i32
  }
  func.func @transform_14(%arg0: i32) -> (i32, i32, i32) {
    %c0_i32 = arith.constant 0 : i32
    %c0_i32_0 = arith.constant 0 : i32
    %c0_i32_1 = arith.constant 0 : i32
    return %arg0, %c0_i32, %c0_i32_0 : i32, i32, i32
  }
}

module attributes {stable_mosaic.version = 11 : i64} {
  func.func @_pooler_l2_kernel(%arg0: memref<2x128xbf16, #tpu.memory_space<vmem>>, %arg1: memref<128x128xbf16, #tpu.memory_space<vmem>>, %arg2: memref<1x128xf32, #tpu.memory_space<vmem>>, %arg3: memref<2x128xf32, #tpu.memory_space<vmem>>) attributes {dimension_semantics = [], scalar_prefetch = 0 : i64, scratch_operands = 0 : i64, tpu.core_type = #tpu.core_type<tc>} {
    %c0 = arith.constant 0 : index
    %c0_0 = arith.constant 0 : index
    %0 = vector.load %arg0[%c0, %c0_0] : memref<2x128xbf16, #tpu.memory_space<vmem>>, vector<2x128xbf16>
    %c0_1 = arith.constant 0 : index
    %c0_2 = arith.constant 0 : index
    %1 = vector.load %arg1[%c0_1, %c0_2] : memref<128x128xbf16, #tpu.memory_space<vmem>>, vector<128x128xbf16>
    %cst = arith.constant dense<0.000000e+00> : vector<2x128xf32>
    %2 = tpu.matmul %0, %1, %cst {dimension_numbers = #tpu.dot_dimension_numbers<[1], [0], [0], [1], [0, 0, 1, 1], [], []>} : vector<2x128xbf16>, vector<128x128xbf16>, vector<2x128xf32> -> vector<2x128xf32>
    %c0_3 = arith.constant 0 : index
    %c0_4 = arith.constant 0 : index
    %3 = vector.load %arg2[%c0_3, %c0_4] : memref<1x128xf32, #tpu.memory_space<vmem>>, vector<1x128xf32>
    %4 = vector.broadcast %3 : vector<1x128xf32> to vector<2x128xf32>
    %5 = arith.addf %2, %4 : vector<2x128xf32>
    %6 = math.tanh %5 : vector<2x128xf32>
    %7 = arith.mulf %6, %6 : vector<2x128xf32>
    %cst_5 = arith.constant dense<0.000000e+00> : vector<2xf32>
    %8 = vector.multi_reduction <add>, %7, %cst_5 [1] : vector<2x128xf32> to vector<2xf32>
    %9 = vector.shape_cast %8 : vector<2xf32> to vector<2x1xf32>
    %10 = math.sqrt %9 : vector<2x1xf32>
    %cst_6 = arith.constant 9.99999996E-13 : f32
    %11 = vector.broadcast %cst_6 : f32 to vector<2x1xf32>
    %12 = arith.maximumf %10, %11 : vector<2x1xf32>
    %13 = vector.broadcast %12 : vector<2x1xf32> to vector<2x128xf32>
    %14 = arith.divf %6, %13 : vector<2x128xf32>
    %c0_7 = arith.constant 0 : index
    %c0_8 = arith.constant 0 : index
    %15 = vector.load %arg3[%c0_7, %c0_8] : memref<2x128xf32, #tpu.memory_space<vmem>>, vector<2x128xf32>
    tpu.vector_store %arg3[%c0_7, %c0_8], %14 {strides = array<i32>} : memref<2x128xf32, #tpu.memory_space<vmem>>, vector<2x128xf32>,
    return
  }
}

</mosaic_0001>

<llo_original>
// kernel: easyrec_forward.4
$region0: #{easyrec_forward.4}
  #allocation0 [shape = 'u32[]', space=smem, size = 0x4, offset = 0x4, fixed_abs, tag = 'smem constant byte address 0x4 - core index']
  #allocation1 [shape = 'u32[144,128]{1,0:T(1,128)}', space=vmem, size = 0x12000, scoped, tag = 'internal scratch']
  %s0 = inlined_call_operand.vmem [shape: bf16[256,128], index: 0, kind: input, shape index: {}]
  %s1 = inlined_call_operand.vmem [shape: bf16[256,128], index: 1, kind: input, shape index: {}]
  %s2 = inlined_call_operand.vmem [shape: bf16[1,128], index: 2, kind: input, shape index: {}]
  %s3 = inlined_call_operand.vmem [shape: f32[1,128], index: 3, kind: input, shape index: {}]
  %s4 = inlined_call_operand.vmem [shape: f32[1,128], index: 4, kind: input, shape index: {}]
  %s5 = inlined_call_operand.vmem [shape: bf16[256,128], index: 5, kind: output, shape index: {}]
  %s6 = sld [smem:[#allocation0]]
  $region53: #{easyrec_forward.4} parent=0
    _
  %s8 = ssub.s32 1, %s6
  %s9 = scalar_select 0, %s8, %s6
  loop: start=0, step=1, limit=4
  $region2: #{easyrec_forward.4} parent=0 // loop_pre_header
    _
  $region3: #{easyrec_forward.4} parent=0 // loop_header
    %s11 = sphi 0, %s15
    %p12 = scmp.ge.s32.totalorder %s11, 4
    %s21 = sphi 0, %s23
    %s24 = sphi 0, %s21
    %s25 = sphi 0, %s24
    %s41 = sphi 0, %s25
    %s47 = sphi 0, %s49
    %s50 = sphi 0, %s47
    %s51 = sphi 0, %s50
    %s67 = sphi 0, %s51
    %s71 = sphi 0, %s71
    %s73 = sphi 0, %s71
    %s74 = sphi 0, %s73
    %s88 = sphi 0, %s74
    %s92 = sphi 0, %s92
    %s94 = sphi 0, %s92
    %s95 = sphi 0, %s94
    %s109 = sphi 0, %s95
    %s113 = sphi 0, %s113
    %s115 = sphi 0, %s113
    %s116 = sphi 0, %s115
    %s130 = sphi 0, %s116
    %s136 = sphi 0, %s138
    %s139 = sphi 0, %s136
    %s140 = sphi 0, %s139
    %s156 = sphi 0, %s140
  $region4: #{easyrec_forward.4} parent=0 // loop_header_branch
    %14 = sbr.rel (%p12) target = $region8
  $region5: #{easyrec_forward.4} parent=0 // loop_body
    %s16 = ssub.s32 %s11, 1
    %s17 = ssub.s32 %s11, 2
    %s18 = sadd.s32 %s11, 1
    %s19 = ssub.s32 %s11, %s18
    %p20 = scmp.eq.s32.totalorder %s19, 0
    %s22 = sadd.s32 %s21, 1
    %s23 = scalar_select %p20, %s21, %s22
    %p26 = pneg %p20
    %p27 = scmp.eq.s32.totalorder %s11, 1
    %p28 = por %p26, %p27
    %p29 = scmp.ne.s32.totalorder %s21, %s24
    %p30 = scmp.eq.s32.totalorder %s11, 0
    %p31 = por %p29, %p30
    %p32 = scmp.ne.s32.totalorder %s21, %s24
    %p33 = scmp.eq.s32.totalorder %s16, 1
    %p34 = por %p32, %p33
    %p35 = scmp.ne.s32.totalorder %s24, %s25
    %p36 = scmp.eq.s32.totalorder %s16, 0
    %p37 = por %p35, %p36
    %p38 = scmp.ne.s32.totalorder %s24, %s25
    %p39 = scmp.eq.s32.totalorder %s17, 1
    %p40 = por %p38, %p39
    %p42 = scmp.ne.s32.totalorder %s25, %s41
    %p43 = scmp.eq.s32.totalorder %s17, 0
    %p44 = por %p42, %p43
    %s45 = ssub.s32 %s11, %s18
    %p46 = scmp.eq.s32.totalorder %s45, 0
    %s48 = sadd.s32 %s47, 1
    %s49 = scalar_select %p46, %s47, %s48
    %p52 = pneg %p46
    %p53 = scmp.eq.s32.totalorder %s11, 1
    %p54 = por %p52, %p53
    %p55 = scmp.ne.s32.totalorder %s47, %s50
    %p56 = scmp.eq.s32.totalorder %s11, 0
    %p57 = por %p55, %p56
    %p58 = scmp.ne.s32.totalorder %s47, %s50
    %p59 = scmp.eq.s32.totalorder %s16, 1
    %p60 = por %p58, %p59
    %p61 = scmp.ne.s32.totalorder %s50, %s51
    %p62 = scmp.eq.s32.totalorder %s16, 0
    %p63 = por %p61, %p62
    %p64 = scmp.ne.s32.totalorder %s50, %s51
    %p65 = scmp.eq.s32.totalorder %s17, 1
    %p66 = por %p64, %p65
    %p68 = scmp.ne.s32.totalorder %s51, %s67
    %p69 = scmp.eq.s32.totalorder %s17, 0
    %p70 = por %p68, %p69
    %s72 = sadd.s32 %s71, 1
    %p75 = scmp.eq.s32.totalorder %s11, 1
    %p76 = scmp.ne.s32.totalorder %s71, %s73
    %p77 = scmp.eq.s32.totalorder %s11, 0
    %p78 = por %p76, %p77
    %p79 = scmp.ne.s32.totalorder %s71, %s73
    %p80 = scmp.eq.s32.totalorder %s16, 1
    %p81 = por %p79, %p80
    %p82 = scmp.ne.s32.totalorder %s73, %s74
    %p83 = scmp.eq.s32.totalorder %s16, 0
    %p84 = por %p82, %p83
    %p85 = scmp.ne.s32.totalorder %s73, %s74
    %p86 = scmp.eq.s32.totalorder %s17, 1
    %p87 = por %p85, %p86
    %p89 = scmp.ne.s32.totalorder %s74, %s88
    %p90 = scmp.eq.s32.totalorder %s17, 0
    %p91 = por %p89, %p90
    %s93 = sadd.s32 %s92, 1
    %p96 = scmp.eq.s32.totalorder %s11, 1
    %p97 = scmp.ne.s32.totalorder %s92, %s94
    %p98 = scmp.eq.s32.totalorder %s11, 0
    %p99 = por %p97, %p98
    %p100 = scmp.ne.s32.totalorder %s92, %s94
    %p101 = scmp.eq.s32.totalorder %s16, 1
    %p102 = por %p100, %p101
    %p103 = scmp.ne.s32.totalorder %s94, %s95
    %p104 = scmp.eq.s32.totalorder %s16, 0
    %p105 = por %p103, %p104
    %p106 = scmp.ne.s32.totalorder %s94, %s95
    %p107 = scmp.eq.s32.totalorder %s17, 1
    %p108 = por %p106, %p107
    %p110 = scmp.ne.s32.totalorder %s95, %s109
    %p111 = scmp.eq.s32.totalorder %s17, 0
    %p112 = por %p110, %p111
    %s114 = sadd.s32 %s113, 1
    %p117 = scmp.eq.s32.totalorder %s11, 1
    %p118 = scmp.ne.s32.totalorder %s113, %s115
    %p119 = scmp.eq.s32.totalorder %s11, 0
    %p120 = por %p118, %p119
    %p121 = scmp.ne.s32.totalorder %s113, %s115
    %p122 = scmp.eq.s32.totalorder %s16, 1
    %p123 = por %p121, %p122
    %p124 = scmp.ne.s32.totalorder %s115, %s116
    %p125 = scmp.eq.s32.totalorder %s16, 0
    %p126 = por %p124, %p125
    %p127 = scmp.ne.s32.totalorder %s115, %s116
    %p128 = scmp.eq.s32.totalorder %s17, 1
    %p129 = por %p127, %p128
    %p131 = scmp.ne.s32.totalorder %s116, %s130
    %p132 = scmp.eq.s32.totalorder %s17, 0
    %p133 = por %p131, %p132
    %s134 = ssub.s32 %s11, %s18
    %p135 = scmp.eq.s32.totalorder %s134, 0
    %s137 = sadd.s32 %s136, 1
    %s138 = scalar_select %p135, %s136, %s137
    %p141 = pneg %p135
    %p142 = scmp.eq.s32.totalorder %s11, 1
    %p143 = por %p141, %p142
    %p144 = scmp.ne.s32.totalorder %s136, %s139
    %p145 = scmp.eq.s32.totalorder %s11, 0
    %p146 = por %p144, %p145
    %p147 = scmp.ne.s32.totalorder %s136, %s139
    %p148 = scmp.eq.s32.totalorder %s16, 1
    %p149 = por %p147, %p148
    %p150 = scmp.ne.s32.totalorder %s139, %s140
    %p151 = scmp.eq.s32.totalorder %s16, 0
    %p152 = por %p150, %p151
    %p153 = scmp.ne.s32.totalorder %s139, %s140
    %p154 = scmp.eq.s32.totalorder %s17, 1
    %p155 = por %p153, %p154
    %p157 = scmp.ne.s32.totalorder %s140, %s156
    %p158 = scmp.eq.s32.totalorder %s17, 0
    %p159 = por %p157, %p158
    %p160 = scmp.le.s32.totalorder 1, %s11
    %p161 = scmp.lt.s32.totalorder %s11, 3
    %p162 = pnand %p160, %p161
    %p163 = pneg %p162
    // Predicated region
    $region9: #{easyrec_forward.4} parent=5 // pred_check
      _
    $region10: #{easyrec_forward.4} parent=5 // pred_check_branch
      %165 = sbr.rel (%p162) target = $region12
    $region11: #{easyrec_forward.4} parent=5 // pred_region
      %s166 = ssub.s32 %s11, 1
      // Predicated region
      $region13: #{easyrec_forward.4} parent=11 // pred_check
        %p167 = pneg %p84
      $region14: #{easyrec_forward.4} parent=11 // pred_check_branch
        %169 = sbr.rel (%p167) target = $region16
      $region15: #{easyrec_forward.4} parent=11 // pred_region
        _
      $region16: #{easyrec_forward.4} parent=11 // pred_fallthru
        _
      // Predicated region
      $region17: #{easyrec_forward.4} parent=11 // pred_check
        %p170 = pneg %p105
      $region18: #{easyrec_forward.4} parent=11 // pred_check_branch
        %172 = sbr.rel (%p170) target = $region20
      $region19: #{easyrec_forward.4} parent=11 // pred_region
        _
      $region20: #{easyrec_forward.4} parent=11 // pred_fallthru
        _
      // Predicated region
      $region21: #{easyrec_forward.4} parent=11 // pred_check
        %p173 = pneg %p126
      $region22: #{easyrec_forward.4} parent=11 // pred_check_branch
        %175 = sbr.rel (%p173) target = $region24
      $region23: #{easyrec_forward.4} parent=11 // pred_region
        _
      $region24: #{easyrec_forward.4} parent=11 // pred_fallthru
        _
    $region12: #{easyrec_forward.4} parent=5 // pred_fallthru
      _
    %p176 = scmp.lt.s32.totalorder %s11, 2
    // Predicated region
    $region25: #{easyrec_forward.4} parent=5 // pred_check
      %p177 = pneg %p176
    $region26: #{easyrec_forward.4} parent=5 // pred_check_branch
      %179 = sbr.rel (%p177) target = $region28
    $region27: #{easyrec_forward.4} parent=5 // pred_region
      // Predicated region
      $region29: #{easyrec_forward.4} parent=27 // pred_check
        %p180 = pneg %p31
      $region30: #{easyrec_forward.4} parent=27 // pred_check_branch
        %182 = sbr.rel (%p180) target = $region32
      $region31: #{easyrec_forward.4} parent=27 // pred_region
        %s183 = smul.u32 16, %s11
        %p184 = scmp.lt.s32.totalorder %s183, 31
        %s185 = scalar_select %p184, %s183, 31
        %s186 = smul.addr %s185, 4
        %s187 = scalar_lea.vmem %s0, %s186
        %s188 = smul.u32 16, %s11
      $region32: #{easyrec_forward.4} parent=27 // pred_fallthru
        _
      // Predicated region
      $region33: #{easyrec_forward.4} parent=27 // pred_check
        %p189 = pneg %p57
      $region34: #{easyrec_forward.4} parent=27 // pred_check_branch
        %191 = sbr.rel (%p189) target = $region36
      $region35: #{easyrec_forward.4} parent=27 // pred_region
        %s192 = smul.u32 16, %s11
        %p193 = scmp.lt.s32.totalorder %s192, 31
        %s194 = scalar_select %p193, %s192, 31
        %s195 = smul.addr %s194, 4
        %s196 = scalar_lea.vmem %s1, %s195
        %s197 = smul.u32 16, %s11
      $region36: #{easyrec_forward.4} parent=27 // pred_fallthru
        _
    $region28: #{easyrec_forward.4} parent=5 // pred_fallthru
      _
    %p198 = scmp.le.s32.totalorder 1, %s11
    %p199 = scmp.lt.s32.totalorder %s11, 3
    %p200 = pnand %p198, %p199
    %p201 = pneg %p200
    // Predicated region
    $region37: #{easyrec_forward.4} parent=5 // pred_check
      _
    $region38: #{easyrec_forward.4} parent=5 // pred_check_branch
      %203 = sbr.rel (%p200) target = $region40
    $region39: #{easyrec_forward.4} parent=5 // pred_region
      %s204 = ssub.s32 %s11, 1
      %s205 = smul.u32 16, %s16
      %p206 = scmp.lt.s32.totalorder %s205, 31
      %s207 = scalar_select %p206, %s205, 31
      %s208 = smul.addr %s207, 4
      %s209 = scalar_lea.vmem %s0, %s208
      %p210 = pneg %p37
      %p211 = pneg %p34
      %s212 = smul.u32 16, %s16
      %p213 = scmp.lt.s32.totalorder %s212, 31
      %s214 = scalar_select %p213, %s212, 31
      %s215 = smul.addr %s214, 4
      %s216 = scalar_lea.vmem %s1, %s215
      %p217 = pneg %p63
      %p218 = pneg %p60
      %p219 = pneg %p84
      %p220 = pneg %p81
      %p221 = pneg %p105
      %p222 = pneg %p102
      %p223 = pneg %p126
      %p224 = pneg %p123
      %p225 = pneg %p152
      %p226 = pneg %p149
      %s227 = smul.u32 16, %s16
      %p228 = scmp.lt.s32.totalorder %s227, 31
      %s229 = scalar_select %p228, %s227, 31
      %s230 = smul.addr %s229, 4
      %s231 = scalar_lea.vmem %s5, %s230
      %s232 = smul.u32 16, %s16
      %p233 = scmp.lt.s32.totalorder %s232, 31
      %s234 = scalar_select %p233, %s232, 31
      %s235 = smul.addr %s234, 4
      %s236 = scalar_lea.vmem %s0, %s235
      %s237 = smul.u32 16, %s16
      %s238 = smul.u32 16, %s16
      %p239 = scmp.lt.s32.totalorder %s238, 31
      %s240 = scalar_select %p239, %s238, 31
      %s241 = smul.addr %s240, 4
      %s242 = scalar_lea.vmem %s1, %s241
      %s243 = smul.u32 16, %s16
      %s244 = smul.u32 16, %s16
      %p245 = scmp.lt.s32.totalorder %s244, 31
      %s246 = scalar_select %p245, %s244, 31
      %s247 = smul.addr %s246, 4
      %s248 = scalar_lea.vmem %s5, %s247
      %s249 = smul.u32 16, %s16
      %v250 = vld [vmem:[%s236] sm:$0xf]
      %v251 = vld [vmem:[%s236 + $0x4] sm:$0xf]
      %v252 = vld [vmem:[%s236 + $0x8] sm:$0xf]
      %v253 = vld [vmem:[%s236 + $0xc] sm:$0xf]
      %v254 = vld [vmem:[%s236 + $0x10] sm:$0xf]
      %v255 = vld [vmem:[%s236 + $0x14] sm:$0xf]
      %v256 = vld [vmem:[%s236 + $0x18] sm:$0xf]
      %v257 = vld [vmem:[%s236 + $0x1c] sm:$0xf]
      %v258 = vld [vmem:[%s236 + $0x20] sm:$0xf]
      %v259 = vld [vmem:[%s236 + $0x24] sm:$0xf]
      %v260 = vld [vmem:[%s236 + $0x28] sm:$0xf]
      %v261 = vld [vmem:[%s236 + $0x2c] sm:$0xf]
      %v262 = vld [vmem:[%s236 + $0x30] sm:$0xf]
      %v263 = vld [vmem:[%s236 + $0x34] sm:$0xf]
      %v264 = vld [vmem:[%s236 + $0x38] sm:$0xf]
      %v265 = vld [vmem:[%s236 + $0x3c] sm:$0xf]
      %v266 = vunpack.c.l.bf16 %v250
      %v267 = vunpack.c.l.bf16 %v251
      %v268 = vunpack.c.l.bf16 %v252
      %v269 = vunpack.c.l.bf16 %v253
      %v270 = vunpack.c.l.bf16 %v254
      %v271 = vunpack.c.l.bf16 %v255
      %v272 = vunpack.c.l.bf16 %v256
      %v273 = vunpack.c.l.bf16 %v257
      %v274 = vunpack.c.l.bf16 %v258
      %v275 = vunpack.c.l.bf16 %v259
      %v276 = vunpack.c.l.bf16 %v260
      %v277 = vunpack.c.l.bf16 %v261
      %v278 = vunpack.c.l.bf16 %v262
      %v279 = vunpack.c.l.bf16 %v263
      %v280 = vunpack.c.l.bf16 %v264
      %v281 = vunpack.c.l.bf16 %v265
      %v282 = vld [vmem:[%s242] sm:$0xf]
      %v283 = vld [vmem:[%s242 + $0x4] sm:$0xf]
      %v284 = vld [vmem:[%s242 + $0x8] sm:$0xf]
      %v285 = vld [vmem:[%s242 + $0xc] sm:$0xf]
      %v286 = vld [vmem:[%s242 + $0x10] sm:$0xf]
      %v287 = vld [vmem:[%s242 + $0x14] sm:$0xf]
      %v288 = vld [vmem:[%s242 + $0x18] sm:$0xf]
      %v289 = vld [vmem:[%s242 + $0x1c] sm:$0xf]
      %v290 = vld [vmem:[%s242 + $0x20] sm:$0xf]
      %v291 = vld [vmem:[%s242 + $0x24] sm:$0xf]
      %v292 = vld [vmem:[%s242 + $0x28] sm:$0xf]
      %v293 = vld [vmem:[%s242 + $0x2c] sm:$0xf]
      %v294 = vld [vmem:[%s242 + $0x30] sm:$0xf]
      %v295 = vld [vmem:[%s242 + $0x34] sm:$0xf]
      %v296 = vld [vmem:[%s242 + $0x38] sm:$0xf]
      %v297 = vld [vmem:[%s242 + $0x3c] sm:$0xf]
      %v298 = vunpack.c.l.bf16 %v282
      %v299 = vunpack.c.l.bf16 %v283
      %v300 = vunpack.c.l.bf16 %v284
      %v301 = vunpack.c.l.bf16 %v285
      %v302 = vunpack.c.l.bf16 %v286
      %v303 = vunpack.c.l.bf16 %v287
      %v304 = vunpack.c.l.bf16 %v288
      %v305 = vunpack.c.l.bf16 %v289
      %v306 = vunpack.c.l.bf16 %v290
      %v307 = vunpack.c.l.bf16 %v291
      %v308 = vunpack.c.l.bf16 %v292
      %v309 = vunpack.c.l.bf16 %v293
      %v310 = vunpack.c.l.bf16 %v294
      %v311 = vunpack.c.l.bf16 %v295
      %v312 = vunpack.c.l.bf16 %v296
      %v313 = vunpack.c.l.bf16 %v297
      %v314 = vadd.f32 %v266, %v298
      %v315 = vadd.f32 %v267, %v299
      %v316 = vadd.f32 %v268, %v300
      %v317 = vadd.f32 %v269, %v301
      %v318 = vadd.f32 %v270, %v302
      %v319 = vadd.f32 %v271, %v303
      %v320 = vadd.f32 %v272, %v304
      %v321 = vadd.f32 %v273, %v305
      %v322 = vadd.f32 %v274, %v306
      %v323 = vadd.f32 %v275, %v307
      %v324 = vadd.f32 %v276, %v308
      %v325 = vadd.f32 %v277, %v309
      %v326 = vadd.f32 %v278, %v310
      %v327 = vadd.f32 %v279, %v311
      %v328 = vadd.f32 %v280, %v312
      %v329 = vadd.f32 %v281, %v313
      %v330 = vld [vmem:[%s2] sm:$0x1]
      %v331 = vunpack.c.l.bf16 %v330
      %v332 = vlaneseq
      %v333 = vshrl.u32 %v332, 7
      %v334 = vsub.s32 0, %v333
      %v335 = vrot.slane %v331, %v334
      %v336 = vadd.f32 %v314, %v335
      %v337 = vadd.f32 %v315, %v335
      %v338 = vadd.f32 %v316, %v335
      %v339 = vadd.f32 %v317, %v335
      %v340 = vadd.f32 %v318, %v335
      %v341 = vadd.f32 %v319, %v335
      %v342 = vadd.f32 %v320, %v335
      %v343 = vadd.f32 %v321, %v335
      %v344 = vadd.f32 %v322, %v335
      %v345 = vadd.f32 %v323, %v335
      %v346 = vadd.f32 %v324, %v335
      %v347 = vadd.f32 %v325, %v335
      %v348 = vadd.f32 %v326, %v335
      %v349 = vadd.f32 %v327, %v335
      %v350 = vadd.f32 %v328, %v335
      %v351 = vadd.f32 %v329, %v335
      %v352 = vld [vmem:[%s3] sm:$0x1]
      %v353 = vld [vmem:[%s4] sm:$0x1]
      %354 = vadd.xlane.f32.xlu0 %v336
      %v355 = vpop.xlane.xlu0 %354
      %356 = vadd.xlane.f32.xlu0 %v337
      %v357 = vpop.xlane.xlu0 %356
      %358 = vadd.xlane.f32.xlu0 %v338
      %v359 = vpop.xlane.xlu0 %358
      %360 = vadd.xlane.f32.xlu0 %v339
      %v361 = vpop.xlane.xlu0 %360
      %362 = vadd.xlane.f32.xlu0 %v340
      %v363 = vpop.xlane.xlu0 %362
      %364 = vadd.xlane.f32.xlu0 %v341
      %v365 = vpop.xlane.xlu0 %364
      %366 = vadd.xlane.f32.xlu0 %v342
      %v367 = vpop.xlane.xlu0 %366
      %368 = vadd.xlane.f32.xlu0 %v343
      %v369 = vpop.xlane.xlu0 %368
      %370 = vadd.xlane.f32.xlu0 %v344
      %v371 = vpop.xlane.xlu0 %370
      %372 = vadd.xlane.f32.xlu0 %v345
      %v373 = vpop.xlane.xlu0 %372
      %374 = vadd.xlane.f32.xlu0 %v346
      %v375 = vpop.xlane.xlu0 %374
      %376 = vadd.xlane.f32.xlu0 %v347
      %v377 = vpop.xlane.xlu0 %376
      %378 = vadd.xlane.f32.xlu0 %v348
      %v379 = vpop.xlane.xlu0 %378
      %380 = vadd.xlane.f32.xlu0 %v349
      %v381 = vpop.xlane.xlu0 %380
      %382 = vadd.xlane.f32.xlu0 %v350
      %v383 = vpop.xlane.xlu0 %382
      %384 = vadd.xlane.f32.xlu0 %v351
      %v385 = vpop.xlane.xlu0 %384
      %v386 = vrcp.pop 128.0
      %v387 = vmul.f32 %v355, %v386
      %v388 = vmul.f32 %v357, %v386
      %v389 = vmul.f32 %v359, %v386
      %v390 = vmul.f32 %v361, %v386
      %v391 = vmul.f32 %v363, %v386
      %v392 = vmul.f32 %v365, %v386
      %v393 = vmul.f32 %v367, %v386
      %v394 = vmul.f32 %v369, %v386
      %v395 = vmul.f32 %v371, %v386
      %v396 = vmul.f32 %v373, %v386
      %v397 = vmul.f32 %v375, %v386
      %v398 = vmul.f32 %v377, %v386
      %v399 = vmul.f32 %v379, %v386
      %v400 = vmul.f32 %v381, %v386
      %v401 = vmul.f32 %v383, %v386
      %v402 = vmul.f32 %v385, %v386
      %v403 = vsub.f32 %v336, %v387
      %v404 = vsub.f32 %v337, %v388
      %v405 = vsub.f32 %v338, %v389
      %v406 = vsub.f32 %v339, %v390
      %v407 = vsub.f32 %v340, %v391
      %v408 = vsub.f32 %v341, %v392
      %v409 = vsub.f32 %v342, %v393
      %v410 = vsub.f32 %v343, %v394
      %v411 = vsub.f32 %v344, %v395
      %v412 = vsub.f32 %v345, %v396
      %v413 = vsub.f32 %v346, %v397
      %v414 = vsub.f32 %v347, %v398
      %v415 = vsub.f32 %v348, %v399
      %v416 = vsub.f32 %v349, %v400
      %v417 = vsub.f32 %v350, %v401
      %v418 = vsub.f32 %v351, %v402
      %v419 = vmul.f32 %v403, %v403
      %v420 = vmul.f32 %v404, %v404
      %v421 = vmul.f32 %v405, %v405
      %v422 = vmul.f32 %v406, %v406
      %v423 = vmul.f32 %v407, %v407
      %v424 = vmul.f32 %v408, %v408
      %v425 = vmul.f32 %v409, %v409
      %v426 = vmul.f32 %v410, %v410
      %v427 = vmul.f32 %v411, %v411
      %v428 = vmul.f32 %v412, %v412
      %v429 = vmul.f32 %v413, %v413
      %v430 = vmul.f32 %v414, %v414
      %v431 = vmul.f32 %v415, %v415
      %v432 = vmul.f32 %v416, %v416
      %v433 = vmul.f32 %v417, %v417
      %v434 = vmul.f32 %v418, %v418
      %435 = vadd.xlane.f32.xlu0 %v419
      %v436 = vpop.xlane.xlu0 %435
      %437 = vadd.xlane.f32.xlu0 %v420
      %v438 = vpop.xlane.xlu0 %437
      %439 = vadd.xlane.f32.xlu0 %v421
      %v440 = vpop.xlane.xlu0 %439
      %441 = vadd.xlane.f32.xlu0 %v422
      %v442 = vpop.xlane.xlu0 %441
      %443 = vadd.xlane.f32.xlu0 %v423
      %v444 = vpop.xlane.xlu0 %443
      %445 = vadd.xlane.f32.xlu0 %v424
      %v446 = vpop.xlane.xlu0 %445
      %447 = vadd.xlane.f32.xlu0 %v425
      %v448 = vpop.xlane.xlu0 %447
      %449 = vadd.xlane.f32.xlu0 %v426
      %v450 = vpop.xlane.xlu0 %449
      %451 = vadd.xlane.f32.xlu0 %v427
      %v452 = vpop.xlane.xlu0 %451
      %453 = vadd.xlane.f32.xlu0 %v428
      %v454 = vpop.xlane.xlu0 %453
      %455 = vadd.xlane.f32.xlu0 %v429
      %v456 = vpop.xlane.xlu0 %455
      %457 = vadd.xlane.f32.xlu0 %v430
      %v458 = vpop.xlane.xlu0 %457
      %459 = vadd.xlane.f32.xlu0 %v431
      %v460 = vpop.xlane.xlu0 %459
      %461 = vadd.xlane.f32.xlu0 %v432
      %v462 = vpop.xlane.xlu0 %461
      %463 = vadd.xlane.f32.xlu0 %v433
      %v464 = vpop.xlane.xlu0 %463
      %465 = vadd.xlane.f32.xlu0 %v434
      %v466 = vpop.xlane.xlu0 %465
      %v467 = vmul.f32 %v436, %v386
      %v468 = vmul.f32 %v438, %v386
      %v469 = vmul.f32 %v440, %v386
      %v470 = vmul.f32 %v442, %v386
      %v471 = vmul.f32 %v444, %v386
      %v472 = vmul.f32 %v446, %v386
      %v473 = vmul.f32 %v448, %v386
      %v474 = vmul.f32 %v450, %v386
      %v475 = vmul.f32 %v452, %v386
      %v476 = vmul.f32 %v454, %v386
      %v477 = vmul.f32 %v456, %v386
      %v478 = vmul.f32 %v458, %v386
      %v479 = vmul.f32 %v460, %v386
      %v480 = vmul.f32 %v462, %v386
      %v481 = vmul.f32 %v464, %v386
      %v482 = vmul.f32 %v466, %v386
      %v483 = vadd.f32 %v467, 1e-05
      %v484 = vadd.f32 %v468, 1e-05
      %v485 = vadd.f32 %v469, 1e-05
      %v486 = vadd.f32 %v470, 1e-05
      %v487 = vadd.f32 %v471, 1e-05
      %v488 = vadd.f32 %v472, 1e-05
      %v489 = vadd.f32 %v473, 1e-05
      %v490 = vadd.f32 %v474, 1e-05
      %v491 = vadd.f32 %v475, 1e-05
      %v492 = vadd.f32 %v476, 1e-05
      %v493 = vadd.f32 %v477, 1e-05
      %v494 = vadd.f32 %v478, 1e-05
      %v495 = vadd.f32 %v479, 1e-05
      %v496 = vadd.f32 %v480, 1e-05
      %v497 = vadd.f32 %v481, 1e-05
      %v498 = vadd.f32 %v482, 1e-05
      %v499 = vrsqrt.pop %v483
      %v500 = vrsqrt.pop %v484
      %v501 = vrsqrt.pop %v485
      %v502 = vrsqrt.pop %v486
      %v503 = vrsqrt.pop %v487
      %v504 = vrsqrt.pop %v488
      %v505 = vrsqrt.pop %v489
      %v506 = vrsqrt.pop %v490
      %v507 = vrsqrt.pop %v491
      %v508 = vrsqrt.pop %v492
      %v509 = vrsqrt.pop %v493
      %v510 = vrsqrt.pop %v494
      %v511 = vrsqrt.pop %v495
      %v512 = vrsqrt.pop %v496
      %v513 = vrsqrt.pop %v497
      %v514 = vrsqrt.pop %v498
      %v515 = vmul.f32 %v403, %v499
      %v516 = vmul.f32 %v404, %v500
      %v517 = vmul.f32 %v405, %v501
      %v518 = vmul.f32 %v406, %v502
      %v519 = vmul.f32 %v407, %v503
      %v520 = vmul.f32 %v408, %v504
      %v521 = vmul.f32 %v409, %v505
      %v522 = vmul.f32 %v410, %v506
      %v523 = vmul.f32 %v411, %v507
      %v524 = vmul.f32 %v412, %v508
      %v525 = vmul.f32 %v413, %v509
      %v526 = vmul.f32 %v414, %v510
      %v527 = vmul.f32 %v415, %v511
      %v528 = vmul.f32 %v416, %v512
      %v529 = vmul.f32 %v417, %v513
      %v530 = vmul.f32 %v418, %v514
      %v532 = vlaneseq
      %v533 = vshrl.u32 %v532, 7
      %v534 = vsub.s32 0, %v533
      %v535 = vrot.slane %v352, %v534
      %v537 = vmul.f32 %v515, %v535
      %v538 = vmul.f32 %v516, %v535
      %v539 = vmul.f32 %v517, %v535
      %v540 = vmul.f32 %v518, %v535
      %v541 = vmul.f32 %v519, %v535
      %v542 = vmul.f32 %v520, %v535
      %v543 = vmul.f32 %v521, %v535
      %v544 = vmul.f32 %v522, %v535
      %v545 = vmul.f32 %v523, %v535
      %v546 = vmul.f32 %v524, %v535
      %v547 = vmul.f32 %v525, %v535
      %v548 = vmul.f32 %v526, %v535
      %v549 = vmul.f32 %v527, %v535
      %v550 = vmul.f32 %v528, %v535
      %v551 = vmul.f32 %v529, %v535
      %v552 = vmul.f32 %v530, %v535
      %v554 = vlaneseq
      %v555 = vshrl.u32 %v554, 7
      %v556 = vsub.s32 0, %v555
      %v557 = vrot.slane %v353, %v556
      %v559 = vadd.f32 %v537, %v557
      %v560 = vadd.f32 %v538, %v557
      %v561 = vadd.f32 %v539, %v557
      %v562 = vadd.f32 %v540, %v557
      %v563 = vadd.f32 %v541, %v557
      %v564 = vadd.f32 %v542, %v557
      %v565 = vadd.f32 %v543, %v557
      %v566 = vadd.f32 %v544, %v557
      %v567 = vadd.f32 %v545, %v557
      %v568 = vadd.f32 %v546, %v557
      %v569 = vadd.f32 %v547, %v557
      %v570 = vadd.f32 %v548, %v557
      %v571 = vadd.f32 %v549, %v557
      %v572 = vadd.f32 %v550, %v557
      %v573 = vadd.f32 %v551, %v557
      %v574 = vadd.f32 %v552, %v557
      %v575 = vpack.c.bf16 %v560, %v559
      %v576 = vpack.c.bf16 %v562, %v561
      %v577 = vpack.c.bf16 %v564, %v563
      %v578 = vpack.c.bf16 %v566, %v565
      %v579 = vpack.c.bf16 %v568, %v567
      %v580 = vpack.c.bf16 %v570, %v569
      %v581 = vpack.c.bf16 %v572, %v571
      %v582 = vpack.c.bf16 %v574, %v573
      %v591 = vunpack.c.l.b16 %v575
      %v592 = vunpack.c.h.b16 %v575
      %v593 = vunpack.c.l.b16 %v576
      %v594 = vunpack.c.h.b16 %v576
      %v595 = vunpack.c.l.b16 %v577
      %v596 = vunpack.c.h.b16 %v577
      %v597 = vunpack.c.l.b16 %v578
      %v598 = vunpack.c.h.b16 %v578
      %v599 = vunpack.c.l.b16 %v579
      %v600 = vunpack.c.h.b16 %v579
      %v601 = vunpack.c.l.b16 %v580
      %v602 = vunpack.c.h.b16 %v580
      %v603 = vunpack.c.l.b16 %v581
      %v604 = vunpack.c.h.b16 %v581
      %v605 = vunpack.c.l.b16 %v582
      %v606 = vunpack.c.h.b16 %v582
      %v607 = vpack.c.b16 %v591, %v591
      %v608 = vpack.c.b16 %v592, %v592
      %v609 = vpack.c.b16 %v593, %v593
      %v610 = vpack.c.b16 %v594, %v594
      %v611 = vpack.c.b16 %v595, %v595
      %v612 = vpack.c.b16 %v596, %v596
      %v613 = vpack.c.b16 %v597, %v597
      %v614 = vpack.c.b16 %v598, %v598
      %v615 = vpack.c.b16 %v599, %v599
      %v616 = vpack.c.b16 %v600, %v600
      %v617 = vpack.c.b16 %v601, %v601
      %v618 = vpack.c.b16 %v602, %v602
      %v619 = vpack.c.b16 %v603, %v603
      %v620 = vpack.c.b16 %v604, %v604
      %v621 = vpack.c.b16 %v605, %v605
      %v622 = vpack.c.b16 %v606, %v606
      %639 = vst [vmem:[%s248] sm:$0xf] %v607
      %640 = vst [vmem:[%s248 + $0x4] sm:$0xf] %v608
      %641 = vst [vmem:[%s248 + $0x8] sm:$0xf] %v609
      %642 = vst [vmem:[%s248 + $0xc] sm:$0xf] %v610
      %643 = vst [vmem:[%s248 + $0x10] sm:$0xf] %v611
      %644 = vst [vmem:[%s248 + $0x14] sm:$0xf] %v612
      %645 = vst [vmem:[%s248 + $0x18] sm:$0xf] %v613
      %646 = vst [vmem:[%s248 + $0x1c] sm:$0xf] %v614
      %647 = vst [vmem:[%s248 + $0x20] sm:$0xf] %v615
      %648 = vst [vmem:[%s248 + $0x24] sm:$0xf] %v616
      %649 = vst [vmem:[%s248 + $0x28] sm:$0xf] %v617
      %650 = vst [vmem:[%s248 + $0x2c] sm:$0xf] %v618
      %651 = vst [vmem:[%s248 + $0x30] sm:$0xf] %v619
      %652 = vst [vmem:[%s248 + $0x34] sm:$0xf] %v620
      %653 = vst [vmem:[%s248 + $0x38] sm:$0xf] %v621
      %654 = vst [vmem:[%s248 + $0x3c] sm:$0xf] %v622
      %s655 = smul.u32 16, %s16
      %p656 = scmp.lt.s32.totalorder %s655, 31
      %s657 = scalar_select %p656, %s655, 31
      %s658 = smul.addr %s657, 4
      %s659 = scalar_lea.vmem %s5, %s658
      // Predicated region
      $region41: #{easyrec_forward.4} parent=39 // pred_check
        %p660 = pneg %p149
      $region42: #{easyrec_forward.4} parent=39 // pred_check_branch
        %662 = sbr.rel (%p660) target = $region44
      $region43: #{easyrec_forward.4} parent=39 // pred_region
        %s663 = smul.u32 16, %s16
      $region44: #{easyrec_forward.4} parent=39 // pred_fallthru
        _
    $region40: #{easyrec_forward.4} parent=5 // pred_fallthru
      _
    %p664 = scmp.le.s32.totalorder 2, %s11
    // Predicated region
    $region45: #{easyrec_forward.4} parent=5 // pred_check
      %p665 = pneg %p664
    $region46: #{easyrec_forward.4} parent=5 // pred_check_branch
      %667 = sbr.rel (%p665) target = $region48
    $region47: #{easyrec_forward.4} parent=5 // pred_region
      %s668 = ssub.s32 %s11, 2
      // Predicated region
      $region49: #{easyrec_forward.4} parent=47 // pred_check
        %p669 = pneg %p155
      $region50: #{easyrec_forward.4} parent=47 // pred_check_branch
        %671 = sbr.rel (%p669) target = $region52
      $region51: #{easyrec_forward.4} parent=47 // pred_region
        %s672 = smul.u32 16, %s17
        %p673 = scmp.lt.s32.totalorder %s672, 31
        %s674 = scalar_select %p673, %s672, 31
        %s675 = smul.addr %s674, 4
        %s676 = scalar_lea.vmem %s5, %s675
      $region52: #{easyrec_forward.4} parent=47 // pred_fallthru
        _
    $region48: #{easyrec_forward.4} parent=5 // pred_fallthru
      _
  $region6: #{easyrec_forward.4} parent=0 // loop_footer
    %s15 = sadd.s32 1, %s11
  $region7: #{easyrec_forward.4} parent=0 // loop_footer_branch
    %10 = sbr.rel target = $region3
  $region8: #{easyrec_forward.4} parent=0 // loop_exit
    _

// kernel: easyrec_forward.7
$region0: #{easyrec_forward.7}
  #allocation0 [shape = 'u32[]', space=smem, size = 0x4, offset = 0x4, fixed_abs, tag = 'smem constant byte address 0x4 - core index']
  #allocation1 [shape = 'u32[144,128]{1,0:T(1,128)}', space=vmem, size = 0x12000, scoped, tag = 'internal scratch']
  %s0 = inlined_call_operand.vmem [shape: bf16[2,128], index: 0, kind: input, shape index: {}]
  %s1 = inlined_call_operand.vmem [shape: bf16[128,128], index: 1, kind: input, shape index: {}]
  %s2 = inlined_call_operand.vmem [shape: f32[1,128], index: 2, kind: input, shape index: {}]
  %s3 = inlined_call_operand.hbm [shape: f32[2,128], index: 3, kind: output, shape index: {}]
  %s4 = sld [smem:[#allocation0]]
  $region22: #{easyrec_forward.7} parent=0
    _
  %s6 = ssub.s32 1, %s4
  %s7 = scalar_select 0, %s6, %s4
  $region1: #{easyrec_forward.7} parent=0
    #allocation2 [shape = 'u8[1024]{0}', space=vmem, size = 0x400, scoped, tag = 'output window, operand 0, single buffered']
    #allocation3 [shape = 's32[1]{0}', space=sflag, size = 0x4, scoped, tag = 'scoped memory for easyrec_forward.7']
    %8 = vsyncpa [#allocation3], 0
    // Predicated region
    $region2: #{easyrec_forward.7} parent=1 // pred_check
      _
    $region3: #{easyrec_forward.7} parent=1 // pred_check_branch
      %10 = sbr.rel (0) target = $region5
    $region4: #{easyrec_forward.7} parent=1 // pred_region
      _
    $region5: #{easyrec_forward.7} parent=1 // pred_fallthru
      _
    // Predicated region
    $region6: #{easyrec_forward.7} parent=1 // pred_check
      _
    $region7: #{easyrec_forward.7} parent=1 // pred_check_branch
      %12 = sbr.rel (0) target = $region9
    $region8: #{easyrec_forward.7} parent=1 // pred_region
      _
    $region9: #{easyrec_forward.7} parent=1 // pred_fallthru
      _
    // Predicated region
    $region10: #{easyrec_forward.7} parent=1 // pred_check
      _
    $region11: #{easyrec_forward.7} parent=1 // pred_check_branch
      %14 = sbr.rel (0) target = $region13
    $region12: #{easyrec_forward.7} parent=1 // pred_region
      _
    $region13: #{easyrec_forward.7} parent=1 // pred_fallthru
      _
    %v16 = vld [vmem:[%s0] sm:$0x1]
    %v17 = vld [vmem:[%s1] sm:$0xf]
    %v18 = vld [vmem:[%s1 + $0x4] sm:$0xf]
    %v19 = vld [vmem:[%s1 + $0x8] sm:$0xf]
    %v20 = vld [vmem:[%s1 + $0xc] sm:$0xf]
    %v21 = vld [vmem:[%s1 + $0x10] sm:$0xf]
    %v22 = vld [vmem:[%s1 + $0x14] sm:$0xf]
    %v23 = vld [vmem:[%s1 + $0x18] sm:$0xf]
    %v24 = vld [vmem:[%s1 + $0x1c] sm:$0xf]
    %v25 = vld [vmem:[%s1 + $0x20] sm:$0xf]
    %v26 = vld [vmem:[%s1 + $0x24] sm:$0xf]
    %v27 = vld [vmem:[%s1 + $0x28] sm:$0xf]
    %v28 = vld [vmem:[%s1 + $0x2c] sm:$0xf]
    %v29 = vld [vmem:[%s1 + $0x30] sm:$0xf]
    %v30 = vld [vmem:[%s1 + $0x34] sm:$0xf]
    %v31 = vld [vmem:[%s1 + $0x38] sm:$0xf]
    %v32 = vld [vmem:[%s1 + $0x3c] sm:$0xf]
    %v33 = vld [vmem:[%s2] sm:$0x1]
    %v35 = vlaneseq
    %v36 = vshrl.u32 %v35, 7
    %v37 = vsub.s32 0, %v36
    %v38 = vrot.slane %v33, %v37
    %v56 = vunpack.c.l.b16 %v17
    %v57 = vunpack.c.l.b16 %v18
    %v58 = vunpack.c.l.b16 %v19
    %v59 = vunpack.c.l.b16 %v20
    %v60 = vunpack.c.l.b16 %v21
    %v61 = vunpack.c.l.b16 %v22
    %v62 = vunpack.c.l.b16 %v23
    %v63 = vunpack.c.l.b16 %v24
    %v64 = vunpack.c.l.b16 %v25
    %v65 = vunpack.c.l.b16 %v26
    %v66 = vunpack.c.l.b16 %v27
    %v67 = vunpack.c.l.b16 %v28
    %v68 = vunpack.c.l.b16 %v29
    %v69 = vunpack.c.l.b16 %v30
    %v70 = vunpack.c.l.b16 %v31
    %v71 = vunpack.c.l.b16 %v32
    %v72 = vpack.c.b16 %v57, %v56
    %v73 = vpack.c.b16 %v59, %v58
    %v74 = vpack.c.b16 %v61, %v60
    %v75 = vpack.c.b16 %v63, %v62
    %v76 = vpack.c.b16 %v65, %v64
    %v77 = vpack.c.b16 %v67, %v66
    %v78 = vpack.c.b16 %v69, %v68
    %v79 = vpack.c.b16 %v71, %v70
    %88 = vmatprep.subr.bf16.mxu0 0
    %89 = vmatpush1.bf16.msra.mxu0 %v72
    %90 = vmatprep.subr.bf16.mxu0 0
    %91 = vmatpush1.bf16.msra.mxu0 %v73
    %92 = vmatprep.subr.bf16.mxu0 0
    %93 = vmatpush1.bf16.msra.mxu0 %v74
    %94 = vmatprep.subr.bf16.mxu0 0
    %95 = vmatpush1.bf16.msra.mxu0 %v75
    %96 = vmatprep.subr.bf16.mxu0 0
    %97 = vmatpush1.bf16.msra.mxu0 %v76
    %98 = vmatprep.subr.bf16.mxu0 0
    %99 = vmatpush1.bf16.msra.mxu0 %v77
    %100 = vmatprep.subr.bf16.mxu0 0
    %101 = vmatpush1.bf16.msra.mxu0 %v78
    %102 = vmatprep.subr.bf16.mxu0 0
    %103 = vmatpush1.bf16.msra.mxu0 %v79
    %104 = vmatprep.subr.bf16.mxu0 0
    %105 = vmatpush1.bf16.msra.mxu0 0
    %106 = vmatprep.subr.bf16.mxu0 0
    %107 = vmatpush1.bf16.msra.mxu0 0
    %108 = vmatprep.subr.bf16.mxu0 0
    %109 = vmatpush1.bf16.msra.mxu0 0
    %110 = vmatprep.subr.bf16.mxu0 0
    %111 = vmatpush1.bf16.msra.mxu0 0
    %112 = vmatprep.subr.bf16.mxu0 0
    %113 = vmatpush1.bf16.msra.mxu0 0
    %114 = vmatprep.subr.bf16.mxu0 0
    %115 = vmatpush1.bf16.msra.mxu0 0
    %116 = vmatprep.subr.bf16.mxu0 0
    %117 = vmatpush1.bf16.msra.mxu0 0
    %118 = vmatprep.subr.bf16.mxu0 0
    %119 = vmatpush1.bf16.msra.mxu0 0
    %120 = vmatprep.mubr.bf16.mxu0 0
    %121 = vmatmul.mubr.bf16.gmra.mrb[0].mxu0 %v16
    %v122 = vpop.f32.mrb[0].mxu0
    %v123 = vadd.f32 %v38, %v122
    %v124 = vpop.f32.mrb[0].mxu0
    %v125 = vpop.f32.mrb[0].mxu0
    %v126 = vpop.f32.mrb[0].mxu0
    %127 = vdwg.mxu0
    %v128 = vtanh.pop %v123
    %v129 = vmul.f32 %v128, %v128
    %vm130 = vcmask 1041408
    %v131 = vsel %vm130, %v129, 0.0
    %132 = vadd.xlane.f32.xlu0 %v131
    %v133 = vpop.xlane.xlu0 %132
    %v134 = vrsqrt.pop %v133
    %v135 = vmul.f32 %v133, %v134
    %vm136 = vcmp.eq.f32.partialorder %v133, inf
    %v137 = vsel %vm136, %v133, %v135
    %vm138 = vcmp.eq.f32.partialorder %v133, 0.0
    %v139 = vand.u32 %v133, 2147483648
    %v140 = vsel %vm138, %v139, %v137
    %v141 = vmax.f32 %v140, 1e-12
    %v142 = vrcp.pop %v141
    %v143 = vmul.f32 %v128, %v142
    %144 = vst [vmem:[#allocation2] sm:$0x3] %v143
    // Predicated region
    $region14: #{easyrec_forward.7} parent=1 // pred_check
      _
    $region15: #{easyrec_forward.7} parent=1 // pred_check_branch
      %146 = sbr.rel (0) target = $region17
    $region16: #{easyrec_forward.7} parent=1 // pred_region
      %s148 = ssub.s32 32, 32
      %149 = vsyncadd [#allocation3], %s148
      %s151 = sshll.u32 [#allocation2], 4
      %s152 = int_to_ptr.vmem [resolvable:$true] %s151
      %154 = dma.vmem_to_hbm [thread:$0]  %s152, 32, %s3, [#allocation3]
    $region17: #{easyrec_forward.7} parent=1 // pred_fallthru
      _
    // Predicated region
    $region18: #{easyrec_forward.7} parent=1 // pred_check
      _
    $region19: #{easyrec_forward.7} parent=1 // pred_check_branch
      %156 = sbr.rel (0) target = $region21
    $region20: #{easyrec_forward.7} parent=1 // pred_region
      %157 = dma.done [#allocation3], 32
    $region21: #{easyrec_forward.7} parent=1 // pred_fallthru
      _
    %158 = vsyncpa [#allocation3], 1

// kernel: easyrec_forward.5
$region0: #{easyrec_forward.5}
  #allocation0 [shape = 'u32[]', space=smem, size = 0x4, offset = 0x4, fixed_abs, tag = 'smem constant byte address 0x4 - core index']
  #allocation1 [shape = 'u32[144,128]{1,0:T(1,128)}', space=vmem, size = 0x12000, scoped, tag = 'internal scratch']
  %s0 = inlined_call_operand.vmem [shape: bf16[2,128,128], index: 0, kind: input, shape index: {}]
  %s1 = inlined_call_operand.vmem [shape: f32[2,1,128], index: 1, kind: input, shape index: {}]
  %s2 = inlined_call_operand.vmem [shape: bf16[128,384], index: 2, kind: input, shape index: {}]
  %s3 = inlined_call_operand.vmem [shape: f32[1,384], index: 3, kind: input, shape index: {}]
  %s4 = inlined_call_operand.vmem [shape: bf16[128,128], index: 4, kind: input, shape index: {}]
  %s5 = inlined_call_operand.vmem [shape: f32[1,128], index: 5, kind: input, shape index: {}]
  %s6 = inlined_call_operand.vmem [shape: f32[1,128], index: 6, kind: input, shape index: {}]
  %s7 = inlined_call_operand.vmem [shape: f32[1,128], index: 7, kind: input, shape index: {}]
  %s8 = inlined_call_operand.vmem [shape: bf16[128,512], index: 8, kind: input, shape index: {}]
  %s9 = inlined_call_operand.vmem [shape: f32[1,512], index: 9, kind: input, shape index: {}]
  %s10 = inlined_call_operand.vmem [shape: bf16[512,128], index: 10, kind: input, shape index: {}]
  %s11 = inlined_call_operand.vmem [shape: f32[1,128], index: 11, kind: input, shape index: {}]
  %s12 = inlined_call_operand.vmem [shape: f32[1,128], index: 12, kind: input, shape index: {}]
  %s13 = inlined_call_operand.vmem [shape: f32[1,128], index: 13, kind: input, shape index: {}]
  %s14 = inlined_call_operand.vmem [shape: bf16[2,128,128], index: 14, kind: output, shape index: {}]
  %s15 = sld [smem:[#allocation0]]
  $region89: #{easyrec_forward.5} parent=0
    _
  %s17 = ssub.s32 1, %s15
  %s18 = scalar_select 0, %s17, %s15
  loop: start=0, step=1, limit=4
  $region2: #{easyrec_forward.5} parent=0 // loop_pre_header
    _
  $region3: #{easyrec_forward.5} parent=0 // loop_header
    %s20 = sphi 0, %s24
    %p21 = scmp.ge.s32.totalorder %s20, 4
    %s30 = sphi 0, %s32
    %s33 = sphi 0, %s30
    %s34 = sphi 0, %s33
    %s50 = sphi 0, %s34
    %s56 = sphi 0, %s58
    %s59 = sphi 0, %s56
    %s60 = sphi 0, %s59
    %s76 = sphi 0, %s60
    %s80 = sphi 0, %s80
    %s82 = sphi 0, %s80
    %s83 = sphi 0, %s82
    %s97 = sphi 0, %s83
    %s101 = sphi 0, %s101
    %s103 = sphi 0, %s101
    %s104 = sphi 0, %s103
    %s118 = sphi 0, %s104
    %s122 = sphi 0, %s122
    %s124 = sphi 0, %s122
    %s125 = sphi 0, %s124
    %s139 = sphi 0, %s125
    %s143 = sphi 0, %s143
    %s145 = sphi 0, %s143
    %s146 = sphi 0, %s145
    %s160 = sphi 0, %s146
    %s164 = sphi 0, %s164
    %s166 = sphi 0, %s164
    %s167 = sphi 0, %s166
    %s181 = sphi 0, %s167
    %s185 = sphi 0, %s185
    %s187 = sphi 0, %s185
    %s188 = sphi 0, %s187
    %s202 = sphi 0, %s188
    %s206 = sphi 0, %s206
    %s208 = sphi 0, %s206
    %s209 = sphi 0, %s208
    %s223 = sphi 0, %s209
    %s227 = sphi 0, %s227
    %s229 = sphi 0, %s227
    %s230 = sphi 0, %s229
    %s244 = sphi 0, %s230
    %s248 = sphi 0, %s248
    %s250 = sphi 0, %s248
    %s251 = sphi 0, %s250
    %s265 = sphi 0, %s251
    %s269 = sphi 0, %s269
    %s271 = sphi 0, %s269
    %s272 = sphi 0, %s271
    %s286 = sphi 0, %s272
    %s290 = sphi 0, %s290
    %s292 = sphi 0, %s290
    %s293 = sphi 0, %s292
    %s307 = sphi 0, %s293
    %s311 = sphi 0, %s311
    %s313 = sphi 0, %s311
    %s314 = sphi 0, %s313
    %s328 = sphi 0, %s314
    %s334 = sphi 0, %s336
    %s337 = sphi 0, %s334
    %s338 = sphi 0, %s337
    %s354 = sphi 0, %s338
  $region4: #{easyrec_forward.5} parent=0 // loop_header_branch
    %23 = sbr.rel (%p21) target = $region8
  $region5: #{easyrec_forward.5} parent=0 // loop_body
    %s25 = ssub.s32 %s20, 1
    %s26 = ssub.s32 %s20, 2
    %s27 = sadd.s32 %s20, 1
    %s28 = ssub.s32 %s20, %s27
    %p29 = scmp.eq.s32.totalorder %s28, 0
    %s31 = sadd.s32 %s30, 1
    %s32 = scalar_select %p29, %s30, %s31
    %p35 = pneg %p29
    %p36 = scmp.eq.s32.totalorder %s20, 1
    %p37 = por %p35, %p36
    %p38 = scmp.ne.s32.totalorder %s30, %s33
    %p39 = scmp.eq.s32.totalorder %s20, 0
    %p40 = por %p38, %p39
    %p41 = scmp.ne.s32.totalorder %s30, %s33
    %p42 = scmp.eq.s32.totalorder %s25, 1
    %p43 = por %p41, %p42
    %p44 = scmp.ne.s32.totalorder %s33, %s34
    %p45 = scmp.eq.s32.totalorder %s25, 0
    %p46 = por %p44, %p45
    %p47 = scmp.ne.s32.totalorder %s33, %s34
    %p48 = scmp.eq.s32.totalorder %s26, 1
    %p49 = por %p47, %p48
    %p51 = scmp.ne.s32.totalorder %s34, %s50
    %p52 = scmp.eq.s32.totalorder %s26, 0
    %p53 = por %p51, %p52
    %s54 = ssub.s32 %s20, %s27
    %p55 = scmp.eq.s32.totalorder %s54, 0
    %s57 = sadd.s32 %s56, 1
    %s58 = scalar_select %p55, %s56, %s57
    %p61 = pneg %p55
    %p62 = scmp.eq.s32.totalorder %s20, 1
    %p63 = por %p61, %p62
    %p64 = scmp.ne.s32.totalorder %s56, %s59
    %p65 = scmp.eq.s32.totalorder %s20, 0
    %p66 = por %p64, %p65
    %p67 = scmp.ne.s32.totalorder %s56, %s59
    %p68 = scmp.eq.s32.totalorder %s25, 1
    %p69 = por %p67, %p68
    %p70 = scmp.ne.s32.totalorder %s59, %s60
    %p71 = scmp.eq.s32.totalorder %s25, 0
    %p72 = por %p70, %p71
    %p73 = scmp.ne.s32.totalorder %s59, %s60
    %p74 = scmp.eq.s32.totalorder %s26, 1
    %p75 = por %p73, %p74
    %p77 = scmp.ne.s32.totalorder %s60, %s76
    %p78 = scmp.eq.s32.totalorder %s26, 0
    %p79 = por %p77, %p78
    %s81 = sadd.s32 %s80, 1
    %p84 = scmp.eq.s32.totalorder %s20, 1
    %p85 = scmp.ne.s32.totalorder %s80, %s82
    %p86 = scmp.eq.s32.totalorder %s20, 0
    %p87 = por %p85, %p86
    %p88 = scmp.ne.s32.totalorder %s80, %s82
    %p89 = scmp.eq.s32.totalorder %s25, 1
    %p90 = por %p88, %p89
    %p91 = scmp.ne.s32.totalorder %s82, %s83
    %p92 = scmp.eq.s32.totalorder %s25, 0
    %p93 = por %p91, %p92
    %p94 = scmp.ne.s32.totalorder %s82, %s83
    %p95 = scmp.eq.s32.totalorder %s26, 1
    %p96 = por %p94, %p95
    %p98 = scmp.ne.s32.totalorder %s83, %s97
    %p99 = scmp.eq.s32.totalorder %s26, 0
    %p100 = por %p98, %p99
    %s102 = sadd.s32 %s101, 1
    %p105 = scmp.eq.s32.totalorder %s20, 1
    %p106 = scmp.ne.s32.totalorder %s101, %s103
    %p107 = scmp.eq.s32.totalorder %s20, 0
    %p108 = por %p106, %p107
    %p109 = scmp.ne.s32.totalorder %s101, %s103
    %p110 = scmp.eq.s32.totalorder %s25, 1
    %p111 = por %p109, %p110
    %p112 = scmp.ne.s32.totalorder %s103, %s104
    %p113 = scmp.eq.s32.totalorder %s25, 0
    %p114 = por %p112, %p113
    %p115 = scmp.ne.s32.totalorder %s103, %s104
    %p116 = scmp.eq.s32.totalorder %s26, 1
    %p117 = por %p115, %p116
    %p119 = scmp.ne.s32.totalorder %s104, %s118
    %p120 = scmp.eq.s32.totalorder %s26, 0
    %p121 = por %p119, %p120
    %s123 = sadd.s32 %s122, 1
    %p126 = scmp.eq.s32.totalorder %s20, 1
    %p127 = scmp.ne.s32.totalorder %s122, %s124
    %p128 = scmp.eq.s32.totalorder %s20, 0
    %p129 = por %p127, %p128
    %p130 = scmp.ne.s32.totalorder %s122, %s124
    %p131 = scmp.eq.s32.totalorder %s25, 1
    %p132 = por %p130, %p131
    %p133 = scmp.ne.s32.totalorder %s124, %s125
    %p134 = scmp.eq.s32.totalorder %s25, 0
    %p135 = por %p133, %p134
    %p136 = scmp.ne.s32.totalorder %s124, %s125
    %p137 = scmp.eq.s32.totalorder %s26, 1
    %p138 = por %p136, %p137
    %p140 = scmp.ne.s32.totalorder %s125, %s139
    %p141 = scmp.eq.s32.totalorder %s26, 0
    %p142 = por %p140, %p141
    %s144 = sadd.s32 %s143, 1
    %p147 = scmp.eq.s32.totalorder %s20, 1
    %p148 = scmp.ne.s32.totalorder %s143, %s145
    %p149 = scmp.eq.s32.totalorder %s20, 0
    %p150 = por %p148, %p149
    %p151 = scmp.ne.s32.totalorder %s143, %s145
    %p152 = scmp.eq.s32.totalorder %s25, 1
    %p153 = por %p151, %p152
    %p154 = scmp.ne.s32.totalorder %s145, %s146
    %p155 = scmp.eq.s32.totalorder %s25, 0
    %p156 = por %p154, %p155
    %p157 = scmp.ne.s32.totalorder %s145, %s146
    %p158 = scmp.eq.s32.totalorder %s26, 1
    %p159 = por %p157, %p158
    %p161 = scmp.ne.s32.totalorder %s146, %s160
    %p162 = scmp.eq.s32.totalorder %s26, 0
    %p163 = por %p161, %p162
    %s165 = sadd.s32 %s164, 1
    %p168 = scmp.eq.s32.totalorder %s20, 1
    %p169 = scmp.ne.s32.totalorder %s164, %s166
    %p170 = scmp.eq.s32.totalorder %s20, 0
    %p171 = por %p169, %p170
    %p172 = scmp.ne.s32.totalorder %s164, %s166
    %p173 = scmp.eq.s32.totalorder %s25, 1
    %p174 = por %p172, %p173
    %p175 = scmp.ne.s32.totalorder %s166, %s167
    %p176 = scmp.eq.s32.totalorder %s25, 0
    %p177 = por %p175, %p176
    %p178 = scmp.ne.s32.totalorder %s166, %s167
    %p179 = scmp.eq.s32.totalorder %s26, 1
    %p180 = por %p178, %p179
    %p182 = scmp.ne.s32.totalorder %s167, %s181
    %p183 = scmp.eq.s32.totalorder %s26, 0
    %p184 = por %p182, %p183
    %s186 = sadd.s32 %s185, 1
    %p189 = scmp.eq.s32.totalorder %s20, 1
    %p190 = scmp.ne.s32.totalorder %s185, %s187
    %p191 = scmp.eq.s32.totalorder %s20, 0
    %p192 = por %p190, %p191
    %p193 = scmp.ne.s32.totalorder %s185, %s187
    %p194 = scmp.eq.s32.totalorder %s25, 1
    %p195 = por %p193, %p194
    %p196 = scmp.ne.s32.totalorder %s187, %s188
    %p197 = scmp.eq.s32.totalorder %s25, 0
    %p198 = por %p196, %p197
    %p199 = scmp.ne.s32.totalorder %s187, %s188
    %p200 = scmp.eq.s32.totalorder %s26, 1
    %p201 = por %p199, %p200
    %p203 = scmp.ne.s32.totalorder %s188, %s202
    %p204 = scmp.eq.s32.totalorder %s26, 0
    %p205 = por %p203, %p204
    %s207 = sadd.s32 %s206, 1
    %p210 = scmp.eq.s32.totalorder %s20, 1
    %p211 = scmp.ne.s32.totalorder %s206, %s208
    %p212 = scmp.eq.s32.totalorder %s20, 0
    %p213 = por %p211, %p212
    %p214 = scmp.ne.s32.totalorder %s206, %s208
    %p215 = scmp.eq.s32.totalorder %s25, 1
    %p216 = por %p214, %p215
    %p217 = scmp.ne.s32.totalorder %s208, %s209
    %p218 = scmp.eq.s32.totalorder %s25, 0
    %p219 = por %p217, %p218
    %p220 = scmp.ne.s32.totalorder %s208, %s209
    %p221 = scmp.eq.s32.totalorder %s26, 1
    %p222 = por %p220, %p221
    %p224 = scmp.ne.s32.totalorder %s209, %s223
    %p225 = scmp.eq.s32.totalorder %s26, 0
    %p226 = por %p224, %p225
    %s228 = sadd.s32 %s227, 1
    %p231 = scmp.eq.s32.totalorder %s20, 1
    %p232 = scmp.ne.s32.totalorder %s227, %s229
    %p233 = scmp.eq.s32.totalorder %s20, 0
    %p234 = por %p232, %p233
    %p235 = scmp.ne.s32.totalorder %s227, %s229
    %p236 = scmp.eq.s32.totalorder %s25, 1
    %p237 = por %p235, %p236
    %p238 = scmp.ne.s32.totalorder %s229, %s230
    %p239 = scmp.eq.s32.totalorder %s25, 0
    %p240 = por %p238, %p239
    %p241 = scmp.ne.s32.totalorder %s229, %s230
    %p242 = scmp.eq.s32.totalorder %s26, 1
    %p243 = por %p241, %p242
    %p245 = scmp.ne.s32.totalorder %s230, %s244
    %p246 = scmp.eq.s32.totalorder %s26, 0
    %p247 = por %p245, %p246
    %s249 = sadd.s32 %s248, 1
    %p252 = scmp.eq.s32.totalorder %s20, 1
    %p253 = scmp.ne.s32.totalorder %s248, %s250
    %p254 = scmp.eq.s32.totalorder %s20, 0
    %p255 = por %p253, %p254
    %p256 = scmp.ne.s32.totalorder %s248, %s250
    %p257 = scmp.eq.s32.totalorder %s25, 1
    %p258 = por %p256, %p257
    %p259 = scmp.ne.s32.totalorder %s250, %s251
    %p260 = scmp.eq.s32.totalorder %s25, 0
    %p261 = por %p259, %p260
    %p262 = scmp.ne.s32.totalorder %s250, %s251
    %p263 = scmp.eq.s32.totalorder %s26, 1
    %p264 = por %p262, %p263
    %p266 = scmp.ne.s32.totalorder %s251, %s265
    %p267 = scmp.eq.s32.totalorder %s26, 0
    %p268 = por %p266, %p267
    %s270 = sadd.s32 %s269, 1
    %p273 = scmp.eq.s32.totalorder %s20, 1
    %p274 = scmp.ne.s32.totalorder %s269, %s271
    %p275 = scmp.eq.s32.totalorder %s20, 0
    %p276 = por %p274, %p275
    %p277 = scmp.ne.s32.totalorder %s269, %s271
    %p278 = scmp.eq.s32.totalorder %s25, 1
    %p279 = por %p277, %p278
    %p280 = scmp.ne.s32.totalorder %s271, %s272
    %p281 = scmp.eq.s32.totalorder %s25, 0
    %p282 = por %p280, %p281
    %p283 = scmp.ne.s32.totalorder %s271, %s272
    %p284 = scmp.eq.s32.totalorder %s26, 1
    %p285 = por %p283, %p284
    %p287 = scmp.ne.s32.totalorder %s272, %s286
    %p288 = scmp.eq.s32.totalorder %s26, 0
    %p289 = por %p287, %p288
    %s291 = sadd.s32 %s290, 1
    %p294 = scmp.eq.s32.totalorder %s20, 1
    %p295 = scmp.ne.s32.totalorder %s290, %s292
    %p296 = scmp.eq.s32.totalorder %s20, 0
    %p297 = por %p295, %p296
    %p298 = scmp.ne.s32.totalorder %s290, %s292
    %p299 = scmp.eq.s32.totalorder %s25, 1
    %p300 = por %p298, %p299
    %p301 = scmp.ne.s32.totalorder %s292, %s293
    %p302 = scmp.eq.s32.totalorder %s25, 0
    %p303 = por %p301, %p302
    %p304 = scmp.ne.s32.totalorder %s292, %s293
    %p305 = scmp.eq.s32.totalorder %s26, 1
    %p306 = por %p304, %p305
    %p308 = scmp.ne.s32.totalorder %s293, %s307
    %p309 = scmp.eq.s32.totalorder %s26, 0
    %p310 = por %p308, %p309
    %s312 = sadd.s32 %s311, 1
    %p315 = scmp.eq.s32.totalorder %s20, 1
    %p316 = scmp.ne.s32.totalorder %s311, %s313
    %p317 = scmp.eq.s32.totalorder %s20, 0
    %p318 = por %p316, %p317
    %p319 = scmp.ne.s32.totalorder %s311, %s313
    %p320 = scmp.eq.s32.totalorder %s25, 1
    %p321 = por %p319, %p320
    %p322 = scmp.ne.s32.totalorder %s313, %s314
    %p323 = scmp.eq.s32.totalorder %s25, 0
    %p324 = por %p322, %p323
    %p325 = scmp.ne.s32.totalorder %s313, %s314
    %p326 = scmp.eq.s32.totalorder %s26, 1
    %p327 = por %p325, %p326
    %p329 = scmp.ne.s32.totalorder %s314, %s328
    %p330 = scmp.eq.s32.totalorder %s26, 0
    %p331 = por %p329, %p330
    %s332 = ssub.s32 %s20, %s27
    %p333 = scmp.eq.s32.totalorder %s332, 0
    %s335 = sadd.s32 %s334, 1
    %s336 = scalar_select %p333, %s334, %s335
    %p339 = pneg %p333
    %p340 = scmp.eq.s32.totalorder %s20, 1
    %p341 = por %p339, %p340
    %p342 = scmp.ne.s32.totalorder %s334, %s337
    %p343 = scmp.eq.s32.totalorder %s20, 0
    %p344 = por %p342, %p343
    %p345 = scmp.ne.s32.totalorder %s334, %s337
    %p346 = scmp.eq.s32.totalorder %s25, 1
    %p347 = por %p345, %p346
    %p348 = scmp.ne.s32.totalorder %s337, %s338
    %p349 = scmp.eq.s32.totalorder %s25, 0
    %p350 = por %p348, %p349
    %p351 = scmp.ne.s32.totalorder %s337, %s338
    %p352 = scmp.eq.s32.totalorder %s26, 1
    %p353 = por %p351, %p352
    %p355 = scmp.ne.s32.totalorder %s338, %s354
    %p356 = scmp.eq.s32.totalorder %s26, 0
    %p357 = por %p355, %p356
    %p358 = scmp.le.s32.totalorder 1, %s20
    %p359 = scmp.lt.s32.totalorder %s20, 3
    %p360 = pnand %p358, %p359
    %p361 = pneg %p360
    // Predicated region
    $region9: #{easyrec_forward.5} parent=5 // pred_check
      _
    $region10: #{easyrec_forward.5} parent=5 // pred_check_branch
      %363 = sbr.rel (%p360) target = $region12
    $region11: #{easyrec_forward.5} parent=5 // pred_region
      %s364 = ssub.s32 %s20, 1
      // Predicated region
      $region13: #{easyrec_forward.5} parent=11 // pred_check
        %p365 = pneg %p93
      $region14: #{easyrec_forward.5} parent=11 // pred_check_branch
        %367 = sbr.rel (%p365) target = $region16
      $region15: #{easyrec_forward.5} parent=11 // pred_region
        _
      $region16: #{easyrec_forward.5} parent=11 // pred_fallthru
        _
      // Predicated region
      $region17: #{easyrec_forward.5} parent=11 // pred_check
        %p368 = pneg %p114
      $region18: #{easyrec_forward.5} parent=11 // pred_check_branch
        %370 = sbr.rel (%p368) target = $region20
      $region19: #{easyrec_forward.5} parent=11 // pred_region
        _
      $region20: #{easyrec_forward.5} parent=11 // pred_fallthru
        _
      // Predicated region
      $region21: #{easyrec_forward.5} parent=11 // pred_check
        %p371 = pneg %p135
      $region22: #{easyrec_forward.5} parent=11 // pred_check_branch
        %373 = sbr.rel (%p371) target = $region24
      $region23: #{easyrec_forward.5} parent=11 // pred_region
        _
      $region24: #{easyrec_forward.5} parent=11 // pred_fallthru
        _
      // Predicated region
      $region25: #{easyrec_forward.5} parent=11 // pred_check
        %p374 = pneg %p156
      $region26: #{easyrec_forward.5} parent=11 // pred_check_branch
        %376 = sbr.rel (%p374) target = $region28
      $region27: #{easyrec_forward.5} parent=11 // pred_region
        _
      $region28: #{easyrec_forward.5} parent=11 // pred_fallthru
        _
      // Predicated region
      $region29: #{easyrec_forward.5} parent=11 // pred_check
        %p377 = pneg %p177
      $region30: #{easyrec_forward.5} parent=11 // pred_check_branch
        %379 = sbr.rel (%p377) target = $region32
      $region31: #{easyrec_forward.5} parent=11 // pred_region
        _
      $region32: #{easyrec_forward.5} parent=11 // pred_fallthru
        _
      // Predicated region
      $region33: #{easyrec_forward.5} parent=11 // pred_check
        %p380 = pneg %p198
      $region34: #{easyrec_forward.5} parent=11 // pred_check_branch
        %382 = sbr.rel (%p380) target = $region36
      $region35: #{easyrec_forward.5} parent=11 // pred_region
        _
      $region36: #{easyrec_forward.5} parent=11 // pred_fallthru
        _
      // Predicated region
      $region37: #{easyrec_forward.5} parent=11 // pred_check
        %p383 = pneg %p219
      $region38: #{easyrec_forward.5} parent=11 // pred_check_branch
        %385 = sbr.rel (%p383) target = $region40
      $region39: #{easyrec_forward.5} parent=11 // pred_region
        _
      $region40: #{easyrec_forward.5} parent=11 // pred_fallthru
        _
      // Predicated region
      $region41: #{easyrec_forward.5} parent=11 // pred_check
        %p386 = pneg %p240
      $region42: #{easyrec_forward.5} parent=11 // pred_check_branch
        %388 = sbr.rel (%p386) target = $region44
      $region43: #{easyrec_forward.5} parent=11 // pred_region
        _
      $region44: #{easyrec_forward.5} parent=11 // pred_fallthru
        _
      // Predicated region
      $region45: #{easyrec_forward.5} parent=11 // pred_check
        %p389 = pneg %p261
      $region46: #{easyrec_forward.5} parent=11 // pred_check_branch
        %391 = sbr.rel (%p389) target = $region48
      $region47: #{easyrec_forward.5} parent=11 // pred_region
        _
      $region48: #{easyrec_forward.5} parent=11 // pred_fallthru
        _
      // Predicated region
      $region49: #{easyrec_forward.5} parent=11 // pred_check
        %p392 = pneg %p282
      $region50: #{easyrec_forward.5} parent=11 // pred_check_branch
        %394 = sbr.rel (%p392) target = $region52
      $region51: #{easyrec_forward.5} parent=11 // pred_region
        _
      $region52: #{easyrec_forward.5} parent=11 // pred_fallthru
        _
      // Predicated region
      $region53: #{easyrec_forward.5} parent=11 // pred_check
        %p395 = pneg %p303
      $region54: #{easyrec_forward.5} parent=11 // pred_check_branch
        %397 = sbr.rel (%p395) target = $region56
      $region55: #{easyrec_forward.5} parent=11 // pred_region
        _
      $region56: #{easyrec_forward.5} parent=11 // pred_fallthru
        _
      // Predicated region
      $region57: #{easyrec_forward.5} parent=11 // pred_check
        %p398 = pneg %p324
      $region58: #{easyrec_forward.5} parent=11 // pred_check_branch
        %400 = sbr.rel (%p398) target = $region60
      $region59: #{easyrec_forward.5} parent=11 // pred_region
        _
      $region60: #{easyrec_forward.5} parent=11 // pred_fallthru
        _
    $region12: #{easyrec_forward.5} parent=5 // pred_fallthru
      _
    %p401 = scmp.lt.s32.totalorder %s20, 2
    // Predicated region
    $region61: #{easyrec_forward.5} parent=5 // pred_check
      %p402 = pneg %p401
    $region62: #{easyrec_forward.5} parent=5 // pred_check_branch
      %404 = sbr.rel (%p402) target = $region64
    $region63: #{easyrec_forward.5} parent=5 // pred_region
      // Predicated region
      $region65: #{easyrec_forward.5} parent=63 // pred_check
        %p405 = pneg %p40
      $region66: #{easyrec_forward.5} parent=63 // pred_check_branch
        %407 = sbr.rel (%p405) target = $region68
      $region67: #{easyrec_forward.5} parent=63 // pred_region
        %p408 = scmp.lt.s32.totalorder %s20, 1
        %s409 = scalar_select %p408, %s20, 1
        %s410 = smul.addr %s409, 16
        %s411 = smul.addr %s410, 4
        %s412 = scalar_lea.vmem %s0, %s411
      $region68: #{easyrec_forward.5} parent=63 // pred_fallthru
        _
      // Predicated region
      $region69: #{easyrec_forward.5} parent=63 // pred_check
        %p413 = pneg %p66
      $region70: #{easyrec_forward.5} parent=63 // pred_check_branch
        %415 = sbr.rel (%p413) target = $region72
      $region71: #{easyrec_forward.5} parent=63 // pred_region
        %p416 = scmp.lt.s32.totalorder %s20, 1
        %s417 = scalar_select %p416, %s20, 1
        %s418 = scalar_lea.vmem %s1, %s417
      $region72: #{easyrec_forward.5} parent=63 // pred_fallthru
        _
    $region64: #{easyrec_forward.5} parent=5 // pred_fallthru
      _
    %p419 = scmp.le.s32.totalorder 1, %s20
    %p420 = scmp.lt.s32.totalorder %s20, 3
    %p421 = pnand %p419, %p420
    %p422 = pneg %p421
    // Predicated region
    $region73: #{easyrec_forward.5} parent=5 // pred_check
      _
    $region74: #{easyrec_forward.5} parent=5 // pred_check_branch
      %424 = sbr.rel (%p421) target = $region76
    $region75: #{easyrec_forward.5} parent=5 // pred_region
      %s425 = ssub.s32 %s20, 1
      %p426 = scmp.lt.s32.totalorder %s25, 1
      %s427 = scalar_select %p426, %s25, 1
      %s428 = smul.addr %s427, 16
      %s429 = smul.addr %s428, 4
      %s430 = scalar_lea.vmem %s0, %s429
      %p431 = pneg %p46
      %p432 = pneg %p43
      %p433 = scmp.lt.s32.totalorder %s25, 1
      %s434 = scalar_select %p433, %s25, 1
      %s435 = scalar_lea.vmem %s1, %s434
      %p436 = pneg %p72
      %p437 = pneg %p69
      %p438 = pneg %p93
      %p439 = pneg %p90
      %p440 = pneg %p114
      %p441 = pneg %p111
      %p442 = pneg %p135
      %p443 = pneg %p132
      %p444 = pneg %p156
      %p445 = pneg %p153
      %p446 = pneg %p177
      %p447 = pneg %p174
      %p448 = pneg %p198
      %p449 = pneg %p195
      %p450 = pneg %p219
      %p451 = pneg %p216
      %p452 = pneg %p240
      %p453 = pneg %p237
      %p454 = pneg %p261
      %p455 = pneg %p258
      %p456 = pneg %p282
      %p457 = pneg %p279
      %p458 = pneg %p303
      %p459 = pneg %p300
      %p460 = pneg %p324
      %p461 = pneg %p321
      %p462 = pneg %p350
      %p463 = pneg %p347
      %p464 = scmp.lt.s32.totalorder %s25, 1
      %s465 = scalar_select %p464, %s25, 1
      %s466 = smul.addr %s465, 16
      %s467 = smul.addr %s466, 4
      %s468 = scalar_lea.vmem %s14, %s467
      %p469 = scmp.lt.s32.totalorder %s25, 1
      %s470 = scalar_select %p469, %s25, 1
      %s471 = smul.addr %s470, 16
      %s472 = smul.addr %s471, 4
      %s473 = scalar_lea.vmem %s0, %s472
      %p474 = scmp.lt.s32.totalorder %s25, 1
      %s475 = scalar_select %p474, %s25, 1
      %s476 = scalar_lea.vmem %s1, %s475
      %p477 = scmp.lt.s32.totalorder %s25, 1
      %s478 = scalar_select %p477, %s25, 1
      %s479 = smul.addr %s478, 16
      %s480 = smul.addr %s479, 4
      %s481 = scalar_lea.vmem %s14, %s480
      %v483 = vld [vmem:[%s473] sm:$0xf]
      %v484 = vld [vmem:[%s473 + $0x4] sm:$0xf]
      %v485 = vld [vmem:[%s473 + $0x8] sm:$0xf]
      %v486 = vld [vmem:[%s473 + $0xc] sm:$0xf]
      %v487 = vld [vmem:[%s473 + $0x10] sm:$0xf]
      %v488 = vld [vmem:[%s473 + $0x14] sm:$0xf]
      %v489 = vld [vmem:[%s473 + $0x18] sm:$0xf]
      %v490 = vld [vmem:[%s473 + $0x1c] sm:$0xf]
      %v491 = vld [vmem:[%s473 + $0x20] sm:$0xf]
      %v492 = vld [vmem:[%s473 + $0x24] sm:$0xf]
      %v493 = vld [vmem:[%s473 + $0x28] sm:$0xf]
      %v494 = vld [vmem:[%s473 + $0x2c] sm:$0xf]
      %v495 = vld [vmem:[%s473 + $0x30] sm:$0xf]
      %v496 = vld [vmem:[%s473 + $0x34] sm:$0xf]
      %v497 = vld [vmem:[%s473 + $0x38] sm:$0xf]
      %v498 = vld [vmem:[%s473 + $0x3c] sm:$0xf]
      %v499 = vld [vmem:[%s2] sm:$0xff]
      %v500 = vld [vmem:[%s2 + $0x8] sm:$0xf]
      %v501 = vld [vmem:[%s2 + $0xc] sm:$0xff]
      %v502 = vld [vmem:[%s2 + $0x14] sm:$0xf]
      %v503 = vld [vmem:[%s2 + $0x18] sm:$0xff]
      %v504 = vld [vmem:[%s2 + $0x20] sm:$0xf]
      %v505 = vld [vmem:[%s2 + $0x24] sm:$0xff]
      %v506 = vld [vmem:[%s2 + $0x2c] sm:$0xf]
      %v507 = vld [vmem:[%s2 + $0x30] sm:$0xff]
      %v508 = vld [vmem:[%s2 + $0x38] sm:$0xf]
      %v509 = vld [vmem:[%s2 + $0x3c] sm:$0xff]
      %v510 = vld [vmem:[%s2 + $0x44] sm:$0xf]
      %v511 = vld [vmem:[%s2 + $0x48] sm:$0xff]
      %v512 = vld [vmem:[%s2 + $0x50] sm:$0xf]
      %v513 = vld [vmem:[%s2 + $0x54] sm:$0xff]
      %v514 = vld [vmem:[%s2 + $0x5c] sm:$0xf]
      %v515 = vld [vmem:[%s2 + $0x60] sm:$0xff]
      %v516 = vld [vmem:[%s2 + $0x68] sm:$0xf]
      %v517 = vld [vmem:[%s2 + $0x6c] sm:$0xff]
      %v518 = vld [vmem:[%s2 + $0x74] sm:$0xf]
      %v519 = vld [vmem:[%s2 + $0x78] sm:$0xff]
      %v520 = vld [vmem:[%s2 + $0x80] sm:$0xf]
      %v521 = vld [vmem:[%s2 + $0x84] sm:$0xff]
      %v522 = vld [vmem:[%s2 + $0x8c] sm:$0xf]
      %v523 = vld [vmem:[%s2 + $0x90] sm:$0xff]
      %v524 = vld [vmem:[%s2 + $0x98] sm:$0xf]
      %v525 = vld [vmem:[%s2 + $0x9c] sm:$0xff]
      %v526 = vld [vmem:[%s2 + $0xa4] sm:$0xf]
      %v527 = vld [vmem:[%s2 + $0xa8] sm:$0xff]
      %v528 = vld [vmem:[%s2 + $0xb0] sm:$0xf]
      %v529 = vld [vmem:[%s2 + $0xb4] sm:$0xff]
      %v530 = vld [vmem:[%s2 + $0xbc] sm:$0xf]
      %v531 = vld [vmem:[%s3] sm:$0x7]
      %v533 = vlaneseq
      %v534 = vshrl.u32 %v533, 7
      %v535 = vsub.s32 0, %v534
      %v536 = vrot.slane %v531, %v535
      %v537 = vlaneseq
      %v538 = vshrl.u32 %v537, 7
      %v539 = vsub.s32 1, %v538
      %v540 = vrot.slane %v531, %v539
      %v541 = vlaneseq
      %v542 = vshrl.u32 %v541, 7
      %v543 = vsub.s32 2, %v542
      %v544 = vrot.slane %v531, %v543
      %v564 = vunpack.c.l.b16 %v483
      %v565 = vunpack.c.l.b16 %v484
      %v566 = vunpack.c.l.b16 %v485
      %v567 = vunpack.c.l.b16 %v486
      %v568 = vunpack.c.l.b16 %v487
      %v569 = vunpack.c.l.b16 %v488
      %v570 = vunpack.c.l.b16 %v489
      %v571 = vunpack.c.l.b16 %v490
      %v572 = vunpack.c.l.b16 %v491
      %v573 = vunpack.c.l.b16 %v492
      %v574 = vunpack.c.l.b16 %v493
      %v575 = vunpack.c.l.b16 %v494
      %v576 = vunpack.c.l.b16 %v495
      %v577 = vunpack.c.l.b16 %v496
      %v578 = vunpack.c.l.b16 %v497
      %v579 = vunpack.c.l.b16 %v498
      %v580 = vpack.c.b16 %v565, %v564
      %v581 = vpack.c.b16 %v567, %v566
      %v582 = vpack.c.b16 %v569, %v568
      %v583 = vpack.c.b16 %v571, %v570
      %v584 = vpack.c.b16 %v573, %v572
      %v585 = vpack.c.b16 %v575, %v574
      %v586 = vpack.c.b16 %v577, %v576
      %v587 = vpack.c.b16 %v579, %v578
      %v628 = vunpack.c.l.b16 %v499
      %v629 = vunpack.c.h.b16 %v499
      %v630 = vunpack.c.l.b16 %v500
      %v631 = vunpack.c.l.b16 %v501
      %v632 = vunpack.c.h.b16 %v501
      %v633 = vunpack.c.l.b16 %v502
      %v634 = vunpack.c.l.b16 %v503
      %v635 = vunpack.c.h.b16 %v503
      %v636 = vunpack.c.l.b16 %v504
      %v637 = vunpack.c.l.b16 %v505
      %v638 = vunpack.c.h.b16 %v505
      %v639 = vunpack.c.l.b16 %v506
      %v640 = vunpack.c.l.b16 %v507
      %v641 = vunpack.c.h.b16 %v507
      %v642 = vunpack.c.l.b16 %v508
      %v643 = vunpack.c.l.b16 %v509
      %v644 = vunpack.c.h.b16 %v509
      %v645 = vunpack.c.l.b16 %v510
      %v646 = vunpack.c.l.b16 %v511
      %v647 = vunpack.c.h.b16 %v511
      %v648 = vunpack.c.l.b16 %v512
      %v649 = vunpack.c.l.b16 %v513
      %v650 = vunpack.c.h.b16 %v513
      %v651 = vunpack.c.l.b16 %v514
      %v652 = vunpack.c.l.b16 %v515
      %v653 = vunpack.c.h.b16 %v515
      %v654 = vunpack.c.l.b16 %v516
      %v655 = vunpack.c.l.b16 %v517
      %v656 = vunpack.c.h.b16 %v517
      %v657 = vunpack.c.l.b16 %v518
      %v658 = vunpack.c.l.b16 %v519
      %v659 = vunpack.c.h.b16 %v519
      %v660 = vunpack.c.l.b16 %v520
      %v661 = vunpack.c.l.b16 %v521
      %v662 = vunpack.c.h.b16 %v521
      %v663 = vunpack.c.l.b16 %v522
      %v664 = vunpack.c.l.b16 %v523
      %v665 = vunpack.c.h.b16 %v523
      %v666 = vunpack.c.l.b16 %v524
      %v667 = vunpack.c.l.b16 %v525
      %v668 = vunpack.c.h.b16 %v525
      %v669 = vunpack.c.l.b16 %v526
      %v670 = vunpack.c.l.b16 %v527
      %v671 = vunpack.c.h.b16 %v527
      %v672 = vunpack.c.l.b16 %v528
      %v673 = vunpack.c.l.b16 %v529
      %v674 = vunpack.c.h.b16 %v529
      %v675 = vunpack.c.l.b16 %v530
      %v676 = vpack.c.b16 %v631, %v628
      %v677 = vpack.c.b16 %v632, %v629
      %v678 = vpack.c.b16 %v633, %v630
      %v679 = vpack.c.b16 %v637, %v634
      %v680 = vpack.c.b16 %v638, %v635
      %v681 = vpack.c.b16 %v639, %v636
      %v682 = vpack.c.b16 %v643, %v640
      %v683 = vpack.c.b16 %v644, %v641
      %v684 = vpack.c.b16 %v645, %v642
      %v685 = vpack.c.b16 %v649, %v646
      %v686 = vpack.c.b16 %v650, %v647
      %v687 = vpack.c.b16 %v651, %v648
      %v688 = vpack.c.b16 %v655, %v652
      %v689 = vpack.c.b16 %v656, %v653
      %v690 = vpack.c.b16 %v657, %v654
      %v691 = vpack.c.b16 %v661, %v658
      %v692 = vpack.c.b16 %v662, %v659
      %v693 = vpack.c.b16 %v663, %v660
      %v694 = vpack.c.b16 %v667, %v664
      %v695 = vpack.c.b16 %v668, %v665
      %v696 = vpack.c.b16 %v669, %v666
      %v697 = vpack.c.b16 %v673, %v670
      %v698 = vpack.c.b16 %v674, %v671
      %v699 = vpack.c.b16 %v675, %v672
      %724 = vmatprep.subr.bf16.mxu0 %v677
      %725 = vmatpush1.bf16.msra.mxu0 %v676
      %726 = vmatprep.subr.bf16.mxu0 %v680
      %727 = vmatpush1.bf16.msra.mxu0 %v679
      %728 = vmatprep.subr.bf16.mxu0 %v683
      %729 = vmatpush1.bf16.msra.mxu0 %v682
      %730 = vmatprep.subr.bf16.mxu0 %v686
      %731 = vmatpush1.bf16.msra.mxu0 %v685
      %732 = vmatprep.subr.bf16.mxu0 %v689
      %733 = vmatpush1.bf16.msra.mxu0 %v688
      %734 = vmatprep.subr.bf16.mxu0 %v692
      %735 = vmatpush1.bf16.msra.mxu0 %v691
      %736 = vmatprep.subr.bf16.mxu0 %v695
      %737 = vmatpush1.bf16.msra.mxu0 %v694
      %738 = vmatprep.subr.bf16.mxu0 %v698
      %739 = vmatpush1.bf16.msra.mxu0 %v697
      %740 = vmatprep.subr.bf16.mxu0 0
      %741 = vmatpush1.bf16.msra.mxu0 0
      %742 = vmatprep.subr.bf16.mxu0 0
      %743 = vmatpush1.bf16.msra.mxu0 0
      %744 = vmatprep.subr.bf16.mxu0 0
      %745 = vmatpush1.bf16.msra.mxu0 0
      %746 = vmatprep.subr.bf16.mxu0 0
      %747 = vmatpush1.bf16.msra.mxu0 0
      %748 = vmatprep.subr.bf16.mxu0 0
      %749 = vmatpush1.bf16.msra.mxu0 0
      %750 = vmatprep.subr.bf16.mxu0 0
      %751 = vmatpush1.bf16.msra.mxu0 0
      %752 = vmatprep.subr.bf16.mxu0 0
      %753 = vmatpush1.bf16.msra.mxu0 0
      %754 = vmatprep.subr.bf16.mxu0 0
      %755 = vmatpush1.bf16.msra.mxu0 0
      %756 = vmatprep.mubr.bf16.mxu0 0
      %757 = vmatmul.mubr.bf16.gmra.mrb[0].mxu0 %v580
      %v758 = vpop.f32.mrb[0].mxu0
      %v759 = vadd.f32 %v536, %v758
      %v760 = vpop.f32.mrb[0].mxu0
      %v761 = vadd.f32 %v540, %v760
      %v762 = vpop.f32.mrb[0].mxu0
      %v763 = vadd.f32 %v536, %v762
      %v764 = vpop.f32.mrb[0].mxu0
      %v765 = vadd.f32 %v540, %v764
      %766 = vmatprep.mubr.bf16.mxu0 0
      %767 = vmatmul.mubr.bf16.gmra.mrb[0].mxu0 %v581
      %v768 = vpop.f32.mrb[0].mxu0
      %v769 = vadd.f32 %v536, %v768
      %v770 = vpop.f32.mrb[0].mxu0
      %v771 = vadd.f32 %v540, %v770
      %v772 = vpop.f32.mrb[0].mxu0
      %v773 = vadd.f32 %v536, %v772
      %v774 = vpop.f32.mrb[0].mxu0
      %v775 = vadd.f32 %v540, %v774
      %776 = vmatprep.mubr.bf16.mxu0 0
      %777 = vmatmul.mubr.bf16.gmra.mrb[0].mxu0 %v582
      %v778 = vpop.f32.mrb[0].mxu0
      %v779 = vadd.f32 %v536, %v778
      %v780 = vpop.f32.mrb[0].mxu0
      %v781 = vadd.f32 %v540, %v780
      %v782 = vpop.f32.mrb[0].mxu0
      %v783 = vadd.f32 %v536, %v782
      %v784 = vpop.f32.mrb[0].mxu0
      %v785 = vadd.f32 %v540, %v784
      %786 = vmatprep.mubr.bf16.mxu0 0
      %787 = vmatmul.mubr.bf16.gmra.mrb[0].mxu0 %v583
      %v788 = vpop.f32.mrb[0].mxu0
      %v789 = vadd.f32 %v536, %v788
      %v790 = vpop.f32.mrb[0].mxu0
      %v791 = vadd.f32 %v540, %v790
      %v792 = vpop.f32.mrb[0].mxu0
      %v793 = vadd.f32 %v536, %v792
      %v794 = vpop.f32.mrb[0].mxu0
      %v795 = vadd.f32 %v540, %v794
      %796 = vmatprep.mubr.bf16.mxu0 0
      %797 = vmatmul.mubr.bf16.gmra.mrb[0].mxu0 %v584
      %v798 = vpop.f32.mrb[0].mxu0
      %v799 = vadd.f32 %v536, %v798
      %v800 = vpop.f32.mrb[0].mxu0
      %v801 = vadd.f32 %v540, %v800
      %v802 = vpop.f32.mrb[0].mxu0
      %v803 = vadd.f32 %v536, %v802
      %v804 = vpop.f32.mrb[0].mxu0
      %v805 = vadd.f32 %v540, %v804
      %806 = vmatprep.mubr.bf16.mxu0 0
      %807 = vmatmul.mubr.bf16.gmra.mrb[0].mxu0 %v585
      %v808 = vpop.f32.mrb[0].mxu0
      %v809 = vadd.f32 %v536, %v808
      %v810 = vpop.f32.mrb[0].mxu0
      %v811 = vadd.f32 %v540, %v810
      %v812 = vpop.f32.mrb[0].mxu0
      %v813 = vadd.f32 %v536, %v812
      %v814 = vpop.f32.mrb[0].mxu0
      %v815 = vadd.f32 %v540, %v814
      %816 = vmatprep.mubr.bf16.mxu0 0
      %817 = vmatmul.mubr.bf16.gmra.mrb[0].mxu0 %v586
      %v818 = vpop.f32.mrb[0].mxu0
      %v819 = vadd.f32 %v536, %v818
      %v820 = vpop.f32.mrb[0].mxu0
      %v821 = vadd.f32 %v540, %v820
      %v822 = vpop.f32.mrb[0].mxu0
      %v823 = vadd.f32 %v536, %v822
      %v824 = vpop.f32.mrb[0].mxu0
      %v825 = vadd.f32 %v540, %v824
      %826 = vmatprep.mubr.bf16.mxu0 0
      %827 = vmatmul.mubr.bf16.gmra.mrb[0].mxu0 %v587
      %v828 = vpop.f32.mrb[0].mxu0
      %v829 = vadd.f32 %v536, %v828
      %v830 = vpop.f32.mrb[0].mxu0
      %v831 = vadd.f32 %v540, %v830
      %v832 = vpop.f32.mrb[0].mxu0
      %v833 = vadd.f32 %v536, %v832
      %v834 = vpop.f32.mrb[0].mxu0
      %v835 = vadd.f32 %v540, %v834
      %836 = vdwg.mxu0
      %837 = vmatprep.subr.bf16.mxu0 0
      %838 = vmatpush1.bf16.msra.mxu0 %v678
      %839 = vmatprep.subr.bf16.mxu0 0
      %840 = vmatpush1.bf16.msra.mxu0 %v681
      %841 = vmatprep.subr.bf16.mxu0 0
      %842 = vmatpush1.bf16.msra.mxu0 %v684
      %843 = vmatprep.subr.bf16.mxu0 0
      %844 = vmatpush1.bf16.msra.mxu0 %v687
      %845 = vmatprep.subr.bf16.mxu0 0
      %846 = vmatpush1.bf16.msra.mxu0 %v690
      %847 = vmatprep.subr.bf16.mxu0 0
      %848 = vmatpush1.bf16.msra.mxu0 %v693
      %849 = vmatprep.subr.bf16.mxu0 0
      %850 = vmatpush1.bf16.msra.mxu0 %v696
      %851 = vmatprep.subr.bf16.mxu0 0
      %852 = vmatpush1.bf16.msra.mxu0 %v699
      %853 = vmatprep.subr.bf16.mxu0 0
      %854 = vmatpush1.bf16.msra.mxu0 0
      %855 = vmatprep.subr.bf16.mxu0 0
      %856 = vmatpush1.bf16.msra.mxu0 0
      %857 = vmatprep.subr.bf16.mxu0 0
      %858 = vmatpush1.bf16.msra.mxu0 0
      %859 = vmatprep.subr.bf16.mxu0 0
      %860 = vmatpush1.bf16.msra.mxu0 0
      %861 = vmatprep.subr.bf16.mxu0 0
      %862 = vmatpush1.bf16.msra.mxu0 0
      %863 = vmatprep.subr.bf16.mxu0 0
      %864 = vmatpush1.bf16.msra.mxu0 0
      %865 = vmatprep.subr.bf16.mxu0 0
      %866 = vmatpush1.bf16.msra.mxu0 0
      %867 = vmatprep.subr.bf16.mxu0 0
      %868 = vmatpush1.bf16.msra.mxu0 0
      %869 = vmatprep.mubr.bf16.mxu0 0
      %870 = vmatmul.mubr.bf16.gmra.mrb[0].mxu0 %v580
      %v871 = vpop.f32.mrb[0].mxu0
      %v872 = vadd.f32 %v544, %v871
      %v873 = vpop.f32.mrb[0].mxu0
      %v874 = vpop.f32.mrb[0].mxu0
      %v875 = vadd.f32 %v544, %v874
      %v876 = vpop.f32.mrb[0].mxu0
      %877 = vmatprep.mubr.bf16.mxu0 0
      %878 = vmatmul.mubr.bf16.gmra.mrb[0].mxu0 %v581
      %v879 = vpop.f32.mrb[0].mxu0
      %v880 = vadd.f32 %v544, %v879
      %v881 = vpop.f32.mrb[0].mxu0
      %v882 = vpop.f32.mrb[0].mxu0
      %v883 = vadd.f32 %v544, %v882
      %v884 = vpop.f32.mrb[0].mxu0
      %885 = vmatprep.mubr.bf16.mxu0 0
      %886 = vmatmul.mubr.bf16.gmra.mrb[0].mxu0 %v582
      %v887 = vpop.f32.mrb[0].mxu0
      %v888 = vadd.f32 %v544, %v887
      %v889 = vpop.f32.mrb[0].mxu0
      %v890 = vpop.f32.mrb[0].mxu0
      %v891 = vadd.f32 %v544, %v890
      %v892 = vpop.f32.mrb[0].mxu0
      %893 = vmatprep.mubr.bf16.mxu0 0
      %894 = vmatmul.mubr.bf16.gmra.mrb[0].mxu0 %v583
      %v895 = vpop.f32.mrb[0].mxu0
      %v896 = vadd.f32 %v544, %v895
      %v897 = vpop.f32.mrb[0].mxu0
      %v898 = vpop.f32.mrb[0].mxu0
      %v899 = vadd.f32 %v544, %v898
      %v900 = vpop.f32.mrb[0].mxu0
      %901 = vmatprep.mubr.bf16.mxu0 0
      %902 = vmatmul.mubr.bf16.gmra.mrb[0].mxu0 %v584
      %v903 = vpop.f32.mrb[0].mxu0
      %v904 = vadd.f32 %v544, %v903
      %v905 = vpop.f32.mrb[0].mxu0
      %v906 = vpop.f32.mrb[0].mxu0
      %v907 = vadd.f32 %v544, %v906
      %v908 = vpop.f32.mrb[0].mxu0
      %909 = vmatprep.mubr.bf16.mxu0 0
      %910 = vmatmul.mubr.bf16.gmra.mrb[0].mxu0 %v585
      %v911 = vpop.f32.mrb[0].mxu0
      %v912 = vadd.f32 %v544, %v911
      %v913 = vpop.f32.mrb[0].mxu0
      %v914 = vpop.f32.mrb[0].mxu0
      %v915 = vadd.f32 %v544, %v914
      %v916 = vpop.f32.mrb[0].mxu0
      %917 = vmatprep.mubr.bf16.mxu0 0
      %918 = vmatmul.mubr.bf16.gmra.mrb[0].mxu0 %v586
      %v919 = vpop.f32.mrb[0].mxu0
      %v920 = vadd.f32 %v544, %v919
      %v921 = vpop.f32.mrb[0].mxu0
      %v922 = vpop.f32.mrb[0].mxu0
      %v923 = vadd.f32 %v544, %v922
      %v924 = vpop.f32.mrb[0].mxu0
      %925 = vmatprep.mubr.bf16.mxu0 0
      %926 = vmatmul.mubr.bf16.gmra.mrb[0].mxu0 %v587
      %v927 = vpop.f32.mrb[0].mxu0
      %v928 = vadd.f32 %v544, %v927
      %v929 = vpop.f32.mrb[0].mxu0
      %v930 = vpop.f32.mrb[0].mxu0
      %v931 = vadd.f32 %v544, %v930
      %v932 = vpop.f32.mrb[0].mxu0
      %933 = vdwg.mxu0
      %v934 = vpack.c.bf16 %v763, %v759
      %v935 = vpack.c.bf16 %v765, %v761
      %v936 = vpack.c.bf16 %v875, %v872
      %v937 = vpack.c.bf16 %v773, %v769
      %v938 = vpack.c.bf16 %v775, %v771
      %v939 = vpack.c.bf16 %v883, %v880
      %v940 = vpack.c.bf16 %v783, %v779
      %v941 = vpack.c.bf16 %v785, %v781
      %v942 = vpack.c.bf16 %v891, %v888
      %v943 = vpack.c.bf16 %v793, %v789
      %v944 = vpack.c.bf16 %v795, %v791
      %v945 = vpack.c.bf16 %v899, %v896
      %v946 = vpack.c.bf16 %v803, %v799
      %v947 = vpack.c.bf16 %v805, %v801
      %v948 = vpack.c.bf16 %v907, %v904
      %v949 = vpack.c.bf16 %v813, %v809
      %v950 = vpack.c.bf16 %v815, %v811
      %v951 = vpack.c.bf16 %v915, %v912
      %v952 = vpack.c.bf16 %v823, %v819
      %v953 = vpack.c.bf16 %v825, %v821
      %v954 = vpack.c.bf16 %v923, %v920
      %v955 = vpack.c.bf16 %v833, %v829
      %v956 = vpack.c.bf16 %v835, %v831
      %v957 = vpack.c.bf16 %v931, %v928
      %v958 = vld [vmem:[%s476] sm:$0x1]
      %v959 = vsub.f32 1.0, %v958
      %v960 = vmul.f32 %v959, -1e+09
      %vm961 = vcmask 523264
      %v963 = vsel %vm961, %v934, 0
      %v966 = vsel %vm961, %v937, 0
      %v969 = vsel %vm961, %v940, 0
      %v972 = vsel %vm961, %v943, 0
      %v975 = vsel %vm961, %v946, 0
      %v978 = vsel %vm961, %v949, 0
      %v981 = vsel %vm961, %v952, 0
      %v984 = vsel %vm961, %v955, 0
      %v987 = vsel %vm961, %v935, 0
      %v990 = vsel %vm961, %v938, 0
      %v993 = vsel %vm961, %v941, 0
      %v996 = vsel %vm961, %v944, 0
      %v999 = vsel %vm961, %v947, 0
      %v1002 = vsel %vm961, %v950, 0
      %v1005 = vsel %vm961, %v953, 0
      %v1008 = vsel %vm961, %v956, 0
      %1010 = vmatprep.subr.bf16.mxu0 0
      %1011 = vmatpush1.bf16.xpose.msra.mxu0 %v987
      %1012 = vmatprep.subr.bf16.mxu0 0
      %1013 = vmatpush1.bf16.xpose.msra.mxu0 %v990
      %1014 = vmatprep.subr.bf16.mxu0 0
      %1015 = vmatpush1.bf16.xpose.msra.mxu0 %v993
      %1016 = vmatprep.subr.bf16.mxu0 0
      %1017 = vmatpush1.bf16.xpose.msra.mxu0 %v996
      %1018 = vmatprep.subr.bf16.mxu0 0
      %1019 = vmatpush1.bf16.xpose.msra.mxu0 %v999
      %1020 = vmatprep.subr.bf16.mxu0 0
      %1021 = vmatpush1.bf16.xpose.msra.mxu0 %v1002
      %1022 = vmatprep.subr.bf16.mxu0 0
      %1023 = vmatpush1.bf16.xpose.msra.mxu0 %v1005
      %1024 = vmatprep.subr.bf16.mxu0 0
      %1025 = vmatpush1.bf16.xpose.msra.mxu0 %v1008
      %1026 = vmatprep.subr.bf16.mxu0 0
      %1027 = vmatpush1.bf16.xpose.msra.mxu0 0
      %1028 = vmatprep.subr.bf16.mxu0 0
      %1029 = vmatpush1.bf16.xpose.msra.mxu0 0
      %1030 = vmatprep.subr.bf16.mxu0 0
      %1031 = vmatpush1.bf16.xpose.msra.mxu0 0
      %1032 = vmatprep.subr.bf16.mxu0 0
      %1033 = vmatpush1.bf16.xpose.msra.mxu0 0
      %1034 = vmatprep.subr.bf16.mxu0 0
      %1035 = vmatpush1.bf16.xpose.msra.mxu0 0
      %1036 = vmatprep.subr.bf16.mxu0 0
      %1037 = vmatpush1.bf16.xpose.msra.mxu0 0
      %1038 = vmatprep.subr.bf16.mxu0 0
      %1039 = vmatpush1.bf16.xpose.msra.mxu0 0
      %1040 = vmatprep.subr.bf16.mxu0 0
      %1041 = vmatpush1.bf16.xpose.msra.mxu0 0
      %1042 = vmatprep.mubr.bf16.mxu0 0
      %1043 = vmatmul.mubr.bf16.gmra.mrb[0].mxu0 %v963
      %v1044 = vpop.f32.mrb[0].mxu0
      %v1045 = vadd.f32 0.0, %v1044
      %v1046 = vpop.f32.mrb[0].mxu0
      %v1047 = vpop.f32.mrb[0].mxu0
      %v1048 = vadd.f32 0.0, %v1047
      %v1049 = vpop.f32.mrb[0].mxu0
      %1050 = vmatprep.mubr.bf16.mxu0 0
      %1051 = vmatmul.mubr.bf16.gmra.mrb[0].mxu0 %v966
      %v1052 = vpop.f32.mrb[0].mxu0
      %v1053 = vadd.f32 0.0, %v1052
      %v1054 = vpop.f32.mrb[0].mxu0
      %v1055 = vpop.f32.mrb[0].mxu0
      %v1056 = vadd.f32 0.0, %v1055
      %v1057 = vpop.f32.mrb[0].mxu0
      %1058 = vmatprep.mubr.bf16.mxu0 0
      %1059 = vmatmul.mubr.bf16.gmra.mrb[0].mxu0 %v969
      %v1060 = vpop.f32.mrb[0].mxu0
      %v1061 = vadd.f32 0.0, %v1060
      %v1062 = vpop.f32.mrb[0].mxu0
      %v1063 = vpop.f32.mrb[0].mxu0
      %v1064 = vadd.f32 0.0, %v1063
      %v1065 = vpop.f32.mrb[0].mxu0
      %1066 = vmatprep.mubr.bf16.mxu0 0
      %1067 = vmatmul.mubr.bf16.gmra.mrb[0].mxu0 %v972
      %v1068 = vpop.f32.mrb[0].mxu0
      %v1069 = vadd.f32 0.0, %v1068
      %v1070 = vpop.f32.mrb[0].mxu0
      %v1071 = vpop.f32.mrb[0].mxu0
      %v1072 = vadd.f32 0.0, %v1071
      %v1073 = vpop.f32.mrb[0].mxu0
      %1074 = vmatprep.mubr.bf16.mxu0 0
      %1075 = vmatmul.mubr.bf16.gmra.mrb[0].mxu0 %v975
      %v1076 = vpop.f32.mrb[0].mxu0
      %v1077 = vadd.f32 0.0, %v1076
      %v1078 = vpop.f32.mrb[0].mxu0
      %v1079 = vpop.f32.mrb[0].mxu0
      %v1080 = vadd.f32 0.0, %v1079
      %v1081 = vpop.f32.mrb[0].mxu0
      %1082 = vmatprep.mubr.bf16.mxu0 0
      %1083 = vmatmul.mubr.bf16.gmra.mrb[0].mxu0 %v978
      %v1084 = vpop.f32.mrb[0].mxu0
      %v1085 = vadd.f32 0.0, %v1084
      %v1086 = vpop.f32.mrb[0].mxu0
      %v1087 = vpop.f32.mrb[0].mxu0
      %v1088 = vadd.f32 0.0, %v1087
      %v1089 = vpop.f32.mrb[0].mxu0
      %1090 = vmatprep.mubr.bf16.mxu0 0
      %1091 = vmatmul.mubr.bf16.gmra.mrb[0].mxu0 %v981
      %v1092 = vpop.f32.mrb[0].mxu0
      %v1093 = vadd.f32 0.0, %v1092
      %v1094 = vpop.f32.mrb[0].mxu0
      %v1095 = vpop.f32.mrb[0].mxu0
      %v1096 = vadd.f32 0.0, %v1095
      %v1097 = vpop.f32.mrb[0].mxu0
      %1098 = vmatprep.mubr.bf16.mxu0 0
      %1099 = vmatmul.mubr.bf16.gmra.mrb[0].mxu0 %v984
      %v1100 = vpop.f32.mrb[0].mxu0
      %v1101 = vadd.f32 0.0, %v1100
      %v1102 = vpop.f32.mrb[0].mxu0
      %v1103 = vpop.f32.mrb[0].mxu0
      %v1104 = vadd.f32 0.0, %v1103
      %v1105 = vpop.f32.mrb[0].mxu0
      %1106 = vdwg.mxu0
      %v1107 = vmul.f32 %v1045, 0.125
      %v1108 = vmul.f32 %v1048, 0.125
      %v1109 = vmul.f32 %v1053, 0.125
      %v1110 = vmul.f32 %v1056, 0.125
      %v1111 = vmul.f32 %v1061, 0.125
      %v1112 = vmul.f32 %v1064, 0.125
      %v1113 = vmul.f32 %v1069, 0.125
      %v1114 = vmul.f32 %v1072, 0.125
      %v1115 = vmul.f32 %v1077, 0.125
      %v1116 = vmul.f32 %v1080, 0.125
      %v1117 = vmul.f32 %v1085, 0.125
      %v1118 = vmul.f32 %v1088, 0.125
      %v1119 = vmul.f32 %v1093, 0.125
      %v1120 = vmul.f32 %v1096, 0.125
      %v1121 = vmul.f32 %v1101, 0.125
      %v1122 = vmul.f32 %v1104, 0.125
      %v1124 = vlaneseq
      %v1125 = vshrl.u32 %v1124, 7
      %v1126 = vsub.s32 0, %v1125
      %v1127 = vrot.slane %v960, %v1126
      %v1129 = vadd.f32 %v1107, %v1127
      %v1130 = vadd.f32 %v1108, %v1127
      %v1131 = vadd.f32 %v1109, %v1127
      %v1132 = vadd.f32 %v1110, %v1127
      %v1133 = vadd.f32 %v1111, %v1127
      %v1134 = vadd.f32 %v1112, %v1127
      %v1135 = vadd.f32 %v1113, %v1127
      %v1136 = vadd.f32 %v1114, %v1127
      %v1137 = vadd.f32 %v1115, %v1127
      %v1138 = vadd.f32 %v1116, %v1127
      %v1139 = vadd.f32 %v1117, %v1127
      %v1140 = vadd.f32 %v1118, %v1127
      %v1141 = vadd.f32 %v1119, %v1127
      %v1142 = vadd.f32 %v1120, %v1127
      %v1143 = vadd.f32 %v1121, %v1127
      %v1144 = vadd.f32 %v1122, %v1127
      %1145 = vmax.xlane.f32.xlu0 %v1129
      %v1146 = vpop.xlane.xlu0 %1145
      %1147 = vmax.xlane.f32.xlu0 %v1130
      %v1148 = vpop.xlane.xlu0 %1147
      %1149 = vmax.xlane.f32.xlu0 %v1131
      %v1150 = vpop.xlane.xlu0 %1149
      %1151 = vmax.xlane.f32.xlu0 %v1132
      %v1152 = vpop.xlane.xlu0 %1151
      %1153 = vmax.xlane.f32.xlu0 %v1133
      %v1154 = vpop.xlane.xlu0 %1153
      %1155 = vmax.xlane.f32.xlu0 %v1134
      %v1156 = vpop.xlane.xlu0 %1155
      %1157 = vmax.xlane.f32.xlu0 %v1135
      %v1158 = vpop.xlane.xlu0 %1157
      %1159 = vmax.xlane.f32.xlu0 %v1136
      %v1160 = vpop.xlane.xlu0 %1159
      %1161 = vmax.xlane.f32.xlu0 %v1137
      %v1162 = vpop.xlane.xlu0 %1161
      %1163 = vmax.xlane.f32.xlu0 %v1138
      %v1164 = vpop.xlane.xlu0 %1163
      %1165 = vmax.xlane.f32.xlu0 %v1139
      %v1166 = vpop.xlane.xlu0 %1165
      %1167 = vmax.xlane.f32.xlu0 %v1140
      %v1168 = vpop.xlane.xlu0 %1167
      %1169 = vmax.xlane.f32.xlu0 %v1141
      %v1170 = vpop.xlane.xlu0 %1169
      %1171 = vmax.xlane.f32.xlu0 %v1142
      %v1172 = vpop.xlane.xlu0 %1171
      %1173 = vmax.xlane.f32.xlu0 %v1143
      %v1174 = vpop.xlane.xlu0 %1173
      %1175 = vmax.xlane.f32.xlu0 %v1144
      %v1176 = vpop.xlane.xlu0 %1175
      %v1177 = vsub.f32 %v1129, %v1146
      %v1178 = vsub.f32 %v1130, %v1148
      %v1179 = vsub.f32 %v1131, %v1150
      %v1180 = vsub.f32 %v1132, %v1152
      %v1181 = vsub.f32 %v1133, %v1154
      %v1182 = vsub.f32 %v1134, %v1156
      %v1183 = vsub.f32 %v1135, %v1158
      %v1184 = vsub.f32 %v1136, %v1160
      %v1185 = vsub.f32 %v1137, %v1162
      %v1186 = vsub.f32 %v1138, %v1164
      %v1187 = vsub.f32 %v1139, %v1166
      %v1188 = vsub.f32 %v1140, %v1168
      %v1189 = vsub.f32 %v1141, %v1170
      %v1190 = vsub.f32 %v1142, %v1172
      %v1191 = vsub.f32 %v1143, %v1174
      %v1192 = vsub.f32 %v1144, %v1176
      %v1193 = vmul.f32 %v1177, 1.442695
      %v1194 = vpow.pop %v1193
      %v1195 = vmul.f32 %v1178, 1.442695
      %v1196 = vpow.pop %v1195
      %v1197 = vmul.f32 %v1179, 1.442695
      %v1198 = vpow.pop %v1197
      %v1199 = vmul.f32 %v1180, 1.442695
      %v1200 = vpow.pop %v1199
      %v1201 = vmul.f32 %v1181, 1.442695
      %v1202 = vpow.pop %v1201
      %v1203 = vmul.f32 %v1182, 1.442695
      %v1204 = vpow.pop %v1203
      %v1205 = vmul.f32 %v1183, 1.442695
      %v1206 = vpow.pop %v1205
      %v1207 = vmul.f32 %v1184, 1.442695
      %v1208 = vpow.pop %v1207
      %v1209 = vmul.f32 %v1185, 1.442695
      %v1210 = vpow.pop %v1209
      %v1211 = vmul.f32 %v1186, 1.442695
      %v1212 = vpow.pop %v1211
      %v1213 = vmul.f32 %v1187, 1.442695
      %v1214 = vpow.pop %v1213
      %v1215 = vmul.f32 %v1188, 1.442695
      %v1216 = vpow.pop %v1215
      %v1217 = vmul.f32 %v1189, 1.442695
      %v1218 = vpow.pop %v1217
      %v1219 = vmul.f32 %v1190, 1.442695
      %v1220 = vpow.pop %v1219
      %v1221 = vmul.f32 %v1191, 1.442695
      %v1222 = vpow.pop %v1221
      %v1223 = vmul.f32 %v1192, 1.442695
      %v1224 = vpow.pop %v1223
      %1225 = vadd.xlane.f32.xlu0 %v1194
      %v1226 = vpop.xlane.xlu0 %1225
      %1227 = vadd.xlane.f32.xlu0 %v1196
      %v1228 = vpop.xlane.xlu0 %1227
      %1229 = vadd.xlane.f32.xlu0 %v1198
      %v1230 = vpop.xlane.xlu0 %1229
      %1231 = vadd.xlane.f32.xlu0 %v1200
      %v1232 = vpop.xlane.xlu0 %1231
      %1233 = vadd.xlane.f32.xlu0 %v1202
      %v1234 = vpop.xlane.xlu0 %1233
      %1235 = vadd.xlane.f32.xlu0 %v1204
      %v1236 = vpop.xlane.xlu0 %1235
      %1237 = vadd.xlane.f32.xlu0 %v1206
      %v1238 = vpop.xlane.xlu0 %1237
      %1239 = vadd.xlane.f32.xlu0 %v1208
      %v1240 = vpop.xlane.xlu0 %1239
      %1241 = vadd.xlane.f32.xlu0 %v1210
      %v1242 = vpop.xlane.xlu0 %1241
      %1243 = vadd.xlane.f32.xlu0 %v1212
      %v1244 = vpop.xlane.xlu0 %1243
      %1245 = vadd.xlane.f32.xlu0 %v1214
      %v1246 = vpop.xlane.xlu0 %1245
      %1247 = vadd.xlane.f32.xlu0 %v1216
      %v1248 = vpop.xlane.xlu0 %1247
      %1249 = vadd.xlane.f32.xlu0 %v1218
      %v1250 = vpop.xlane.xlu0 %1249
      %1251 = vadd.xlane.f32.xlu0 %v1220
      %v1252 = vpop.xlane.xlu0 %1251
      %1253 = vadd.xlane.f32.xlu0 %v1222
      %v1254 = vpop.xlane.xlu0 %1253
      %1255 = vadd.xlane.f32.xlu0 %v1224
      %v1256 = vpop.xlane.xlu0 %1255
      %v1257 = vrcp.pop %v1226
      %v1258 = vrcp.pop %v1228
      %v1259 = vrcp.pop %v1230
      %v1260 = vrcp.pop %v1232
      %v1261 = vrcp.pop %v1234
      %v1262 = vrcp.pop %v1236
      %v1263 = vrcp.pop %v1238
      %v1264 = vrcp.pop %v1240
      %v1265 = vrcp.pop %v1242
      %v1266 = vrcp.pop %v1244
      %v1267 = vrcp.pop %v1246
      %v1268 = vrcp.pop %v1248
      %v1269 = vrcp.pop %v1250
      %v1270 = vrcp.pop %v1252
      %v1271 = vrcp.pop %v1254
      %v1272 = vrcp.pop %v1256
      %v1273 = vmul.f32 %v1194, %v1257
      %v1274 = vmul.f32 %v1196, %v1258
      %v1275 = vmul.f32 %v1198, %v1259
      %v1276 = vmul.f32 %v1200, %v1260
      %v1277 = vmul.f32 %v1202, %v1261
      %v1278 = vmul.f32 %v1204, %v1262
      %v1279 = vmul.f32 %v1206, %v1263
      %v1280 = vmul.f32 %v1208, %v1264
      %v1281 = vmul.f32 %v1210, %v1265
      %v1282 = vmul.f32 %v1212, %v1266
      %v1283 = vmul.f32 %v1214, %v1267
      %v1284 = vmul.f32 %v1216, %v1268
      %v1285 = vmul.f32 %v1218, %v1269
      %v1286 = vmul.f32 %v1220, %v1270
      %v1287 = vmul.f32 %v1222, %v1271
      %v1288 = vmul.f32 %v1224, %v1272
      %v1289 = vpack.c.bf16 %v1274, %v1273
      %v1290 = vpack.c.bf16 %v1276, %v1275
      %v1291 = vpack.c.bf16 %v1278, %v1277
      %v1292 = vpack.c.bf16 %v1280, %v1279
      %v1293 = vpack.c.bf16 %v1282, %v1281
      %v1294 = vpack.c.bf16 %v1284, %v1283
      %v1295 = vpack.c.bf16 %v1286, %v1285
      %v1296 = vpack.c.bf16 %v1288, %v1287
      %1297 = vmatprep.subr.bf16.mxu0 0
      %1298 = vmatpush1.bf16.msra.mxu0 %v936
      %1299 = vmatprep.subr.bf16.mxu0 0
      %1300 = vmatpush1.bf16.msra.mxu0 %v939
      %1301 = vmatprep.subr.bf16.mxu0 0
      %1302 = vmatpush1.bf16.msra.mxu0 %v942
      %1303 = vmatprep.subr.bf16.mxu0 0
      %1304 = vmatpush1.bf16.msra.mxu0 %v945
      %1305 = vmatprep.subr.bf16.mxu0 0
      %1306 = vmatpush1.bf16.msra.mxu0 %v948
      %1307 = vmatprep.subr.bf16.mxu0 0
      %1308 = vmatpush1.bf16.msra.mxu0 %v951
      %1309 = vmatprep.subr.bf16.mxu0 0
      %1310 = vmatpush1.bf16.msra.mxu0 %v954
      %1311 = vmatprep.subr.bf16.mxu0 0
      %1312 = vmatpush1.bf16.msra.mxu0 %v957
      %1313 = vmatprep.subr.bf16.mxu0 0
      %1314 = vmatpush1.bf16.msra.mxu0 0
      %1315 = vmatprep.subr.bf16.mxu0 0
      %1316 = vmatpush1.bf16.msra.mxu0 0
      %1317 = vmatprep.subr.bf16.mxu0 0
      %1318 = vmatpush1.bf16.msra.mxu0 0
      %1319 = vmatprep.subr.bf16.mxu0 0
      %1320 = vmatpush1.bf16.msra.mxu0 0
      %1321 = vmatprep.subr.bf16.mxu0 0
      %1322 = vmatpush1.bf16.msra.mxu0 0
      %1323 = vmatprep.subr.bf16.mxu0 0
      %1324 = vmatpush1.bf16.msra.mxu0 0
      %1325 = vmatprep.subr.bf16.mxu0 0
      %1326 = vmatpush1.bf16.msra.mxu0 0
      %1327 = vmatprep.subr.bf16.mxu0 0
      %1328 = vmatpush1.bf16.msra.mxu0 0
      %1329 = vmatprep.mubr.bf16.mxu0 0
      %1330 = vmatmul.mubr.bf16.gmra.mrb[0].mxu0 %v1289
      %v1331 = vpop.f32.mrb[0].mxu0
      %v1332 = vadd.f32 0.0, %v1331
      %v1333 = vpop.f32.mrb[0].mxu0
      %v1334 = vpop.f32.mrb[0].mxu0
      %v1335 = vadd.f32 0.0, %v1334
      %v1336 = vpop.f32.mrb[0].mxu0
      %1337 = vmatprep.mubr.bf16.mxu0 0
      %1338 = vmatmul.mubr.bf16.gmra.mrb[0].mxu0 %v1290
      %v1339 = vpop.f32.mrb[0].mxu0
      %v1340 = vadd.f32 0.0, %v1339
      %v1341 = vpop.f32.mrb[0].mxu0
      %v1342 = vpop.f32.mrb[0].mxu0
      %v1343 = vadd.f32 0.0, %v1342
      %v1344 = vpop.f32.mrb[0].mxu0
      %1345 = vmatprep.mubr.bf16.mxu0 0
      %1346 = vmatmul.mubr.bf16.gmra.mrb[0].mxu0 %v1291
      %v1347 = vpop.f32.mrb[0].mxu0
      %v1348 = vadd.f32 0.0, %v1347
      %v1349 = vpop.f32.mrb[0].mxu0
      %v1350 = vpop.f32.mrb[0].mxu0
      %v1351 = vadd.f32 0.0, %v1350
      %v1352 = vpop.f32.mrb[0].mxu0
      %1353 = vmatprep.mubr.bf16.mxu0 0
      %1354 = vmatmul.mubr.bf16.gmra.mrb[0].mxu0 %v1292
      %v1355 = vpop.f32.mrb[0].mxu0
      %v1356 = vadd.f32 0.0, %v1355
      %v1357 = vpop.f32.mrb[0].mxu0
      %v1358 = vpop.f32.mrb[0].mxu0
      %v1359 = vadd.f32 0.0, %v1358
      %v1360 = vpop.f32.mrb[0].mxu0
      %1361 = vmatprep.mubr.bf16.mxu0 0
      %1362 = vmatmul.mubr.bf16.gmra.mrb[0].mxu0 %v1293
      %v1363 = vpop.f32.mrb[0].mxu0
      %v1364 = vadd.f32 0.0, %v1363
      %v1365 = vpop.f32.mrb[0].mxu0
      %v1366 = vpop.f32.mrb[0].mxu0
      %v1367 = vadd.f32 0.0, %v1366
      %v1368 = vpop.f32.mrb[0].mxu0
      %1369 = vmatprep.mubr.bf16.mxu0 0
      %1370 = vmatmul.mubr.bf16.gmra.mrb[0].mxu0 %v1294
      %v1371 = vpop.f32.mrb[0].mxu0
      %v1372 = vadd.f32 0.0, %v1371
      %v1373 = vpop.f32.mrb[0].mxu0
      %v1374 = vpop.f32.mrb[0].mxu0
      %v1375 = vadd.f32 0.0, %v1374
      %v1376 = vpop.f32.mrb[0].mxu0
      %1377 = vmatprep.mubr.bf16.mxu0 0
      %1378 = vmatmul.mubr.bf16.gmra.mrb[0].mxu0 %v1295
      %v1379 = vpop.f32.mrb[0].mxu0
      %v1380 = vadd.f32 0.0, %v1379
      %v1381 = vpop.f32.mrb[0].mxu0
      %v1382 = vpop.f32.mrb[0].mxu0
      %v1383 = vadd.f32 0.0, %v1382
      %v1384 = vpop.f32.mrb[0].mxu0
      %1385 = vmatprep.mubr.bf16.mxu0 0
      %1386 = vmatmul.mubr.bf16.gmra.mrb[0].mxu0 %v1296
      %v1387 = vpop.f32.mrb[0].mxu0
      %v1388 = vadd.f32 0.0, %v1387
      %v1389 = vpop.f32.mrb[0].mxu0
      %v1390 = vpop.f32.mrb[0].mxu0
      %v1391 = vadd.f32 0.0, %v1390
      %v1392 = vpop.f32.mrb[0].mxu0
      %1393 = vdwg.mxu0
      %1402 = vrot.lane.b32.xlu0 %v934, 64
      %v1403 = vpop.permute.xlu0 %1402
      %1404 = vrot.lane.b32.xlu0 %v937, 64
      %v1405 = vpop.permute.xlu0 %1404
      %1406 = vrot.lane.b32.xlu0 %v940, 64
      %v1407 = vpop.permute.xlu0 %1406
      %1408 = vrot.lane.b32.xlu0 %v943, 64
      %v1409 = vpop.permute.xlu0 %1408
      %1410 = vrot.lane.b32.xlu0 %v946, 64
      %v1411 = vpop.permute.xlu0 %1410
      %1412 = vrot.lane.b32.xlu0 %v949, 64
      %v1413 = vpop.permute.xlu0 %1412
      %1414 = vrot.lane.b32.xlu0 %v952, 64
      %v1415 = vpop.permute.xlu0 %1414
      %1416 = vrot.lane.b32.xlu0 %v955, 64
      %v1417 = vpop.permute.xlu0 %1416
      %1426 = vrot.lane.b32.xlu0 %v935, 64
      %v1427 = vpop.permute.xlu0 %1426
      %1428 = vrot.lane.b32.xlu0 %v938, 64
      %v1429 = vpop.permute.xlu0 %1428
      %1430 = vrot.lane.b32.xlu0 %v941, 64
      %v1431 = vpop.permute.xlu0 %1430
      %1432 = vrot.lane.b32.xlu0 %v944, 64
      %v1433 = vpop.permute.xlu0 %1432
      %1434 = vrot.lane.b32.xlu0 %v947, 64
      %v1435 = vpop.permute.xlu0 %1434
      %1436 = vrot.lane.b32.xlu0 %v950, 64
      %v1437 = vpop.permute.xlu0 %1436
      %1438 = vrot.lane.b32.xlu0 %v953, 64
      %v1439 = vpop.permute.xlu0 %1438
      %1440 = vrot.lane.b32.xlu0 %v956, 64
      %v1441 = vpop.permute.xlu0 %1440
      %v1443 = vsel %vm961, %v1403, 0
      %v1446 = vsel %vm961, %v1405, 0
      %v1449 = vsel %vm961, %v1407, 0
      %v1452 = vsel %vm961, %v1409, 0
      %v1455 = vsel %vm961, %v1411, 0
      %v1458 = vsel %vm961, %v1413, 0
      %v1461 = vsel %vm961, %v1415, 0
      %v1464 = vsel %vm961, %v1417, 0
      %v1467 = vsel %vm961, %v1427, 0
      %v1470 = vsel %vm961, %v1429, 0
      %v1473 = vsel %vm961, %v1431, 0
      %v1476 = vsel %vm961, %v1433, 0
      %v1479 = vsel %vm961, %v1435, 0
      %v1482 = vsel %vm961, %v1437, 0
      %v1485 = vsel %vm961, %v1439, 0
      %v1488 = vsel %vm961, %v1441, 0
      %1490 = vmatprep.subr.bf16.mxu0 0
      %1491 = vmatpush1.bf16.xpose.msra.mxu0 %v1467
      %1492 = vmatprep.subr.bf16.mxu0 0
      %1493 = vmatpush1.bf16.xpose.msra.mxu0 %v1470
      %1494 = vmatprep.subr.bf16.mxu0 0
      %1495 = vmatpush1.bf16.xpose.msra.mxu0 %v1473
      %1496 = vmatprep.subr.bf16.mxu0 0
      %1497 = vmatpush1.bf16.xpose.msra.mxu0 %v1476
      %1498 = vmatprep.subr.bf16.mxu0 0
      %1499 = vmatpush1.bf16.xpose.msra.mxu0 %v1479
      %1500 = vmatprep.subr.bf16.mxu0 0
      %1501 = vmatpush1.bf16.xpose.msra.mxu0 %v1482
      %1502 = vmatprep.subr.bf16.mxu0 0
      %1503 = vmatpush1.bf16.xpose.msra.mxu0 %v1485
      %1504 = vmatprep.subr.bf16.mxu0 0
      %1505 = vmatpush1.bf16.xpose.msra.mxu0 %v1488
      %1506 = vmatprep.subr.bf16.mxu0 0
      %1507 = vmatpush1.bf16.xpose.msra.mxu0 0
      %1508 = vmatprep.subr.bf16.mxu0 0
      %1509 = vmatpush1.bf16.xpose.msra.mxu0 0
      %1510 = vmatprep.subr.bf16.mxu0 0
      %1511 = vmatpush1.bf16.xpose.msra.mxu0 0
      %1512 = vmatprep.subr.bf16.mxu0 0
      %1513 = vmatpush1.bf16.xpose.msra.mxu0 0
      %1514 = vmatprep.subr.bf16.mxu0 0
      %1515 = vmatpush1.bf16.xpose.msra.mxu0 0
      %1516 = vmatprep.subr.bf16.mxu0 0
      %1517 = vmatpush1.bf16.xpose.msra.mxu0 0
      %1518 = vmatprep.subr.bf16.mxu0 0
      %1519 = vmatpush1.bf16.xpose.msra.mxu0 0
      %1520 = vmatprep.subr.bf16.mxu0 0
      %1521 = vmatpush1.bf16.xpose.msra.mxu0 0
      %1522 = vmatprep.mubr.bf16.mxu0 0
      %1523 = vmatmul.mubr.bf16.gmra.mrb[0].mxu0 %v1443
      %v1524 = vpop.f32.mrb[0].mxu0
      %v1525 = vadd.f32 0.0, %v1524
      %v1526 = vpop.f32.mrb[0].mxu0
      %v1527 = vpop.f32.mrb[0].mxu0
      %v1528 = vadd.f32 0.0, %v1527
      %v1529 = vpop.f32.mrb[0].mxu0
      %1530 = vmatprep.mubr.bf16.mxu0 0
      %1531 = vmatmul.mubr.bf16.gmra.mrb[0].mxu0 %v1446
      %v1532 = vpop.f32.mrb[0].mxu0
      %v1533 = vadd.f32 0.0, %v1532
      %v1534 = vpop.f32.mrb[0].mxu0
      %v1535 = vpop.f32.mrb[0].mxu0
      %v1536 = vadd.f32 0.0, %v1535
      %v1537 = vpop.f32.mrb[0].mxu0
      %1538 = vmatprep.mubr.bf16.mxu0 0
      %1539 = vmatmul.mubr.bf16.gmra.mrb[0].mxu0 %v1449
      %v1540 = vpop.f32.mrb[0].mxu0
      %v1541 = vadd.f32 0.0, %v1540
      %v1542 = vpop.f32.mrb[0].mxu0
      %v1543 = vpop.f32.mrb[0].mxu0
      %v1544 = vadd.f32 0.0, %v1543
      %v1545 = vpop.f32.mrb[0].mxu0
      %1546 = vmatprep.mubr.bf16.mxu0 0
      %1547 = vmatmul.mubr.bf16.gmra.mrb[0].mxu0 %v1452
      %v1548 = vpop.f32.mrb[0].mxu0
      %v1549 = vadd.f32 0.0, %v1548
      %v1550 = vpop.f32.mrb[0].mxu0
      %v1551 = vpop.f32.mrb[0].mxu0
      %v1552 = vadd.f32 0.0, %v1551
      %v1553 = vpop.f32.mrb[0].mxu0
      %1554 = vmatprep.mubr.bf16.mxu0 0
      %1555 = vmatmul.mubr.bf16.gmra.mrb[0].mxu0 %v1455
      %v1556 = vpop.f32.mrb[0].mxu0
      %v1557 = vadd.f32 0.0, %v1556
      %v1558 = vpop.f32.mrb[0].mxu0
      %v1559 = vpop.f32.mrb[0].mxu0
      %v1560 = vadd.f32 0.0, %v1559
      %v1561 = vpop.f32.mrb[0].mxu0
      %1562 = vmatprep.mubr.bf16.mxu0 0
      %1563 = vmatmul.mubr.bf16.gmra.mrb[0].mxu0 %v1458
      %v1564 = vpop.f32.mrb[0].mxu0
      %v1565 = vadd.f32 0.0, %v1564
      %v1566 = vpop.f32.mrb[0].mxu0
      %v1567 = vpop.f32.mrb[0].mxu0
      %v1568 = vadd.f32 0.0, %v1567
      %v1569 = vpop.f32.mrb[0].mxu0
      %1570 = vmatprep.mubr.bf16.mxu0 0
      %1571 = vmatmul.mubr.bf16.gmra.mrb[0].mxu0 %v1461
      %v1572 = vpop.f32.mrb[0].mxu0
      %v1573 = vadd.f32 0.0, %v1572
      %v1574 = vpop.f32.mrb[0].mxu0
      %v1575 = vpop.f32.mrb[0].mxu0
      %v1576 = vadd.f32 0.0, %v1575
      %v1577 = vpop.f32.mrb[0].mxu0
      %1578 = vmatprep.mubr.bf16.mxu0 0
      %1579 = vmatmul.mubr.bf16.gmra.mrb[0].mxu0 %v1464
      %v1580 = vpop.f32.mrb[0].mxu0
      %v1581 = vadd.f32 0.0, %v1580
      %v1582 = vpop.f32.mrb[0].mxu0
      %v1583 = vpop.f32.mrb[0].mxu0
      %v1584 = vadd.f32 0.0, %v1583
      %v1585 = vpop.f32.mrb[0].mxu0
      %1586 = vdwg.mxu0
      %v1587 = vmul.f32 %v1525, 0.125
      %v1588 = vmul.f32 %v1528, 0.125
      %v1589 = vmul.f32 %v1533, 0.125
      %v1590 = vmul.f32 %v1536, 0.125
      %v1591 = vmul.f32 %v1541, 0.125
      %v1592 = vmul.f32 %v1544, 0.125
      %v1593 = vmul.f32 %v1549, 0.125
      %v1594 = vmul.f32 %v1552, 0.125
      %v1595 = vmul.f32 %v1557, 0.125
      %v1596 = vmul.f32 %v1560, 0.125
      %v1597 = vmul.f32 %v1565, 0.125
      %v1598 = vmul.f32 %v1568, 0.125
      %v1599 = vmul.f32 %v1573, 0.125
      %v1600 = vmul.f32 %v1576, 0.125
      %v1601 = vmul.f32 %v1581, 0.125
      %v1602 = vmul.f32 %v1584, 0.125
      %v1603 = vadd.f32 %v1587, %v1127
      %v1604 = vadd.f32 %v1588, %v1127
      %v1605 = vadd.f32 %v1589, %v1127
      %v1606 = vadd.f32 %v1590, %v1127
      %v1607 = vadd.f32 %v1591, %v1127
      %v1608 = vadd.f32 %v1592, %v1127
      %v1609 = vadd.f32 %v1593, %v1127
      %v1610 = vadd.f32 %v1594, %v1127
      %v1611 = vadd.f32 %v1595, %v1127
      %v1612 = vadd.f32 %v1596, %v1127
      %v1613 = vadd.f32 %v1597, %v1127
      %v1614 = vadd.f32 %v1598, %v1127
      %v1615 = vadd.f32 %v1599, %v1127
      %v1616 = vadd.f32 %v1600, %v1127
      %v1617 = vadd.f32 %v1601, %v1127
      %v1618 = vadd.f32 %v1602, %v1127
      %1619 = vmax.xlane.f32.xlu0 %v1603
      %v1620 = vpop.xlane.xlu0 %1619
      %1621 = vmax.xlane.f32.xlu0 %v1604
      %v1622 = vpop.xlane.xlu0 %1621
      %1623 = vmax.xlane.f32.xlu0 %v1605
      %v1624 = vpop.xlane.xlu0 %1623
      %1625 = vmax.xlane.f32.xlu0 %v1606
      %v1626 = vpop.xlane.xlu0 %1625
      %1627 = vmax.xlane.f32.xlu0 %v1607
      %v1628 = vpop.xlane.xlu0 %1627
      %1629 = vmax.xlane.f32.xlu0 %v1608
      %v1630 = vpop.xlane.xlu0 %1629
      %1631 = vmax.xlane.f32.xlu0 %v1609
      %v1632 = vpop.xlane.xlu0 %1631
      %1633 = vmax.xlane.f32.xlu0 %v1610
      %v1634 = vpop.xlane.xlu0 %1633
      %1635 = vmax.xlane.f32.xlu0 %v1611
      %v1636 = vpop.xlane.xlu0 %1635
      %1637 = vmax.xlane.f32.xlu0 %v1612
      %v1638 = vpop.xlane.xlu0 %1637
      %1639 = vmax.xlane.f32.xlu0 %v1613
      %v1640 = vpop.xlane.xlu0 %1639
      %1641 = vmax.xlane.f32.xlu0 %v1614
      %v1642 = vpop.xlane.xlu0 %1641
      %1643 = vmax.xlane.f32.xlu0 %v1615
      %v1644 = vpop.xlane.xlu0 %1643
      %1645 = vmax.xlane.f32.xlu0 %v1616
      %v1646 = vpop.xlane.xlu0 %1645
      %1647 = vmax.xlane.f32.xlu0 %v1617
      %v1648 = vpop.xlane.xlu0 %1647
      %1649 = vmax.xlane.f32.xlu0 %v1618
      %v1650 = vpop.xlane.xlu0 %1649
      %v1651 = vsub.f32 %v1603, %v1620
      %v1652 = vsub.f32 %v1604, %v1622
      %v1653 = vsub.f32 %v1605, %v1624
      %v1654 = vsub.f32 %v1606, %v1626
      %v1655 = vsub.f32 %v1607, %v1628
      %v1656 = vsub.f32 %v1608, %v1630
      %v1657 = vsub.f32 %v1609, %v1632
      %v1658 = vsub.f32 %v1610, %v1634
      %v1659 = vsub.f32 %v1611, %v1636
      %v1660 = vsub.f32 %v1612, %v1638
      %v1661 = vsub.f32 %v1613, %v1640
      %v1662 = vsub.f32 %v1614, %v1642
      %v1663 = vsub.f32 %v1615, %v1644
      %v1664 = vsub.f32 %v1616, %v1646
      %v1665 = vsub.f32 %v1617, %v1648
      %v1666 = vsub.f32 %v1618, %v1650
      %v1667 = vmul.f32 %v1651, 1.442695
      %v1668 = vpow.pop %v1667
      %v1669 = vmul.f32 %v1652, 1.442695
      %v1670 = vpow.pop %v1669
      %v1671 = vmul.f32 %v1653, 1.442695
      %v1672 = vpow.pop %v1671
      %v1673 = vmul.f32 %v1654, 1.442695
      %v1674 = vpow.pop %v1673
      %v1675 = vmul.f32 %v1655, 1.442695
      %v1676 = vpow.pop %v1675
      %v1677 = vmul.f32 %v1656, 1.442695
      %v1678 = vpow.pop %v1677
      %v1679 = vmul.f32 %v1657, 1.442695
      %v1680 = vpow.pop %v1679
      %v1681 = vmul.f32 %v1658, 1.442695
      %v1682 = vpow.pop %v1681
      %v1683 = vmul.f32 %v1659, 1.442695
      %v1684 = vpow.pop %v1683
      %v1685 = vmul.f32 %v1660, 1.442695
      %v1686 = vpow.pop %v1685
      %v1687 = vmul.f32 %v1661, 1.442695
      %v1688 = vpow.pop %v1687
      %v1689 = vmul.f32 %v1662, 1.442695
      %v1690 = vpow.pop %v1689
      %v1691 = vmul.f32 %v1663, 1.442695
      %v1692 = vpow.pop %v1691
      %v1693 = vmul.f32 %v1664, 1.442695
      %v1694 = vpow.pop %v1693
      %v1695 = vmul.f32 %v1665, 1.442695
      %v1696 = vpow.pop %v1695
      %v1697 = vmul.f32 %v1666, 1.442695
      %v1698 = vpow.pop %v1697
      %1699 = vadd.xlane.f32.xlu0 %v1668
      %v1700 = vpop.xlane.xlu0 %1699
      %1701 = vadd.xlane.f32.xlu0 %v1670
      %v1702 = vpop.xlane.xlu0 %1701
      %1703 = vadd.xlane.f32.xlu0 %v1672
      %v1704 = vpop.xlane.xlu0 %1703
      %1705 = vadd.xlane.f32.xlu0 %v1674
      %v1706 = vpop.xlane.xlu0 %1705
      %1707 = vadd.xlane.f32.xlu0 %v1676
      %v1708 = vpop.xlane.xlu0 %1707
      %1709 = vadd.xlane.f32.xlu0 %v1678
      %v1710 = vpop.xlane.xlu0 %1709
      %1711 = vadd.xlane.f32.xlu0 %v1680
      %v1712 = vpop.xlane.xlu0 %1711
      %1713 = vadd.xlane.f32.xlu0 %v1682
      %v1714 = vpop.xlane.xlu0 %1713
      %1715 = vadd.xlane.f32.xlu0 %v1684
      %v1716 = vpop.xlane.xlu0 %1715
      %1717 = vadd.xlane.f32.xlu0 %v1686
      %v1718 = vpop.xlane.xlu0 %1717
      %1719 = vadd.xlane.f32.xlu0 %v1688
      %v1720 = vpop.xlane.xlu0 %1719
      %1721 = vadd.xlane.f32.xlu0 %v1690
      %v1722 = vpop.xlane.xlu0 %1721
      %1723 = vadd.xlane.f32.xlu0 %v1692
      %v1724 = vpop.xlane.xlu0 %1723
      %1725 = vadd.xlane.f32.xlu0 %v1694
      %v1726 = vpop.xlane.xlu0 %1725
      %1727 = vadd.xlane.f32.xlu0 %v1696
      %v1728 = vpop.xlane.xlu0 %1727
      %1729 = vadd.xlane.f32.xlu0 %v1698
      %v1730 = vpop.xlane.xlu0 %1729
      %v1731 = vrcp.pop %v1700
      %v1732 = vrcp.pop %v1702
      %v1733 = vrcp.pop %v1704
      %v1734 = vrcp.pop %v1706
      %v1735 = vrcp.pop %v1708
      %v1736 = vrcp.pop %v1710
      %v1737 = vrcp.pop %v1712
      %v1738 = vrcp.pop %v1714
      %v1739 = vrcp.pop %v1716
      %v1740 = vrcp.pop %v1718
      %v1741 = vrcp.pop %v1720
      %v1742 = vrcp.pop %v1722
      %v1743 = vrcp.pop %v1724
      %v1744 = vrcp.pop %v1726
      %v1745 = vrcp.pop %v1728
      %v1746 = vrcp.pop %v1730
      %v1747 = vmul.f32 %v1668, %v1731
      %v1748 = vmul.f32 %v1670, %v1732
      %v1749 = vmul.f32 %v1672, %v1733
      %v1750 = vmul.f32 %v1674, %v1734
      %v1751 = vmul.f32 %v1676, %v1735
      %v1752 = vmul.f32 %v1678, %v1736
      %v1753 = vmul.f32 %v1680, %v1737
      %v1754 = vmul.f32 %v1682, %v1738
      %v1755 = vmul.f32 %v1684, %v1739
      %v1756 = vmul.f32 %v1686, %v1740
      %v1757 = vmul.f32 %v1688, %v1741
      %v1758 = vmul.f32 %v1690, %v1742
      %v1759 = vmul.f32 %v1692, %v1743
      %v1760 = vmul.f32 %v1694, %v1744
      %v1761 = vmul.f32 %v1696, %v1745
      %v1762 = vmul.f32 %v1698, %v1746
      %v1763 = vpack.c.bf16 %v1748, %v1747
      %v1764 = vpack.c.bf16 %v1750, %v1749
      %v1765 = vpack.c.bf16 %v1752, %v1751
      %v1766 = vpack.c.bf16 %v1754, %v1753
      %v1767 = vpack.c.bf16 %v1756, %v1755
      %v1768 = vpack.c.bf16 %v1758, %v1757
      %v1769 = vpack.c.bf16 %v1760, %v1759
      %v1770 = vpack.c.bf16 %v1762, %v1761
      %1779 = vrot.lane.b32.xlu0 %v936, 64
      %v1780 = vpop.permute.xlu0 %1779
      %1781 = vrot.lane.b32.xlu0 %v939, 64
      %v1782 = vpop.permute.xlu0 %1781
      %1783 = vrot.lane.b32.xlu0 %v942, 64
      %v1784 = vpop.permute.xlu0 %1783
      %1785 = vrot.lane.b32.xlu0 %v945, 64
      %v1786 = vpop.permute.xlu0 %1785
      %1787 = vrot.lane.b32.xlu0 %v948, 64
      %v1788 = vpop.permute.xlu0 %1787
      %1789 = vrot.lane.b32.xlu0 %v951, 64
      %v1790 = vpop.permute.xlu0 %1789
      %1791 = vrot.lane.b32.xlu0 %v954, 64
      %v1792 = vpop.permute.xlu0 %1791
      %1793 = vrot.lane.b32.xlu0 %v957, 64
      %v1794 = vpop.permute.xlu0 %1793
      %1803 = vmatprep.subr.bf16.mxu0 0
      %1804 = vmatpush1.bf16.msra.mxu0 %v1780
      %1805 = vmatprep.subr.bf16.mxu0 0
      %1806 = vmatpush1.bf16.msra.mxu0 %v1782
      %1807 = vmatprep.subr.bf16.mxu0 0
      %1808 = vmatpush1.bf16.msra.mxu0 %v1784
      %1809 = vmatprep.subr.bf16.mxu0 0
      %1810 = vmatpush1.bf16.msra.mxu0 %v1786
      %1811 = vmatprep.subr.bf16.mxu0 0
      %1812 = vmatpush1.bf16.msra.mxu0 %v1788
      %1813 = vmatprep.subr.bf16.mxu0 0
      %1814 = vmatpush1.bf16.msra.mxu0 %v1790
      %1815 = vmatprep.subr.bf16.mxu0 0
      %1816 = vmatpush1.bf16.msra.mxu0 %v1792
      %1817 = vmatprep.subr.bf16.mxu0 0
      %1818 = vmatpush1.bf16.msra.mxu0 %v1794
      %1819 = vmatprep.subr.bf16.mxu0 0
      %1820 = vmatpush1.bf16.msra.mxu0 0
      %1821 = vmatprep.subr.bf16.mxu0 0
      %1822 = vmatpush1.bf16.msra.mxu0 0
      %1823 = vmatprep.subr.bf16.mxu0 0
      %1824 = vmatpush1.bf16.msra.mxu0 0
      %1825 = vmatprep.subr.bf16.mxu0 0
      %1826 = vmatpush1.bf16.msra.mxu0 0
      %1827 = vmatprep.subr.bf16.mxu0 0
      %1828 = vmatpush1.bf16.msra.mxu0 0
      %1829 = vmatprep.subr.bf16.mxu0 0
      %1830 = vmatpush1.bf16.msra.mxu0 0
      %1831 = vmatprep.subr.bf16.mxu0 0
      %1832 = vmatpush1.bf16.msra.mxu0 0
      %1833 = vmatprep.subr.bf16.mxu0 0
      %1834 = vmatpush1.bf16.msra.mxu0 0
      %1835 = vmatprep.mubr.bf16.mxu0 0
      %1836 = vmatmul.mubr.bf16.gmra.mrb[0].mxu0 %v1763
      %v1837 = vpop.f32.mrb[0].mxu0
      %v1838 = vadd.f32 0.0, %v1837
      %v1839 = vpop.f32.mrb[0].mxu0
      %v1840 = vpop.f32.mrb[0].mxu0
      %v1841 = vadd.f32 0.0, %v1840
      %v1842 = vpop.f32.mrb[0].mxu0
      %1843 = vmatprep.mubr.bf16.mxu0 0
      %1844 = vmatmul.mubr.bf16.gmra.mrb[0].mxu0 %v1764
      %v1845 = vpop.f32.mrb[0].mxu0
      %v1846 = vadd.f32 0.0, %v1845
      %v1847 = vpop.f32.mrb[0].mxu0
      %v1848 = vpop.f32.mrb[0].mxu0
      %v1849 = vadd.f32 0.0, %v1848
      %v1850 = vpop.f32.mrb[0].mxu0
      %1851 = vmatprep.mubr.bf16.mxu0 0
      %1852 = vmatmul.mubr.bf16.gmra.mrb[0].mxu0 %v1765
      %v1853 = vpop.f32.mrb[0].mxu0
      %v1854 = vadd.f32 0.0, %v1853
      %v1855 = vpop.f32.mrb[0].mxu0
      %v1856 = vpop.f32.mrb[0].mxu0
      %v1857 = vadd.f32 0.0, %v1856
      %v1858 = vpop.f32.mrb[0].mxu0
      %1859 = vmatprep.mubr.bf16.mxu0 0
      %1860 = vmatmul.mubr.bf16.gmra.mrb[0].mxu0 %v1766
      %v1861 = vpop.f32.mrb[0].mxu0
      %v1862 = vadd.f32 0.0, %v1861
      %v1863 = vpop.f32.mrb[0].mxu0
      %v1864 = vpop.f32.mrb[0].mxu0
      %v1865 = vadd.f32 0.0, %v1864
      %v1866 = vpop.f32.mrb[0].mxu0
      %1867 = vmatprep.mubr.bf16.mxu0 0
      %1868 = vmatmul.mubr.bf16.gmra.mrb[0].mxu0 %v1767
      %v1869 = vpop.f32.mrb[0].mxu0
      %v1870 = vadd.f32 0.0, %v1869
      %v1871 = vpop.f32.mrb[0].mxu0
      %v1872 = vpop.f32.mrb[0].mxu0
      %v1873 = vadd.f32 0.0, %v1872
      %v1874 = vpop.f32.mrb[0].mxu0
      %1875 = vmatprep.mubr.bf16.mxu0 0
      %1876 = vmatmul.mubr.bf16.gmra.mrb[0].mxu0 %v1768
      %v1877 = vpop.f32.mrb[0].mxu0
      %v1878 = vadd.f32 0.0, %v1877
      %v1879 = vpop.f32.mrb[0].mxu0
      %v1880 = vpop.f32.mrb[0].mxu0
      %v1881 = vadd.f32 0.0, %v1880
      %v1882 = vpop.f32.mrb[0].mxu0
      %1883 = vmatprep.mubr.bf16.mxu0 0
      %1884 = vmatmul.mubr.bf16.gmra.mrb[0].mxu0 %v1769
      %v1885 = vpop.f32.mrb[0].mxu0
      %v1886 = vadd.f32 0.0, %v1885
      %v1887 = vpop.f32.mrb[0].mxu0
      %v1888 = vpop.f32.mrb[0].mxu0
      %v1889 = vadd.f32 0.0, %v1888
      %v1890 = vpop.f32.mrb[0].mxu0
      %1891 = vmatprep.mubr.bf16.mxu0 0
      %1892 = vmatmul.mubr.bf16.gmra.mrb[0].mxu0 %v1770
      %v1893 = vpop.f32.mrb[0].mxu0
      %v1894 = vadd.f32 0.0, %v1893
      %v1895 = vpop.f32.mrb[0].mxu0
      %v1896 = vpop.f32.mrb[0].mxu0
      %v1897 = vadd.f32 0.0, %v1896
      %v1898 = vpop.f32.mrb[0].mxu0
      %1899 = vdwg.mxu0
      %1916 = vrot.lane.b32.xlu0 %v1838, 64
      %v1917 = vpop.permute.xlu0 %1916
      %1918 = vrot.lane.b32.xlu0 %v1841, 64
      %v1919 = vpop.permute.xlu0 %1918
      %1920 = vrot.lane.b32.xlu0 %v1846, 64
      %v1921 = vpop.permute.xlu0 %1920
      %1922 = vrot.lane.b32.xlu0 %v1849, 64
      %v1923 = vpop.permute.xlu0 %1922
      %1924 = vrot.lane.b32.xlu0 %v1854, 64
      %v1925 = vpop.permute.xlu0 %1924
      %1926 = vrot.lane.b32.xlu0 %v1857, 64
      %v1927 = vpop.permute.xlu0 %1926
      %1928 = vrot.lane.b32.xlu0 %v1862, 64
      %v1929 = vpop.permute.xlu0 %1928
      %1930 = vrot.lane.b32.xlu0 %v1865, 64
      %v1931 = vpop.permute.xlu0 %1930
      %1932 = vrot.lane.b32.xlu0 %v1870, 64
      %v1933 = vpop.permute.xlu0 %1932
      %1934 = vrot.lane.b32.xlu0 %v1873, 64
      %v1935 = vpop.permute.xlu0 %1934
      %1936 = vrot.lane.b32.xlu0 %v1878, 64
      %v1937 = vpop.permute.xlu0 %1936
      %1938 = vrot.lane.b32.xlu0 %v1881, 64
      %v1939 = vpop.permute.xlu0 %1938
      %1940 = vrot.lane.b32.xlu0 %v1886, 64
      %v1941 = vpop.permute.xlu0 %1940
      %1942 = vrot.lane.b32.xlu0 %v1889, 64
      %v1943 = vpop.permute.xlu0 %1942
      %1944 = vrot.lane.b32.xlu0 %v1894, 64
      %v1945 = vpop.permute.xlu0 %1944
      %1946 = vrot.lane.b32.xlu0 %v1897, 64
      %v1947 = vpop.permute.xlu0 %1946
      %v1964 = vsel %vm961, %v1332, %v1917
      %v1965 = vsel %vm961, %v1335, %v1919
      %v1966 = vsel %vm961, %v1340, %v1921
      %v1967 = vsel %vm961, %v1343, %v1923
      %v1968 = vsel %vm961, %v1348, %v1925
      %v1969 = vsel %vm961, %v1351, %v1927
      %v1970 = vsel %vm961, %v1356, %v1929
      %v1971 = vsel %vm961, %v1359, %v1931
      %v1972 = vsel %vm961, %v1364, %v1933
      %v1973 = vsel %vm961, %v1367, %v1935
      %v1974 = vsel %vm961, %v1372, %v1937
      %v1975 = vsel %vm961, %v1375, %v1939
      %v1976 = vsel %vm961, %v1380, %v1941
      %v1977 = vsel %vm961, %v1383, %v1943
      %v1978 = vsel %vm961, %v1388, %v1945
      %v1979 = vsel %vm961, %v1391, %v1947
      %v1980 = vpack.c.bf16 %v1965, %v1964
      %v1981 = vpack.c.bf16 %v1967, %v1966
      %v1982 = vpack.c.bf16 %v1969, %v1968
      %v1983 = vpack.c.bf16 %v1971, %v1970
      %v1984 = vpack.c.bf16 %v1973, %v1972
      %v1985 = vpack.c.bf16 %v1975, %v1974
      %v1986 = vpack.c.bf16 %v1977, %v1976
      %v1987 = vpack.c.bf16 %v1979, %v1978
      %v1988 = vld [vmem:[%s4] sm:$0xf]
      %v1989 = vld [vmem:[%s4 + $0x4] sm:$0xf]
      %v1990 = vld [vmem:[%s4 + $0x8] sm:$0xf]
      %v1991 = vld [vmem:[%s4 + $0xc] sm:$0xf]
      %v1992 = vld [vmem:[%s4 + $0x10] sm:$0xf]
      %v1993 = vld [vmem:[%s4 + $0x14] sm:$0xf]
      %v1994 = vld [vmem:[%s4 + $0x18] sm:$0xf]
      %v1995 = vld [vmem:[%s4 + $0x1c] sm:$0xf]
      %v1996 = vld [vmem:[%s4 + $0x20] sm:$0xf]
      %v1997 = vld [vmem:[%s4 + $0x24] sm:$0xf]
      %v1998 = vld [vmem:[%s4 + $0x28] sm:$0xf]
      %v1999 = vld [vmem:[%s4 + $0x2c] sm:$0xf]
      %v2000 = vld [vmem:[%s4 + $0x30] sm:$0xf]
      %v2001 = vld [vmem:[%s4 + $0x34] sm:$0xf]
      %v2002 = vld [vmem:[%s4 + $0x38] sm:$0xf]
      %v2003 = vld [vmem:[%s4 + $0x3c] sm:$0xf]
      %v2004 = vld [vmem:[%s5] sm:$0x1]
      %v2006 = vlaneseq
      %v2007 = vshrl.u32 %v2006, 7
      %v2008 = vsub.s32 0, %v2007
      %v2009 = vrot.slane %v2004, %v2008
      %v2027 = vunpack.c.l.b16 %v1988
      %v2028 = vunpack.c.l.b16 %v1989
      %v2029 = vunpack.c.l.b16 %v1990
      %v2030 = vunpack.c.l.b16 %v1991
      %v2031 = vunpack.c.l.b16 %v1992
      %v2032 = vunpack.c.l.b16 %v1993
      %v2033 = vunpack.c.l.b16 %v1994
      %v2034 = vunpack.c.l.b16 %v1995
      %v2035 = vunpack.c.l.b16 %v1996
      %v2036 = vunpack.c.l.b16 %v1997
      %v2037 = vunpack.c.l.b16 %v1998
      %v2038 = vunpack.c.l.b16 %v1999
      %v2039 = vunpack.c.l.b16 %v2000
      %v2040 = vunpack.c.l.b16 %v2001
      %v2041 = vunpack.c.l.b16 %v2002
      %v2042 = vunpack.c.l.b16 %v2003
      %v2043 = vpack.c.b16 %v2028, %v2027
      %v2044 = vpack.c.b16 %v2030, %v2029
      %v2045 = vpack.c.b16 %v2032, %v2031
      %v2046 = vpack.c.b16 %v2034, %v2033
      %v2047 = vpack.c.b16 %v2036, %v2035
      %v2048 = vpack.c.b16 %v2038, %v2037
      %v2049 = vpack.c.b16 %v2040, %v2039
      %v2050 = vpack.c.b16 %v2042, %v2041
      %2059 = vmatprep.subr.bf16.mxu0 0
      %2060 = vmatpush1.bf16.msra.mxu0 %v2043
      %2061 = vmatprep.subr.bf16.mxu0 0
      %2062 = vmatpush1.bf16.msra.mxu0 %v2044
      %2063 = vmatprep.subr.bf16.mxu0 0
      %2064 = vmatpush1.bf16.msra.mxu0 %v2045
      %2065 = vmatprep.subr.bf16.mxu0 0
      %2066 = vmatpush1.bf16.msra.mxu0 %v2046
      %2067 = vmatprep.subr.bf16.mxu0 0
      %2068 = vmatpush1.bf16.msra.mxu0 %v2047
      %2069 = vmatprep.subr.bf16.mxu0 0
      %2070 = vmatpush1.bf16.msra.mxu0 %v2048
      %2071 = vmatprep.subr.bf16.mxu0 0
      %2072 = vmatpush1.bf16.msra.mxu0 %v2049
      %2073 = vmatprep.subr.bf16.mxu0 0
      %2074 = vmatpush1.bf16.msra.mxu0 %v2050
      %2075 = vmatprep.subr.bf16.mxu0 0
      %2076 = vmatpush1.bf16.msra.mxu0 0
      %2077 = vmatprep.subr.bf16.mxu0 0
      %2078 = vmatpush1.bf16.msra.mxu0 0
      %2079 = vmatprep.subr.bf16.mxu0 0
      %2080 = vmatpush1.bf16.msra.mxu0 0
      %2081 = vmatprep.subr.bf16.mxu0 0
      %2082 = vmatpush1.bf16.msra.mxu0 0
      %2083 = vmatprep.subr.bf16.mxu0 0
      %2084 = vmatpush1.bf16.msra.mxu0 0
      %2085 = vmatprep.subr.bf16.mxu0 0
      %2086 = vmatpush1.bf16.msra.mxu0 0
      %2087 = vmatprep.subr.bf16.mxu0 0
      %2088 = vmatpush1.bf16.msra.mxu0 0
      %2089 = vmatprep.subr.bf16.mxu0 0
      %2090 = vmatpush1.bf16.msra.mxu0 0
      %2091 = vmatprep.mubr.bf16.mxu0 0
      %2092 = vmatmul.mubr.bf16.gmra.mrb[0].mxu0 %v1980
      %v2093 = vpop.f32.mrb[0].mxu0
      %v2094 = vadd.f32 %v2009, %v2093
      %v2095 = vpop.f32.mrb[0].mxu0
      %v2096 = vpop.f32.mrb[0].mxu0
      %v2097 = vadd.f32 %v2009, %v2096
      %v2098 = vpop.f32.mrb[0].mxu0
      %2099 = vmatprep.mubr.bf16.mxu0 0
      %2100 = vmatmul.mubr.bf16.gmra.mrb[0].mxu0 %v1981
      %v2101 = vpop.f32.mrb[0].mxu0
      %v2102 = vadd.f32 %v2009, %v2101
      %v2103 = vpop.f32.mrb[0].mxu0
      %v2104 = vpop.f32.mrb[0].mxu0
      %v2105 = vadd.f32 %v2009, %v2104
      %v2106 = vpop.f32.mrb[0].mxu0
      %2107 = vmatprep.mubr.bf16.mxu0 0
      %2108 = vmatmul.mubr.bf16.gmra.mrb[0].mxu0 %v1982
      %v2109 = vpop.f32.mrb[0].mxu0
      %v2110 = vadd.f32 %v2009, %v2109
      %v2111 = vpop.f32.mrb[0].mxu0
      %v2112 = vpop.f32.mrb[0].mxu0
      %v2113 = vadd.f32 %v2009, %v2112
      %v2114 = vpop.f32.mrb[0].mxu0
      %2115 = vmatprep.mubr.bf16.mxu0 0
      %2116 = vmatmul.mubr.bf16.gmra.mrb[0].mxu0 %v1983
      %v2117 = vpop.f32.mrb[0].mxu0
      %v2118 = vadd.f32 %v2009, %v2117
      %v2119 = vpop.f32.mrb[0].mxu0
      %v2120 = vpop.f32.mrb[0].mxu0
      %v2121 = vadd.f32 %v2009, %v2120
      %v2122 = vpop.f32.mrb[0].mxu0
      %2123 = vmatprep.mubr.bf16.mxu0 0
      %2124 = vmatmul.mubr.bf16.gmra.mrb[0].mxu0 %v1984
      %v2125 = vpop.f32.mrb[0].mxu0
      %v2126 = vadd.f32 %v2009, %v2125
      %v2127 = vpop.f32.mrb[0].mxu0
      %v2128 = vpop.f32.mrb[0].mxu0
      %v2129 = vadd.f32 %v2009, %v2128
      %v2130 = vpop.f32.mrb[0].mxu0
      %2131 = vmatprep.mubr.bf16.mxu0 0
      %2132 = vmatmul.mubr.bf16.gmra.mrb[0].mxu0 %v1985
      %v2133 = vpop.f32.mrb[0].mxu0
      %v2134 = vadd.f32 %v2009, %v2133
      %v2135 = vpop.f32.mrb[0].mxu0
      %v2136 = vpop.f32.mrb[0].mxu0
      %v2137 = vadd.f32 %v2009, %v2136
      %v2138 = vpop.f32.mrb[0].mxu0
      %2139 = vmatprep.mubr.bf16.mxu0 0
      %2140 = vmatmul.mubr.bf16.gmra.mrb[0].mxu0 %v1986
      %v2141 = vpop.f32.mrb[0].mxu0
      %v2142 = vadd.f32 %v2009, %v2141
      %v2143 = vpop.f32.mrb[0].mxu0
      %v2144 = vpop.f32.mrb[0].mxu0
      %v2145 = vadd.f32 %v2009, %v2144
      %v2146 = vpop.f32.mrb[0].mxu0
      %2147 = vmatprep.mubr.bf16.mxu0 0
      %2148 = vmatmul.mubr.bf16.gmra.mrb[0].mxu0 %v1987
      %v2149 = vpop.f32.mrb[0].mxu0
      %v2150 = vadd.f32 %v2009, %v2149
      %v2151 = vpop.f32.mrb[0].mxu0
      %v2152 = vpop.f32.mrb[0].mxu0
      %v2153 = vadd.f32 %v2009, %v2152
      %v2154 = vpop.f32.mrb[0].mxu0
      %2155 = vdwg.mxu0
      %v2156 = vunpack.c.l.bf16 %v483
      %v2157 = vunpack.c.l.bf16 %v484
      %v2158 = vunpack.c.l.bf16 %v485
      %v2159 = vunpack.c.l.bf16 %v486
      %v2160 = vunpack.c.l.bf16 %v487
      %v2161 = vunpack.c.l.bf16 %v488
      %v2162 = vunpack.c.l.bf16 %v489
      %v2163 = vunpack.c.l.bf16 %v490
      %v2164 = vunpack.c.l.bf16 %v491
      %v2165 = vunpack.c.l.bf16 %v492
      %v2166 = vunpack.c.l.bf16 %v493
      %v2167 = vunpack.c.l.bf16 %v494
      %v2168 = vunpack.c.l.bf16 %v495
      %v2169 = vunpack.c.l.bf16 %v496
      %v2170 = vunpack.c.l.bf16 %v497
      %v2171 = vunpack.c.l.bf16 %v498
      %v2172 = vadd.f32 %v2094, %v2156
      %v2173 = vadd.f32 %v2097, %v2157
      %v2174 = vadd.f32 %v2102, %v2158
      %v2175 = vadd.f32 %v2105, %v2159
      %v2176 = vadd.f32 %v2110, %v2160
      %v2177 = vadd.f32 %v2113, %v2161
      %v2178 = vadd.f32 %v2118, %v2162
      %v2179 = vadd.f32 %v2121, %v2163
      %v2180 = vadd.f32 %v2126, %v2164
      %v2181 = vadd.f32 %v2129, %v2165
      %v2182 = vadd.f32 %v2134, %v2166
      %v2183 = vadd.f32 %v2137, %v2167
      %v2184 = vadd.f32 %v2142, %v2168
      %v2185 = vadd.f32 %v2145, %v2169
      %v2186 = vadd.f32 %v2150, %v2170
      %v2187 = vadd.f32 %v2153, %v2171
      %v2188 = vld [vmem:[%s6] sm:$0x1]
      %v2189 = vld [vmem:[%s7] sm:$0x1]
      %2190 = vadd.xlane.f32.xlu0 %v2172
      %v2191 = vpop.xlane.xlu0 %2190
      %2192 = vadd.xlane.f32.xlu0 %v2173
      %v2193 = vpop.xlane.xlu0 %2192
      %2194 = vadd.xlane.f32.xlu0 %v2174
      %v2195 = vpop.xlane.xlu0 %2194
      %2196 = vadd.xlane.f32.xlu0 %v2175
      %v2197 = vpop.xlane.xlu0 %2196
      %2198 = vadd.xlane.f32.xlu0 %v2176
      %v2199 = vpop.xlane.xlu0 %2198
      %2200 = vadd.xlane.f32.xlu0 %v2177
      %v2201 = vpop.xlane.xlu0 %2200
      %2202 = vadd.xlane.f32.xlu0 %v2178
      %v2203 = vpop.xlane.xlu0 %2202
      %2204 = vadd.xlane.f32.xlu0 %v2179
      %v2205 = vpop.xlane.xlu0 %2204
      %2206 = vadd.xlane.f32.xlu0 %v2180
      %v2207 = vpop.xlane.xlu0 %2206
      %2208 = vadd.xlane.f32.xlu0 %v2181
      %v2209 = vpop.xlane.xlu0 %2208
      %2210 = vadd.xlane.f32.xlu0 %v2182
      %v2211 = vpop.xlane.xlu0 %2210
      %2212 = vadd.xlane.f32.xlu0 %v2183
      %v2213 = vpop.xlane.xlu0 %2212
      %2214 = vadd.xlane.f32.xlu0 %v2184
      %v2215 = vpop.xlane.xlu0 %2214
      %2216 = vadd.xlane.f32.xlu0 %v2185
      %v2217 = vpop.xlane.xlu0 %2216
      %2218 = vadd.xlane.f32.xlu0 %v2186
      %v2219 = vpop.xlane.xlu0 %2218
      %2220 = vadd.xlane.f32.xlu0 %v2187
      %v2221 = vpop.xlane.xlu0 %2220
      %v2222 = vrcp.pop 128.0
      %v2223 = vmul.f32 %v2191, %v2222
      %v2224 = vmul.f32 %v2193, %v2222
      %v2225 = vmul.f32 %v2195, %v2222
      %v2226 = vmul.f32 %v2197, %v2222
      %v2227 = vmul.f32 %v2199, %v2222
      %v2228 = vmul.f32 %v2201, %v2222
      %v2229 = vmul.f32 %v2203, %v2222
      %v2230 = vmul.f32 %v2205, %v2222
      %v2231 = vmul.f32 %v2207, %v2222
      %v2232 = vmul.f32 %v2209, %v2222
      %v2233 = vmul.f32 %v2211, %v2222
      %v2234 = vmul.f32 %v2213, %v2222
      %v2235 = vmul.f32 %v2215, %v2222
      %v2236 = vmul.f32 %v2217, %v2222
      %v2237 = vmul.f32 %v2219, %v2222
      %v2238 = vmul.f32 %v2221, %v2222
      %v2239 = vsub.f32 %v2172, %v2223
      %v2240 = vsub.f32 %v2173, %v2224
      %v2241 = vsub.f32 %v2174, %v2225
      %v2242 = vsub.f32 %v2175, %v2226
      %v2243 = vsub.f32 %v2176, %v2227
      %v2244 = vsub.f32 %v2177, %v2228
      %v2245 = vsub.f32 %v2178, %v2229
      %v2246 = vsub.f32 %v2179, %v2230
      %v2247 = vsub.f32 %v2180, %v2231
      %v2248 = vsub.f32 %v2181, %v2232
      %v2249 = vsub.f32 %v2182, %v2233
      %v2250 = vsub.f32 %v2183, %v2234
      %v2251 = vsub.f32 %v2184, %v2235
      %v2252 = vsub.f32 %v2185, %v2236
      %v2253 = vsub.f32 %v2186, %v2237
      %v2254 = vsub.f32 %v2187, %v2238
      %v2255 = vmul.f32 %v2239, %v2239
      %v2256 = vmul.f32 %v2240, %v2240
      %v2257 = vmul.f32 %v2241, %v2241
      %v2258 = vmul.f32 %v2242, %v2242
      %v2259 = vmul.f32 %v2243, %v2243
      %v2260 = vmul.f32 %v2244, %v2244
      %v2261 = vmul.f32 %v2245, %v2245
      %v2262 = vmul.f32 %v2246, %v2246
      %v2263 = vmul.f32 %v2247, %v2247
      %v2264 = vmul.f32 %v2248, %v2248
      %v2265 = vmul.f32 %v2249, %v2249
      %v2266 = vmul.f32 %v2250, %v2250
      %v2267 = vmul.f32 %v2251, %v2251
      %v2268 = vmul.f32 %v2252, %v2252
      %v2269 = vmul.f32 %v2253, %v2253
      %v2270 = vmul.f32 %v2254, %v2254
      %2271 = vadd.xlane.f32.xlu0 %v2255
      %v2272 = vpop.xlane.xlu0 %2271
      %2273 = vadd.xlane.f32.xlu0 %v2256
      %v2274 = vpop.xlane.xlu0 %2273
      %2275 = vadd.xlane.f32.xlu0 %v2257
      %v2276 = vpop.xlane.xlu0 %2275
      %2277 = vadd.xlane.f32.xlu0 %v2258
      %v2278 = vpop.xlane.xlu0 %2277
      %2279 = vadd.xlane.f32.xlu0 %v2259
      %v2280 = vpop.xlane.xlu0 %2279
      %2281 = vadd.xlane.f32.xlu0 %v2260
      %v2282 = vpop.xlane.xlu0 %2281
      %2283 = vadd.xlane.f32.xlu0 %v2261
      %v2284 = vpop.xlane.xlu0 %2283
      %2285 = vadd.xlane.f32.xlu0 %v2262
      %v2286 = vpop.xlane.xlu0 %2285
      %2287 = vadd.xlane.f32.xlu0 %v2263
      %v2288 = vpop.xlane.xlu0 %2287
      %2289 = vadd.xlane.f32.xlu0 %v2264
      %v2290 = vpop.xlane.xlu0 %2289
      %2291 = vadd.xlane.f32.xlu0 %v2265
      %v2292 = vpop.xlane.xlu0 %2291
      %2293 = vadd.xlane.f32.xlu0 %v2266
      %v2294 = vpop.xlane.xlu0 %2293
      %2295 = vadd.xlane.f32.xlu0 %v2267
      %v2296 = vpop.xlane.xlu0 %2295
      %2297 = vadd.xlane.f32.xlu0 %v2268
      %v2298 = vpop.xlane.xlu0 %2297
      %2299 = vadd.xlane.f32.xlu0 %v2269
      %v2300 = vpop.xlane.xlu0 %2299
      %2301 = vadd.xlane.f32.xlu0 %v2270
      %v2302 = vpop.xlane.xlu0 %2301
      %v2303 = vmul.f32 %v2272, %v2222
      %v2304 = vmul.f32 %v2274, %v2222
      %v2305 = vmul.f32 %v2276, %v2222
      %v2306 = vmul.f32 %v2278, %v2222
      %v2307 = vmul.f32 %v2280, %v2222
      %v2308 = vmul.f32 %v2282, %v2222
      %v2309 = vmul.f32 %v2284, %v2222
      %v2310 = vmul.f32 %v2286, %v2222
      %v2311 = vmul.f32 %v2288, %v2222
      %v2312 = vmul.f32 %v2290, %v2222
      %v2313 = vmul.f32 %v2292, %v2222
      %v2314 = vmul.f32 %v2294, %v2222
      %v2315 = vmul.f32 %v2296, %v2222
      %v2316 = vmul.f32 %v2298, %v2222
      %v2317 = vmul.f32 %v2300, %v2222
      %v2318 = vmul.f32 %v2302, %v2222
      %v2319 = vadd.f32 %v2303, 1e-05
      %v2320 = vadd.f32 %v2304, 1e-05
      %v2321 = vadd.f32 %v2305, 1e-05
      %v2322 = vadd.f32 %v2306, 1e-05
      %v2323 = vadd.f32 %v2307, 1e-05
      %v2324 = vadd.f32 %v2308, 1e-05
      %v2325 = vadd.f32 %v2309, 1e-05
      %v2326 = vadd.f32 %v2310, 1e-05
      %v2327 = vadd.f32 %v2311, 1e-05
      %v2328 = vadd.f32 %v2312, 1e-05
      %v2329 = vadd.f32 %v2313, 1e-05
      %v2330 = vadd.f32 %v2314, 1e-05
      %v2331 = vadd.f32 %v2315, 1e-05
      %v2332 = vadd.f32 %v2316, 1e-05
      %v2333 = vadd.f32 %v2317, 1e-05
      %v2334 = vadd.f32 %v2318, 1e-05
      %v2335 = vrsqrt.pop %v2319
      %v2336 = vrsqrt.pop %v2320
      %v2337 = vrsqrt.pop %v2321
      %v2338 = vrsqrt.pop %v2322
      %v2339 = vrsqrt.pop %v2323
      %v2340 = vrsqrt.pop %v2324
      %v2341 = vrsqrt.pop %v2325
      %v2342 = vrsqrt.pop %v2326
      %v2343 = vrsqrt.pop %v2327
      %v2344 = vrsqrt.pop %v2328
      %v2345 = vrsqrt.pop %v2329
      %v2346 = vrsqrt.pop %v2330
      %v2347 = vrsqrt.pop %v2331
      %v2348 = vrsqrt.pop %v2332
      %v2349 = vrsqrt.pop %v2333
      %v2350 = vrsqrt.pop %v2334
      %v2351 = vmul.f32 %v2239, %v2335
      %v2352 = vmul.f32 %v2240, %v2336
      %v2353 = vmul.f32 %v2241, %v2337
      %v2354 = vmul.f32 %v2242, %v2338
      %v2355 = vmul.f32 %v2243, %v2339
      %v2356 = vmul.f32 %v2244, %v2340
      %v2357 = vmul.f32 %v2245, %v2341
      %v2358 = vmul.f32 %v2246, %v2342
      %v2359 = vmul.f32 %v2247, %v2343
      %v2360 = vmul.f32 %v2248, %v2344
      %v2361 = vmul.f32 %v2249, %v2345
      %v2362 = vmul.f32 %v2250, %v2346
      %v2363 = vmul.f32 %v2251, %v2347
      %v2364 = vmul.f32 %v2252, %v2348
      %v2365 = vmul.f32 %v2253, %v2349
      %v2366 = vmul.f32 %v2254, %v2350
      %v2368 = vlaneseq
      %v2369 = vshrl.u32 %v2368, 7
      %v2370 = vsub.s32 0, %v2369
      %v2371 = vrot.slane %v2188, %v2370
      %v2373 = vmul.f32 %v2351, %v2371
      %v2374 = vmul.f32 %v2352, %v2371
      %v2375 = vmul.f32 %v2353, %v2371
      %v2376 = vmul.f32 %v2354, %v2371
      %v2377 = vmul.f32 %v2355, %v2371
      %v2378 = vmul.f32 %v2356, %v2371
      %v2379 = vmul.f32 %v2357, %v2371
      %v2380 = vmul.f32 %v2358, %v2371
      %v2381 = vmul.f32 %v2359, %v2371
      %v2382 = vmul.f32 %v2360, %v2371
      %v2383 = vmul.f32 %v2361, %v2371
      %v2384 = vmul.f32 %v2362, %v2371
      %v2385 = vmul.f32 %v2363, %v2371
      %v2386 = vmul.f32 %v2364, %v2371
      %v2387 = vmul.f32 %v2365, %v2371
      %v2388 = vmul.f32 %v2366, %v2371
      %v2390 = vlaneseq
      %v2391 = vshrl.u32 %v2390, 7
      %v2392 = vsub.s32 0, %v2391
      %v2393 = vrot.slane %v2189, %v2392
      %v2395 = vadd.f32 %v2373, %v2393
      %v2396 = vadd.f32 %v2374, %v2393
      %v2397 = vadd.f32 %v2375, %v2393
      %v2398 = vadd.f32 %v2376, %v2393
      %v2399 = vadd.f32 %v2377, %v2393
      %v2400 = vadd.f32 %v2378, %v2393
      %v2401 = vadd.f32 %v2379, %v2393
      %v2402 = vadd.f32 %v2380, %v2393
      %v2403 = vadd.f32 %v2381, %v2393
      %v2404 = vadd.f32 %v2382, %v2393
      %v2405 = vadd.f32 %v2383, %v2393
      %v2406 = vadd.f32 %v2384, %v2393
      %v2407 = vadd.f32 %v2385, %v2393
      %v2408 = vadd.f32 %v2386, %v2393
      %v2409 = vadd.f32 %v2387, %v2393
      %v2410 = vadd.f32 %v2388, %v2393
      %v2411 = vpack.c.bf16 %v2396, %v2395
      %v2412 = vpack.c.bf16 %v2398, %v2397
      %v2413 = vpack.c.bf16 %v2400, %v2399
      %v2414 = vpack.c.bf16 %v2402, %v2401
      %v2415 = vpack.c.bf16 %v2404, %v2403
      %v2416 = vpack.c.bf16 %v2406, %v2405
      %v2417 = vpack.c.bf16 %v2408, %v2407
      %v2418 = vpack.c.bf16 %v2410, %v2409
      %v2419 = vld [vmem:[%s8] sm:$0xff]
      %v2420 = vld [vmem:[%s8 + $0x8] sm:$0xff]
      %v2421 = vld [vmem:[%s8 + $0x10] sm:$0xff]
      %v2422 = vld [vmem:[%s8 + $0x18] sm:$0xff]
      %v2423 = vld [vmem:[%s8 + $0x20] sm:$0xff]
      %v2424 = vld [vmem:[%s8 + $0x28] sm:$0xff]
      %v2425 = vld [vmem:[%s8 + $0x30] sm:$0xff]
      %v2426 = vld [vmem:[%s8 + $0x38] sm:$0xff]
      %v2427 = vld [vmem:[%s8 + $0x40] sm:$0xff]
      %v2428 = vld [vmem:[%s8 + $0x48] sm:$0xff]
      %v2429 = vld [vmem:[%s8 + $0x50] sm:$0xff]
      %v2430 = vld [vmem:[%s8 + $0x58] sm:$0xff]
      %v2431 = vld [vmem:[%s8 + $0x60] sm:$0xff]
      %v2432 = vld [vmem:[%s8 + $0x68] sm:$0xff]
      %v2433 = vld [vmem:[%s8 + $0x70] sm:$0xff]
      %v2434 = vld [vmem:[%s8 + $0x78] sm:$0xff]
      %v2435 = vld [vmem:[%s8 + $0x80] sm:$0xff]
      %v2436 = vld [vmem:[%s8 + $0x88] sm:$0xff]
      %v2437 = vld [vmem:[%s8 + $0x90] sm:$0xff]
      %v2438 = vld [vmem:[%s8 + $0x98] sm:$0xff]
      %v2439 = vld [vmem:[%s8 + $0xa0] sm:$0xff]
      %v2440 = vld [vmem:[%s8 + $0xa8] sm:$0xff]
      %v2441 = vld [vmem:[%s8 + $0xb0] sm:$0xff]
      %v2442 = vld [vmem:[%s8 + $0xb8] sm:$0xff]
      %v2443 = vld [vmem:[%s8 + $0xc0] sm:$0xff]
      %v2444 = vld [vmem:[%s8 + $0xc8] sm:$0xff]
      %v2445 = vld [vmem:[%s8 + $0xd0] sm:$0xff]
      %v2446 = vld [vmem:[%s8 + $0xd8] sm:$0xff]
      %v2447 = vld [vmem:[%s8 + $0xe0] sm:$0xff]
      %v2448 = vld [vmem:[%s8 + $0xe8] sm:$0xff]
      %v2449 = vld [vmem:[%s8 + $0xf0] sm:$0xff]
      %v2450 = vld [vmem:[%s8 + $0xf8] sm:$0xff]
      %v2451 = vld [vmem:[%s9] sm:$0xf]
      %v2453 = vlaneseq
      %v2454 = vshrl.u32 %v2453, 7
      %v2455 = vsub.s32 0, %v2454
      %v2456 = vrot.slane %v2451, %v2455
      %v2457 = vlaneseq
      %v2458 = vshrl.u32 %v2457, 7
      %v2459 = vsub.s32 1, %v2458
      %v2460 = vrot.slane %v2451, %v2459
      %v2461 = vlaneseq
      %v2462 = vshrl.u32 %v2461, 7
      %v2463 = vsub.s32 2, %v2462
      %v2464 = vrot.slane %v2451, %v2463
      %v2465 = vlaneseq
      %v2466 = vshrl.u32 %v2465, 7
      %v2467 = vsub.s32 3, %v2466
      %v2468 = vrot.slane %v2451, %v2467
      %v2505 = vunpack.c.l.b16 %v2419
      %v2506 = vunpack.c.h.b16 %v2419
      %v2507 = vunpack.c.l.b16 %v2420
      %v2508 = vunpack.c.h.b16 %v2420
      %v2509 = vunpack.c.l.b16 %v2421
      %v2510 = vunpack.c.h.b16 %v2421
      %v2511 = vunpack.c.l.b16 %v2422
      %v2512 = vunpack.c.h.b16 %v2422
      %v2513 = vunpack.c.l.b16 %v2423
      %v2514 = vunpack.c.h.b16 %v2423
      %v2515 = vunpack.c.l.b16 %v2424
      %v2516 = vunpack.c.h.b16 %v2424
      %v2517 = vunpack.c.l.b16 %v2425
      %v2518 = vunpack.c.h.b16 %v2425
      %v2519 = vunpack.c.l.b16 %v2426
      %v2520 = vunpack.c.h.b16 %v2426
      %v2521 = vunpack.c.l.b16 %v2427
      %v2522 = vunpack.c.h.b16 %v2427
      %v2523 = vunpack.c.l.b16 %v2428
      %v2524 = vunpack.c.h.b16 %v2428
      %v2525 = vunpack.c.l.b16 %v2429
      %v2526 = vunpack.c.h.b16 %v2429
      %v2527 = vunpack.c.l.b16 %v2430
      %v2528 = vunpack.c.h.b16 %v2430
      %v2529 = vunpack.c.l.b16 %v2431
      %v2530 = vunpack.c.h.b16 %v2431
      %v2531 = vunpack.c.l.b16 %v2432
      %v2532 = vunpack.c.h.b16 %v2432
      %v2533 = vunpack.c.l.b16 %v2433
      %v2534 = vunpack.c.h.b16 %v2433
      %v2535 = vunpack.c.l.b16 %v2434
      %v2536 = vunpack.c.h.b16 %v2434
      %v2537 = vunpack.c.l.b16 %v2435
      %v2538 = vunpack.c.h.b16 %v2435
      %v2539 = vunpack.c.l.b16 %v2436
      %v2540 = vunpack.c.h.b16 %v2436
      %v2541 = vunpack.c.l.b16 %v2437
      %v2542 = vunpack.c.h.b16 %v2437
      %v2543 = vunpack.c.l.b16 %v2438
      %v2544 = vunpack.c.h.b16 %v2438
      %v2545 = vunpack.c.l.b16 %v2439
      %v2546 = vunpack.c.h.b16 %v2439
      %v2547 = vunpack.c.l.b16 %v2440
      %v2548 = vunpack.c.h.b16 %v2440
      %v2549 = vunpack.c.l.b16 %v2441
      %v2550 = vunpack.c.h.b16 %v2441
      %v2551 = vunpack.c.l.b16 %v2442
      %v2552 = vunpack.c.h.b16 %v2442
      %v2553 = vunpack.c.l.b16 %v2443
      %v2554 = vunpack.c.h.b16 %v2443
      %v2555 = vunpack.c.l.b16 %v2444
      %v2556 = vunpack.c.h.b16 %v2444
      %v2557 = vunpack.c.l.b16 %v2445
      %v2558 = vunpack.c.h.b16 %v2445
      %v2559 = vunpack.c.l.b16 %v2446
      %v2560 = vunpack.c.h.b16 %v2446
      %v2561 = vunpack.c.l.b16 %v2447
      %v2562 = vunpack.c.h.b16 %v2447
      %v2563 = vunpack.c.l.b16 %v2448
      %v2564 = vunpack.c.h.b16 %v2448
      %v2565 = vunpack.c.l.b16 %v2449
      %v2566 = vunpack.c.h.b16 %v2449
      %v2567 = vunpack.c.l.b16 %v2450
      %v2568 = vunpack.c.h.b16 %v2450
      %v2569 = vpack.c.b16 %v2509, %v2505
      %v2570 = vpack.c.b16 %v2510, %v2506
      %v2571 = vpack.c.b16 %v2511, %v2507
      %v2572 = vpack.c.b16 %v2512, %v2508
      %v2573 = vpack.c.b16 %v2517, %v2513
      %v2574 = vpack.c.b16 %v2518, %v2514
      %v2575 = vpack.c.b16 %v2519, %v2515
      %v2576 = vpack.c.b16 %v2520, %v2516
      %v2577 = vpack.c.b16 %v2525, %v2521
      %v2578 = vpack.c.b16 %v2526, %v2522
      %v2579 = vpack.c.b16 %v2527, %v2523
      %v2580 = vpack.c.b16 %v2528, %v2524
      %v2581 = vpack.c.b16 %v2533, %v2529
      %v2582 = vpack.c.b16 %v2534, %v2530
      %v2583 = vpack.c.b16 %v2535, %v2531
      %v2584 = vpack.c.b16 %v2536, %v2532
      %v2585 = vpack.c.b16 %v2541, %v2537
      %v2586 = vpack.c.b16 %v2542, %v2538
      %v2587 = vpack.c.b16 %v2543, %v2539
      %v2588 = vpack.c.b16 %v2544, %v2540
      %v2589 = vpack.c.b16 %v2549, %v2545
      %v2590 = vpack.c.b16 %v2550, %v2546
      %v2591 = vpack.c.b16 %v2551, %v2547
      %v2592 = vpack.c.b16 %v2552, %v2548
      %v2593 = vpack.c.b16 %v2557, %v2553
      %v2594 = vpack.c.b16 %v2558, %v2554
      %v2595 = vpack.c.b16 %v2559, %v2555
      %v2596 = vpack.c.b16 %v2560, %v2556
      %v2597 = vpack.c.b16 %v2565, %v2561
      %v2598 = vpack.c.b16 %v2566, %v2562
      %v2599 = vpack.c.b16 %v2567, %v2563
      %v2600 = vpack.c.b16 %v2568, %v2564
      %2633 = vmatprep.subr.bf16.mxu0 %v2570
      %2634 = vmatpush1.bf16.msra.mxu0 %v2569
      %2635 = vmatprep.subr.bf16.mxu0 %v2574
      %2636 = vmatpush1.bf16.msra.mxu0 %v2573
      %2637 = vmatprep.subr.bf16.mxu0 %v2578
      %2638 = vmatpush1.bf16.msra.mxu0 %v2577
      %2639 = vmatprep.subr.bf16.mxu0 %v2582
      %2640 = vmatpush1.bf16.msra.mxu0 %v2581
      %2641 = vmatprep.subr.bf16.mxu0 %v2586
      %2642 = vmatpush1.bf16.msra.mxu0 %v2585
      %2643 = vmatprep.subr.bf16.mxu0 %v2590
      %2644 = vmatpush1.bf16.msra.mxu0 %v2589
      %2645 = vmatprep.subr.bf16.mxu0 %v2594
      %2646 = vmatpush1.bf16.msra.mxu0 %v2593
      %2647 = vmatprep.subr.bf16.mxu0 %v2598
      %2648 = vmatpush1.bf16.msra.mxu0 %v2597
      %2649 = vmatprep.subr.bf16.mxu0 0
      %2650 = vmatpush1.bf16.msra.mxu0 0
      %2651 = vmatprep.subr.bf16.mxu0 0
      %2652 = vmatpush1.bf16.msra.mxu0 0
      %2653 = vmatprep.subr.bf16.mxu0 0
      %2654 = vmatpush1.bf16.msra.mxu0 0
      %2655 = vmatprep.subr.bf16.mxu0 0
      %2656 = vmatpush1.bf16.msra.mxu0 0
      %2657 = vmatprep.subr.bf16.mxu0 0
      %2658 = vmatpush1.bf16.msra.mxu0 0
      %2659 = vmatprep.subr.bf16.mxu0 0
      %2660 = vmatpush1.bf16.msra.mxu0 0
      %2661 = vmatprep.subr.bf16.mxu0 0
      %2662 = vmatpush1.bf16.msra.mxu0 0
      %2663 = vmatprep.subr.bf16.mxu0 0
      %2664 = vmatpush1.bf16.msra.mxu0 0
      %2665 = vmatprep.mubr.bf16.mxu0 0
      %2666 = vmatmul.mubr.bf16.gmra.mrb[0].mxu0 %v2411
      %v2667 = vpop.f32.mrb[0].mxu0
      %v2668 = vadd.f32 %v2456, %v2667
      %v2669 = vpop.f32.mrb[0].mxu0
      %v2670 = vadd.f32 %v2460, %v2669
      %v2671 = vpop.f32.mrb[0].mxu0
      %v2672 = vadd.f32 %v2456, %v2671
      %v2673 = vpop.f32.mrb[0].mxu0
      %v2674 = vadd.f32 %v2460, %v2673
      %2675 = vmatprep.mubr.bf16.mxu0 0
      %2676 = vmatmul.mubr.bf16.gmra.mrb[0].mxu0 %v2412
      %v2677 = vpop.f32.mrb[0].mxu0
      %v2678 = vadd.f32 %v2456, %v2677
      %v2679 = vpop.f32.mrb[0].mxu0
      %v2680 = vadd.f32 %v2460, %v2679
      %v2681 = vpop.f32.mrb[0].mxu0
      %v2682 = vadd.f32 %v2456, %v2681
      %v2683 = vpop.f32.mrb[0].mxu0
      %v2684 = vadd.f32 %v2460, %v2683
      %2685 = vmatprep.mubr.bf16.mxu0 0
      %2686 = vmatmul.mubr.bf16.gmra.mrb[0].mxu0 %v2413
      %v2687 = vpop.f32.mrb[0].mxu0
      %v2688 = vadd.f32 %v2456, %v2687
      %v2689 = vpop.f32.mrb[0].mxu0
      %v2690 = vadd.f32 %v2460, %v2689
      %v2691 = vpop.f32.mrb[0].mxu0
      %v2692 = vadd.f32 %v2456, %v2691
      %v2693 = vpop.f32.mrb[0].mxu0
      %v2694 = vadd.f32 %v2460, %v2693
      %2695 = vmatprep.mubr.bf16.mxu0 0
      %2696 = vmatmul.mubr.bf16.gmra.mrb[0].mxu0 %v2414
      %v2697 = vpop.f32.mrb[0].mxu0
      %v2698 = vadd.f32 %v2456, %v2697
      %v2699 = vpop.f32.mrb[0].mxu0
      %v2700 = vadd.f32 %v2460, %v2699
      %v2701 = vpop.f32.mrb[0].mxu0
      %v2702 = vadd.f32 %v2456, %v2701
      %v2703 = vpop.f32.mrb[0].mxu0
      %v2704 = vadd.f32 %v2460, %v2703
      %2705 = vmatprep.mubr.bf16.mxu0 0
      %2706 = vmatmul.mubr.bf16.gmra.mrb[0].mxu0 %v2415
      %v2707 = vpop.f32.mrb[0].mxu0
      %v2708 = vadd.f32 %v2456, %v2707
      %v2709 = vpop.f32.mrb[0].mxu0
      %v2710 = vadd.f32 %v2460, %v2709
      %v2711 = vpop.f32.mrb[0].mxu0
      %v2712 = vadd.f32 %v2456, %v2711
      %v2713 = vpop.f32.mrb[0].mxu0
      %v2714 = vadd.f32 %v2460, %v2713
      %2715 = vmatprep.mubr.bf16.mxu0 0
      %2716 = vmatmul.mubr.bf16.gmra.mrb[0].mxu0 %v2416
      %v2717 = vpop.f32.mrb[0].mxu0
      %v2718 = vadd.f32 %v2456, %v2717
      %v2719 = vpop.f32.mrb[0].mxu0
      %v2720 = vadd.f32 %v2460, %v2719
      %v2721 = vpop.f32.mrb[0].mxu0
      %v2722 = vadd.f32 %v2456, %v2721
      %v2723 = vpop.f32.mrb[0].mxu0
      %v2724 = vadd.f32 %v2460, %v2723
      %2725 = vmatprep.mubr.bf16.mxu0 0
      %2726 = vmatmul.mubr.bf16.gmra.mrb[0].mxu0 %v2417
      %v2727 = vpop.f32.mrb[0].mxu0
      %v2728 = vadd.f32 %v2456, %v2727
      %v2729 = vpop.f32.mrb[0].mxu0
      %v2730 = vadd.f32 %v2460, %v2729
      %v2731 = vpop.f32.mrb[0].mxu0
      %v2732 = vadd.f32 %v2456, %v2731
      %v2733 = vpop.f32.mrb[0].mxu0
      %v2734 = vadd.f32 %v2460, %v2733
      %2735 = vmatprep.mubr.bf16.mxu0 0
      %2736 = vmatmul.mubr.bf16.gmra.mrb[0].mxu0 %v2418
      %v2737 = vpop.f32.mrb[0].mxu0
      %v2738 = vadd.f32 %v2456, %v2737
      %v2739 = vpop.f32.mrb[0].mxu0
      %v2740 = vadd.f32 %v2460, %v2739
      %v2741 = vpop.f32.mrb[0].mxu0
      %v2742 = vadd.f32 %v2456, %v2741
      %v2743 = vpop.f32.mrb[0].mxu0
      %v2744 = vadd.f32 %v2460, %v2743
      %2745 = vdwg.mxu0
      %2746 = vmatprep.subr.bf16.mxu0 %v2572
      %2747 = vmatpush1.bf16.msra.mxu0 %v2571
      %2748 = vmatprep.subr.bf16.mxu0 %v2576
      %2749 = vmatpush1.bf16.msra.mxu0 %v2575
      %2750 = vmatprep.subr.bf16.mxu0 %v2580
      %2751 = vmatpush1.bf16.msra.mxu0 %v2579
      %2752 = vmatprep.subr.bf16.mxu0 %v2584
      %2753 = vmatpush1.bf16.msra.mxu0 %v2583
      %2754 = vmatprep.subr.bf16.mxu0 %v2588
      %2755 = vmatpush1.bf16.msra.mxu0 %v2587
      %2756 = vmatprep.subr.bf16.mxu0 %v2592
      %2757 = vmatpush1.bf16.msra.mxu0 %v2591
      %2758 = vmatprep.subr.bf16.mxu0 %v2596
      %2759 = vmatpush1.bf16.msra.mxu0 %v2595
      %2760 = vmatprep.subr.bf16.mxu0 %v2600
      %2761 = vmatpush1.bf16.msra.mxu0 %v2599
      %2762 = vmatprep.subr.bf16.mxu0 0
      %2763 = vmatpush1.bf16.msra.mxu0 0
      %2764 = vmatprep.subr.bf16.mxu0 0
      %2765 = vmatpush1.bf16.msra.mxu0 0
      %2766 = vmatprep.subr.bf16.mxu0 0
      %2767 = vmatpush1.bf16.msra.mxu0 0
      %2768 = vmatprep.subr.bf16.mxu0 0
      %2769 = vmatpush1.bf16.msra.mxu0 0
      %2770 = vmatprep.subr.bf16.mxu0 0
      %2771 = vmatpush1.bf16.msra.mxu0 0
      %2772 = vmatprep.subr.bf16.mxu0 0
      %2773 = vmatpush1.bf16.msra.mxu0 0
      %2774 = vmatprep.subr.bf16.mxu0 0
      %2775 = vmatpush1.bf16.msra.mxu0 0
      %2776 = vmatprep.subr.bf16.mxu0 0
      %2777 = vmatpush1.bf16.msra.mxu0 0
      %2778 = vmatprep.mubr.bf16.mxu0 0
      %2779 = vmatmul.mubr.bf16.gmra.mrb[0].mxu0 %v2411
      %v2780 = vpop.f32.mrb[0].mxu0
      %v2781 = vadd.f32 %v2464, %v2780
      %v2782 = vpop.f32.mrb[0].mxu0
      %v2783 = vadd.f32 %v2468, %v2782
      %v2784 = vpop.f32.mrb[0].mxu0
      %v2785 = vadd.f32 %v2464, %v2784
      %v2786 = vpop.f32.mrb[0].mxu0
      %v2787 = vadd.f32 %v2468, %v2786
      %2788 = vmatprep.mubr.bf16.mxu0 0
      %2789 = vmatmul.mubr.bf16.gmra.mrb[0].mxu0 %v2412
      %v2790 = vpop.f32.mrb[0].mxu0
      %v2791 = vadd.f32 %v2464, %v2790
      %v2792 = vpop.f32.mrb[0].mxu0
      %v2793 = vadd.f32 %v2468, %v2792
      %v2794 = vpop.f32.mrb[0].mxu0
      %v2795 = vadd.f32 %v2464, %v2794
      %v2796 = vpop.f32.mrb[0].mxu0
      %v2797 = vadd.f32 %v2468, %v2796
      %2798 = vmatprep.mubr.bf16.mxu0 0
      %2799 = vmatmul.mubr.bf16.gmra.mrb[0].mxu0 %v2413
      %v2800 = vpop.f32.mrb[0].mxu0
      %v2801 = vadd.f32 %v2464, %v2800
      %v2802 = vpop.f32.mrb[0].mxu0
      %v2803 = vadd.f32 %v2468, %v2802
      %v2804 = vpop.f32.mrb[0].mxu0
      %v2805 = vadd.f32 %v2464, %v2804
      %v2806 = vpop.f32.mrb[0].mxu0
      %v2807 = vadd.f32 %v2468, %v2806
      %2808 = vmatprep.mubr.bf16.mxu0 0
      %2809 = vmatmul.mubr.bf16.gmra.mrb[0].mxu0 %v2414
      %v2810 = vpop.f32.mrb[0].mxu0
      %v2811 = vadd.f32 %v2464, %v2810
      %v2812 = vpop.f32.mrb[0].mxu0
      %v2813 = vadd.f32 %v2468, %v2812
      %v2814 = vpop.f32.mrb[0].mxu0
      %v2815 = vadd.f32 %v2464, %v2814
      %v2816 = vpop.f32.mrb[0].mxu0
      %v2817 = vadd.f32 %v2468, %v2816
      %2818 = vmatprep.mubr.bf16.mxu0 0
      %2819 = vmatmul.mubr.bf16.gmra.mrb[0].mxu0 %v2415
      %v2820 = vpop.f32.mrb[0].mxu0
      %v2821 = vadd.f32 %v2464, %v2820
      %v2822 = vpop.f32.mrb[0].mxu0
      %v2823 = vadd.f32 %v2468, %v2822
      %v2824 = vpop.f32.mrb[0].mxu0
      %v2825 = vadd.f32 %v2464, %v2824
      %v2826 = vpop.f32.mrb[0].mxu0
      %v2827 = vadd.f32 %v2468, %v2826
      %2828 = vmatprep.mubr.bf16.mxu0 0
      %2829 = vmatmul.mubr.bf16.gmra.mrb[0].mxu0 %v2416
      %v2830 = vpop.f32.mrb[0].mxu0
      %v2831 = vadd.f32 %v2464, %v2830
      %v2832 = vpop.f32.mrb[0].mxu0
      %v2833 = vadd.f32 %v2468, %v2832
      %v2834 = vpop.f32.mrb[0].mxu0
      %v2835 = vadd.f32 %v2464, %v2834
      %v2836 = vpop.f32.mrb[0].mxu0
      %v2837 = vadd.f32 %v2468, %v2836
      %2838 = vmatprep.mubr.bf16.mxu0 0
      %2839 = vmatmul.mubr.bf16.gmra.mrb[0].mxu0 %v2417
      %v2840 = vpop.f32.mrb[0].mxu0
      %v2841 = vadd.f32 %v2464, %v2840
      %v2842 = vpop.f32.mrb[0].mxu0
      %v2843 = vadd.f32 %v2468, %v2842
      %v2844 = vpop.f32.mrb[0].mxu0
      %v2845 = vadd.f32 %v2464, %v2844
      %v2846 = vpop.f32.mrb[0].mxu0
      %v2847 = vadd.f32 %v2468, %v2846
      %2848 = vmatprep.mubr.bf16.mxu0 0
      %2849 = vmatmul.mubr.bf16.gmra.mrb[0].mxu0 %v2418
      %v2850 = vpop.f32.mrb[0].mxu0
      %v2851 = vadd.f32 %v2464, %v2850
      %v2852 = vpop.f32.mrb[0].mxu0
      %v2853 = vadd.f32 %v2468, %v2852
      %v2854 = vpop.f32.mrb[0].mxu0
      %v2855 = vadd.f32 %v2464, %v2854
      %v2856 = vpop.f32.mrb[0].mxu0
      %v2857 = vadd.f32 %v2468, %v2856
      %2858 = vdwg.mxu0
      %v2859 = vmul.f32 %v2668, %v2668
      %v2860 = vmul.f32 %v2670, %v2670
      %v2861 = vmul.f32 %v2781, %v2781
      %v2862 = vmul.f32 %v2783, %v2783
      %v2863 = vmul.f32 %v2672, %v2672
      %v2864 = vmul.f32 %v2674, %v2674
      %v2865 = vmul.f32 %v2785, %v2785
      %v2866 = vmul.f32 %v2787, %v2787
      %v2867 = vmul.f32 %v2678, %v2678
      %v2868 = vmul.f32 %v2680, %v2680
      %v2869 = vmul.f32 %v2791, %v2791
      %v2870 = vmul.f32 %v2793, %v2793
      %v2871 = vmul.f32 %v2682, %v2682
      %v2872 = vmul.f32 %v2684, %v2684
      %v2873 = vmul.f32 %v2795, %v2795
      %v2874 = vmul.f32 %v2797, %v2797
      %v2875 = vmul.f32 %v2688, %v2688
      %v2876 = vmul.f32 %v2690, %v2690
      %v2877 = vmul.f32 %v2801, %v2801
      %v2878 = vmul.f32 %v2803, %v2803
      %v2879 = vmul.f32 %v2692, %v2692
      %v2880 = vmul.f32 %v2694, %v2694
      %v2881 = vmul.f32 %v2805, %v2805
      %v2882 = vmul.f32 %v2807, %v2807
      %v2883 = vmul.f32 %v2698, %v2698
      %v2884 = vmul.f32 %v2700, %v2700
      %v2885 = vmul.f32 %v2811, %v2811
      %v2886 = vmul.f32 %v2813, %v2813
      %v2887 = vmul.f32 %v2702, %v2702
      %v2888 = vmul.f32 %v2704, %v2704
      %v2889 = vmul.f32 %v2815, %v2815
      %v2890 = vmul.f32 %v2817, %v2817
      %v2891 = vmul.f32 %v2708, %v2708
      %v2892 = vmul.f32 %v2710, %v2710
      %v2893 = vmul.f32 %v2821, %v2821
      %v2894 = vmul.f32 %v2823, %v2823
      %v2895 = vmul.f32 %v2712, %v2712
      %v2896 = vmul.f32 %v2714, %v2714
      %v2897 = vmul.f32 %v2825, %v2825
      %v2898 = vmul.f32 %v2827, %v2827
      %v2899 = vmul.f32 %v2718, %v2718
      %v2900 = vmul.f32 %v2720, %v2720
      %v2901 = vmul.f32 %v2831, %v2831
      %v2902 = vmul.f32 %v2833, %v2833
      %v2903 = vmul.f32 %v2722, %v2722
      %v2904 = vmul.f32 %v2724, %v2724
      %v2905 = vmul.f32 %v2835, %v2835
      %v2906 = vmul.f32 %v2837, %v2837
      %v2907 = vmul.f32 %v2728, %v2728
      %v2908 = vmul.f32 %v2730, %v2730
      %v2909 = vmul.f32 %v2841, %v2841
      %v2910 = vmul.f32 %v2843, %v2843
      %v2911 = vmul.f32 %v2732, %v2732
      %v2912 = vmul.f32 %v2734, %v2734
      %v2913 = vmul.f32 %v2845, %v2845
      %v2914 = vmul.f32 %v2847, %v2847
      %v2915 = vmul.f32 %v2738, %v2738
      %v2916 = vmul.f32 %v2740, %v2740
      %v2917 = vmul.f32 %v2851, %v2851
      %v2918 = vmul.f32 %v2853, %v2853
      %v2919 = vmul.f32 %v2742, %v2742
      %v2920 = vmul.f32 %v2744, %v2744
      %v2921 = vmul.f32 %v2855, %v2855
      %v2922 = vmul.f32 %v2857, %v2857
      %v2923 = vmul.f32 %v2668, %v2859
      %v2924 = vmul.f32 %v2670, %v2860
      %v2925 = vmul.f32 %v2781, %v2861
      %v2926 = vmul.f32 %v2783, %v2862
      %v2927 = vmul.f32 %v2672, %v2863
      %v2928 = vmul.f32 %v2674, %v2864
      %v2929 = vmul.f32 %v2785, %v2865
      %v2930 = vmul.f32 %v2787, %v2866
      %v2931 = vmul.f32 %v2678, %v2867
      %v2932 = vmul.f32 %v2680, %v2868
      %v2933 = vmul.f32 %v2791, %v2869
      %v2934 = vmul.f32 %v2793, %v2870
      %v2935 = vmul.f32 %v2682, %v2871
      %v2936 = vmul.f32 %v2684, %v2872
      %v2937 = vmul.f32 %v2795, %v2873
      %v2938 = vmul.f32 %v2797, %v2874
      %v2939 = vmul.f32 %v2688, %v2875
      %v2940 = vmul.f32 %v2690, %v2876
      %v2941 = vmul.f32 %v2801, %v2877
      %v2942 = vmul.f32 %v2803, %v2878
      %v2943 = vmul.f32 %v2692, %v2879
      %v2944 = vmul.f32 %v2694, %v2880
      %v2945 = vmul.f32 %v2805, %v2881
      %v2946 = vmul.f32 %v2807, %v2882
      %v2947 = vmul.f32 %v2698, %v2883
      %v2948 = vmul.f32 %v2700, %v2884
      %v2949 = vmul.f32 %v2811, %v2885
      %v2950 = vmul.f32 %v2813, %v2886
      %v2951 = vmul.f32 %v2702, %v2887
      %v2952 = vmul.f32 %v2704, %v2888
      %v2953 = vmul.f32 %v2815, %v2889
      %v2954 = vmul.f32 %v2817, %v2890
      %v2955 = vmul.f32 %v2708, %v2891
      %v2956 = vmul.f32 %v2710, %v2892
      %v2957 = vmul.f32 %v2821, %v2893
      %v2958 = vmul.f32 %v2823, %v2894
      %v2959 = vmul.f32 %v2712, %v2895
      %v2960 = vmul.f32 %v2714, %v2896
      %v2961 = vmul.f32 %v2825, %v2897
      %v2962 = vmul.f32 %v2827, %v2898
      %v2963 = vmul.f32 %v2718, %v2899
      %v2964 = vmul.f32 %v2720, %v2900
      %v2965 = vmul.f32 %v2831, %v2901
      %v2966 = vmul.f32 %v2833, %v2902
      %v2967 = vmul.f32 %v2722, %v2903
      %v2968 = vmul.f32 %v2724, %v2904
      %v2969 = vmul.f32 %v2835, %v2905
      %v2970 = vmul.f32 %v2837, %v2906
      %v2971 = vmul.f32 %v2728, %v2907
      %v2972 = vmul.f32 %v2730, %v2908
      %v2973 = vmul.f32 %v2841, %v2909
      %v2974 = vmul.f32 %v2843, %v2910
      %v2975 = vmul.f32 %v2732, %v2911
      %v2976 = vmul.f32 %v2734, %v2912
      %v2977 = vmul.f32 %v2845, %v2913
      %v2978 = vmul.f32 %v2847, %v2914
      %v2979 = vmul.f32 %v2738, %v2915
      %v2980 = vmul.f32 %v2740, %v2916
      %v2981 = vmul.f32 %v2851, %v2917
      %v2982 = vmul.f32 %v2853, %v2918
      %v2983 = vmul.f32 %v2742, %v2919
      %v2984 = vmul.f32 %v2744, %v2920
      %v2985 = vmul.f32 %v2855, %v2921
      %v2986 = vmul.f32 %v2857, %v2922
      %v2987 = vmul.f32 %v2923, 0.044715
      %v2988 = vmul.f32 %v2924, 0.044715
      %v2989 = vmul.f32 %v2925, 0.044715
      %v2990 = vmul.f32 %v2926, 0.044715
      %v2991 = vmul.f32 %v2927, 0.044715
      %v2992 = vmul.f32 %v2928, 0.044715
      %v2993 = vmul.f32 %v2929, 0.044715
      %v2994 = vmul.f32 %v2930, 0.044715
      %v2995 = vmul.f32 %v2931, 0.044715
      %v2996 = vmul.f32 %v2932, 0.044715
      %v2997 = vmul.f32 %v2933, 0.044715
      %v2998 = vmul.f32 %v2934, 0.044715
      %v2999 = vmul.f32 %v2935, 0.044715
      %v3000 = vmul.f32 %v2936, 0.044715
      %v3001 = vmul.f32 %v2937, 0.044715
      %v3002 = vmul.f32 %v2938, 0.044715
      %v3003 = vmul.f32 %v2939, 0.044715
      %v3004 = vmul.f32 %v2940, 0.044715
      %v3005 = vmul.f32 %v2941, 0.044715
      %v3006 = vmul.f32 %v2942, 0.044715
      %v3007 = vmul.f32 %v2943, 0.044715
      %v3008 = vmul.f32 %v2944, 0.044715
      %v3009 = vmul.f32 %v2945, 0.044715
      %v3010 = vmul.f32 %v2946, 0.044715
      %v3011 = vmul.f32 %v2947, 0.044715
      %v3012 = vmul.f32 %v2948, 0.044715
      %v3013 = vmul.f32 %v2949, 0.044715
      %v3014 = vmul.f32 %v2950, 0.044715
      %v3015 = vmul.f32 %v2951, 0.044715
      %v3016 = vmul.f32 %v2952, 0.044715
      %v3017 = vmul.f32 %v2953, 0.044715
      %v3018 = vmul.f32 %v2954, 0.044715
      %v3019 = vmul.f32 %v2955, 0.044715
      %v3020 = vmul.f32 %v2956, 0.044715
      %v3021 = vmul.f32 %v2957, 0.044715
      %v3022 = vmul.f32 %v2958, 0.044715
      %v3023 = vmul.f32 %v2959, 0.044715
      %v3024 = vmul.f32 %v2960, 0.044715
      %v3025 = vmul.f32 %v2961, 0.044715
      %v3026 = vmul.f32 %v2962, 0.044715
      %v3027 = vmul.f32 %v2963, 0.044715
      %v3028 = vmul.f32 %v2964, 0.044715
      %v3029 = vmul.f32 %v2965, 0.044715
      %v3030 = vmul.f32 %v2966, 0.044715
      %v3031 = vmul.f32 %v2967, 0.044715
      %v3032 = vmul.f32 %v2968, 0.044715
      %v3033 = vmul.f32 %v2969, 0.044715
      %v3034 = vmul.f32 %v2970, 0.044715
      %v3035 = vmul.f32 %v2971, 0.044715
      %v3036 = vmul.f32 %v2972, 0.044715
      %v3037 = vmul.f32 %v2973, 0.044715
      %v3038 = vmul.f32 %v2974, 0.044715
      %v3039 = vmul.f32 %v2975, 0.044715
      %v3040 = vmul.f32 %v2976, 0.044715
      %v3041 = vmul.f32 %v2977, 0.044715
      %v3042 = vmul.f32 %v2978, 0.044715
      %v3043 = vmul.f32 %v2979, 0.044715
      %v3044 = vmul.f32 %v2980, 0.044715
      %v3045 = vmul.f32 %v2981, 0.044715
      %v3046 = vmul.f32 %v2982, 0.044715
      %v3047 = vmul.f32 %v2983, 0.044715
      %v3048 = vmul.f32 %v2984, 0.044715
      %v3049 = vmul.f32 %v2985, 0.044715
      %v3050 = vmul.f32 %v2986, 0.044715
      %v3051 = vadd.f32 %v2668, %v2987
      %v3052 = vadd.f32 %v2670, %v2988
      %v3053 = vadd.f32 %v2781, %v2989
      %v3054 = vadd.f32 %v2783, %v2990
      %v3055 = vadd.f32 %v2672, %v2991
      %v3056 = vadd.f32 %v2674, %v2992
      %v3057 = vadd.f32 %v2785, %v2993
      %v3058 = vadd.f32 %v2787, %v2994
      %v3059 = vadd.f32 %v2678, %v2995
      %v3060 = vadd.f32 %v2680, %v2996
      %v3061 = vadd.f32 %v2791, %v2997
      %v3062 = vadd.f32 %v2793, %v2998
      %v3063 = vadd.f32 %v2682, %v2999
      %v3064 = vadd.f32 %v2684, %v3000
      %v3065 = vadd.f32 %v2795, %v3001
      %v3066 = vadd.f32 %v2797, %v3002
      %v3067 = vadd.f32 %v2688, %v3003
      %v3068 = vadd.f32 %v2690, %v3004
      %v3069 = vadd.f32 %v2801, %v3005
      %v3070 = vadd.f32 %v2803, %v3006
      %v3071 = vadd.f32 %v2692, %v3007
      %v3072 = vadd.f32 %v2694, %v3008
      %v3073 = vadd.f32 %v2805, %v3009
      %v3074 = vadd.f32 %v2807, %v3010
      %v3075 = vadd.f32 %v2698, %v3011
      %v3076 = vadd.f32 %v2700, %v3012
      %v3077 = vadd.f32 %v2811, %v3013
      %v3078 = vadd.f32 %v2813, %v3014
      %v3079 = vadd.f32 %v2702, %v3015
      %v3080 = vadd.f32 %v2704, %v3016
      %v3081 = vadd.f32 %v2815, %v3017
      %v3082 = vadd.f32 %v2817, %v3018
      %v3083 = vadd.f32 %v2708, %v3019
      %v3084 = vadd.f32 %v2710, %v3020
      %v3085 = vadd.f32 %v2821, %v3021
      %v3086 = vadd.f32 %v2823, %v3022
      %v3087 = vadd.f32 %v2712, %v3023
      %v3088 = vadd.f32 %v2714, %v3024
      %v3089 = vadd.f32 %v2825, %v3025
      %v3090 = vadd.f32 %v2827, %v3026
      %v3091 = vadd.f32 %v2718, %v3027
      %v3092 = vadd.f32 %v2720, %v3028
      %v3093 = vadd.f32 %v2831, %v3029
      %v3094 = vadd.f32 %v2833, %v3030
      %v3095 = vadd.f32 %v2722, %v3031
      %v3096 = vadd.f32 %v2724, %v3032
      %v3097 = vadd.f32 %v2835, %v3033
      %v3098 = vadd.f32 %v2837, %v3034
      %v3099 = vadd.f32 %v2728, %v3035
      %v3100 = vadd.f32 %v2730, %v3036
      %v3101 = vadd.f32 %v2841, %v3037
      %v3102 = vadd.f32 %v2843, %v3038
      %v3103 = vadd.f32 %v2732, %v3039
      %v3104 = vadd.f32 %v2734, %v3040
      %v3105 = vadd.f32 %v2845, %v3041
      %v3106 = vadd.f32 %v2847, %v3042
      %v3107 = vadd.f32 %v2738, %v3043
      %v3108 = vadd.f32 %v2740, %v3044
      %v3109 = vadd.f32 %v2851, %v3045
      %v3110 = vadd.f32 %v2853, %v3046
      %v3111 = vadd.f32 %v2742, %v3047
      %v3112 = vadd.f32 %v2744, %v3048
      %v3113 = vadd.f32 %v2855, %v3049
      %v3114 = vadd.f32 %v2857, %v3050
      %v3115 = vmul.f32 %v3051, 0.7978846
      %v3116 = vmul.f32 %v3052, 0.7978846
      %v3117 = vmul.f32 %v3053, 0.7978846
      %v3118 = vmul.f32 %v3054, 0.7978846
      %v3119 = vmul.f32 %v3055, 0.7978846
      %v3120 = vmul.f32 %v3056, 0.7978846
      %v3121 = vmul.f32 %v3057, 0.7978846
      %v3122 = vmul.f32 %v3058, 0.7978846
      %v3123 = vmul.f32 %v3059, 0.7978846
      %v3124 = vmul.f32 %v3060, 0.7978846
      %v3125 = vmul.f32 %v3061, 0.7978846
      %v3126 = vmul.f32 %v3062, 0.7978846
      %v3127 = vmul.f32 %v3063, 0.7978846
      %v3128 = vmul.f32 %v3064, 0.7978846
      %v3129 = vmul.f32 %v3065, 0.7978846
      %v3130 = vmul.f32 %v3066, 0.7978846
      %v3131 = vmul.f32 %v3067, 0.7978846
      %v3132 = vmul.f32 %v3068, 0.7978846
      %v3133 = vmul.f32 %v3069, 0.7978846
      %v3134 = vmul.f32 %v3070, 0.7978846
      %v3135 = vmul.f32 %v3071, 0.7978846
      %v3136 = vmul.f32 %v3072, 0.7978846
      %v3137 = vmul.f32 %v3073, 0.7978846
      %v3138 = vmul.f32 %v3074, 0.7978846
      %v3139 = vmul.f32 %v3075, 0.7978846
      %v3140 = vmul.f32 %v3076, 0.7978846
      %v3141 = vmul.f32 %v3077, 0.7978846
      %v3142 = vmul.f32 %v3078, 0.7978846
      %v3143 = vmul.f32 %v3079, 0.7978846
      %v3144 = vmul.f32 %v3080, 0.7978846
      %v3145 = vmul.f32 %v3081, 0.7978846
      %v3146 = vmul.f32 %v3082, 0.7978846
      %v3147 = vmul.f32 %v3083, 0.7978846
      %v3148 = vmul.f32 %v3084, 0.7978846
      %v3149 = vmul.f32 %v3085, 0.7978846
      %v3150 = vmul.f32 %v3086, 0.7978846
      %v3151 = vmul.f32 %v3087, 0.7978846
      %v3152 = vmul.f32 %v3088, 0.7978846
      %v3153 = vmul.f32 %v3089, 0.7978846
      %v3154 = vmul.f32 %v3090, 0.7978846
      %v3155 = vmul.f32 %v3091, 0.7978846
      %v3156 = vmul.f32 %v3092, 0.7978846
      %v3157 = vmul.f32 %v3093, 0.7978846
      %v3158 = vmul.f32 %v3094, 0.7978846
      %v3159 = vmul.f32 %v3095, 0.7978846
      %v3160 = vmul.f32 %v3096, 0.7978846
      %v3161 = vmul.f32 %v3097, 0.7978846
      %v3162 = vmul.f32 %v3098, 0.7978846
      %v3163 = vmul.f32 %v3099, 0.7978846
      %v3164 = vmul.f32 %v3100, 0.7978846
      %v3165 = vmul.f32 %v3101, 0.7978846
      %v3166 = vmul.f32 %v3102, 0.7978846
      %v3167 = vmul.f32 %v3103, 0.7978846
      %v3168 = vmul.f32 %v3104, 0.7978846
      %v3169 = vmul.f32 %v3105, 0.7978846
      %v3170 = vmul.f32 %v3106, 0.7978846
      %v3171 = vmul.f32 %v3107, 0.7978846
      %v3172 = vmul.f32 %v3108, 0.7978846
      %v3173 = vmul.f32 %v3109, 0.7978846
      %v3174 = vmul.f32 %v3110, 0.7978846
      %v3175 = vmul.f32 %v3111, 0.7978846
      %v3176 = vmul.f32 %v3112, 0.7978846
      %v3177 = vmul.f32 %v3113, 0.7978846
      %v3178 = vmul.f32 %v3114, 0.7978846
      %v3179 = vtanh.pop %v3115
      %v3180 = vtanh.pop %v3116
      %v3181 = vtanh.pop %v3117
      %v3182 = vtanh.pop %v3118
      %v3183 = vtanh.pop %v3119
      %v3184 = vtanh.pop %v3120
      %v3185 = vtanh.pop %v3121
      %v3186 = vtanh.pop %v3122
      %v3187 = vtanh.pop %v3123
      %v3188 = vtanh.pop %v3124
      %v3189 = vtanh.pop %v3125
      %v3190 = vtanh.pop %v3126
      %v3191 = vtanh.pop %v3127
      %v3192 = vtanh.pop %v3128
      %v3193 = vtanh.pop %v3129
      %v3194 = vtanh.pop %v3130
      %v3195 = vtanh.pop %v3131
      %v3196 = vtanh.pop %v3132
      %v3197 = vtanh.pop %v3133
      %v3198 = vtanh.pop %v3134
      %v3199 = vtanh.pop %v3135
      %v3200 = vtanh.pop %v3136
      %v3201 = vtanh.pop %v3137
      %v3202 = vtanh.pop %v3138
      %v3203 = vtanh.pop %v3139
      %v3204 = vtanh.pop %v3140
      %v3205 = vtanh.pop %v3141
      %v3206 = vtanh.pop %v3142
      %v3207 = vtanh.pop %v3143
      %v3208 = vtanh.pop %v3144
      %v3209 = vtanh.pop %v3145
      %v3210 = vtanh.pop %v3146
      %v3211 = vtanh.pop %v3147
      %v3212 = vtanh.pop %v3148
      %v3213 = vtanh.pop %v3149
      %v3214 = vtanh.pop %v3150
      %v3215 = vtanh.pop %v3151
      %v3216 = vtanh.pop %v3152
      %v3217 = vtanh.pop %v3153
      %v3218 = vtanh.pop %v3154
      %v3219 = vtanh.pop %v3155
      %v3220 = vtanh.pop %v3156
      %v3221 = vtanh.pop %v3157
      %v3222 = vtanh.pop %v3158
      %v3223 = vtanh.pop %v3159
      %v3224 = vtanh.pop %v3160
      %v3225 = vtanh.pop %v3161
      %v3226 = vtanh.pop %v3162
      %v3227 = vtanh.pop %v3163
      %v3228 = vtanh.pop %v3164
      %v3229 = vtanh.pop %v3165
      %v3230 = vtanh.pop %v3166
      %v3231 = vtanh.pop %v3167
      %v3232 = vtanh.pop %v3168
      %v3233 = vtanh.pop %v3169
      %v3234 = vtanh.pop %v3170
      %v3235 = vtanh.pop %v3171
      %v3236 = vtanh.pop %v3172
      %v3237 = vtanh.pop %v3173
      %v3238 = vtanh.pop %v3174
      %v3239 = vtanh.pop %v3175
      %v3240 = vtanh.pop %v3176
      %v3241 = vtanh.pop %v3177
      %v3242 = vtanh.pop %v3178
      %v3243 = vadd.f32 %v3179, 1.0
      %v3244 = vadd.f32 %v3180, 1.0
      %v3245 = vadd.f32 %v3181, 1.0
      %v3246 = vadd.f32 %v3182, 1.0
      %v3247 = vadd.f32 %v3183, 1.0
      %v3248 = vadd.f32 %v3184, 1.0
      %v3249 = vadd.f32 %v3185, 1.0
      %v3250 = vadd.f32 %v3186, 1.0
      %v3251 = vadd.f32 %v3187, 1.0
      %v3252 = vadd.f32 %v3188, 1.0
      %v3253 = vadd.f32 %v3189, 1.0
      %v3254 = vadd.f32 %v3190, 1.0
      %v3255 = vadd.f32 %v3191, 1.0
      %v3256 = vadd.f32 %v3192, 1.0
      %v3257 = vadd.f32 %v3193, 1.0
      %v3258 = vadd.f32 %v3194, 1.0
      %v3259 = vadd.f32 %v3195, 1.0
      %v3260 = vadd.f32 %v3196, 1.0
      %v3261 = vadd.f32 %v3197, 1.0
      %v3262 = vadd.f32 %v3198, 1.0
      %v3263 = vadd.f32 %v3199, 1.0
      %v3264 = vadd.f32 %v3200, 1.0
      %v3265 = vadd.f32 %v3201, 1.0
      %v3266 = vadd.f32 %v3202, 1.0
      %v3267 = vadd.f32 %v3203, 1.0
      %v3268 = vadd.f32 %v3204, 1.0
      %v3269 = vadd.f32 %v3205, 1.0
      %v3270 = vadd.f32 %v3206, 1.0
      %v3271 = vadd.f32 %v3207, 1.0
      %v3272 = vadd.f32 %v3208, 1.0
      %v3273 = vadd.f32 %v3209, 1.0
      %v3274 = vadd.f32 %v3210, 1.0
      %v3275 = vadd.f32 %v3211, 1.0
      %v3276 = vadd.f32 %v3212, 1.0
      %v3277 = vadd.f32 %v3213, 1.0
      %v3278 = vadd.f32 %v3214, 1.0
      %v3279 = vadd.f32 %v3215, 1.0
      %v3280 = vadd.f32 %v3216, 1.0
      %v3281 = vadd.f32 %v3217, 1.0
      %v3282 = vadd.f32 %v3218, 1.0
      %v3283 = vadd.f32 %v3219, 1.0
      %v3284 = vadd.f32 %v3220, 1.0
      %v3285 = vadd.f32 %v3221, 1.0
      %v3286 = vadd.f32 %v3222, 1.0
      %v3287 = vadd.f32 %v3223, 1.0
      %v3288 = vadd.f32 %v3224, 1.0
      %v3289 = vadd.f32 %v3225, 1.0
      %v3290 = vadd.f32 %v3226, 1.0
      %v3291 = vadd.f32 %v3227, 1.0
      %v3292 = vadd.f32 %v3228, 1.0
      %v3293 = vadd.f32 %v3229, 1.0
      %v3294 = vadd.f32 %v3230, 1.0
      %v3295 = vadd.f32 %v3231, 1.0
      %v3296 = vadd.f32 %v3232, 1.0
      %v3297 = vadd.f32 %v3233, 1.0
      %v3298 = vadd.f32 %v3234, 1.0
      %v3299 = vadd.f32 %v3235, 1.0
      %v3300 = vadd.f32 %v3236, 1.0
      %v3301 = vadd.f32 %v3237, 1.0
      %v3302 = vadd.f32 %v3238, 1.0
      %v3303 = vadd.f32 %v3239, 1.0
      %v3304 = vadd.f32 %v3240, 1.0
      %v3305 = vadd.f32 %v3241, 1.0
      %v3306 = vadd.f32 %v3242, 1.0
      %v3307 = vmul.f32 %v3243, 0.5
      %v3308 = vmul.f32 %v3244, 0.5
      %v3309 = vmul.f32 %v3245, 0.5
      %v3310 = vmul.f32 %v3246, 0.5
      %v3311 = vmul.f32 %v3247, 0.5
      %v3312 = vmul.f32 %v3248, 0.5
      %v3313 = vmul.f32 %v3249, 0.5
      %v3314 = vmul.f32 %v3250, 0.5
      %v3315 = vmul.f32 %v3251, 0.5
      %v3316 = vmul.f32 %v3252, 0.5
      %v3317 = vmul.f32 %v3253, 0.5
      %v3318 = vmul.f32 %v3254, 0.5
      %v3319 = vmul.f32 %v3255, 0.5
      %v3320 = vmul.f32 %v3256, 0.5
      %v3321 = vmul.f32 %v3257, 0.5
      %v3322 = vmul.f32 %v3258, 0.5
      %v3323 = vmul.f32 %v3259, 0.5
      %v3324 = vmul.f32 %v3260, 0.5
      %v3325 = vmul.f32 %v3261, 0.5
      %v3326 = vmul.f32 %v3262, 0.5
      %v3327 = vmul.f32 %v3263, 0.5
      %v3328 = vmul.f32 %v3264, 0.5
      %v3329 = vmul.f32 %v3265, 0.5
      %v3330 = vmul.f32 %v3266, 0.5
      %v3331 = vmul.f32 %v3267, 0.5
      %v3332 = vmul.f32 %v3268, 0.5
      %v3333 = vmul.f32 %v3269, 0.5
      %v3334 = vmul.f32 %v3270, 0.5
      %v3335 = vmul.f32 %v3271, 0.5
      %v3336 = vmul.f32 %v3272, 0.5
      %v3337 = vmul.f32 %v3273, 0.5
      %v3338 = vmul.f32 %v3274, 0.5
      %v3339 = vmul.f32 %v3275, 0.5
      %v3340 = vmul.f32 %v3276, 0.5
      %v3341 = vmul.f32 %v3277, 0.5
      %v3342 = vmul.f32 %v3278, 0.5
      %v3343 = vmul.f32 %v3279, 0.5
      %v3344 = vmul.f32 %v3280, 0.5
      %v3345 = vmul.f32 %v3281, 0.5
      %v3346 = vmul.f32 %v3282, 0.5
      %v3347 = vmul.f32 %v3283, 0.5
      %v3348 = vmul.f32 %v3284, 0.5
      %v3349 = vmul.f32 %v3285, 0.5
      %v3350 = vmul.f32 %v3286, 0.5
      %v3351 = vmul.f32 %v3287, 0.5
      %v3352 = vmul.f32 %v3288, 0.5
      %v3353 = vmul.f32 %v3289, 0.5
      %v3354 = vmul.f32 %v3290, 0.5
      %v3355 = vmul.f32 %v3291, 0.5
      %v3356 = vmul.f32 %v3292, 0.5
      %v3357 = vmul.f32 %v3293, 0.5
      %v3358 = vmul.f32 %v3294, 0.5
      %v3359 = vmul.f32 %v3295, 0.5
      %v3360 = vmul.f32 %v3296, 0.5
      %v3361 = vmul.f32 %v3297, 0.5
      %v3362 = vmul.f32 %v3298, 0.5
      %v3363 = vmul.f32 %v3299, 0.5
      %v3364 = vmul.f32 %v3300, 0.5
      %v3365 = vmul.f32 %v3301, 0.5
      %v3366 = vmul.f32 %v3302, 0.5
      %v3367 = vmul.f32 %v3303, 0.5
      %v3368 = vmul.f32 %v3304, 0.5
      %v3369 = vmul.f32 %v3305, 0.5
      %v3370 = vmul.f32 %v3306, 0.5
      %v3371 = vmul.f32 %v2668, %v3307
      %v3372 = vmul.f32 %v2670, %v3308
      %v3373 = vmul.f32 %v2781, %v3309
      %v3374 = vmul.f32 %v2783, %v3310
      %v3375 = vmul.f32 %v2672, %v3311
      %v3376 = vmul.f32 %v2674, %v3312
      %v3377 = vmul.f32 %v2785, %v3313
      %v3378 = vmul.f32 %v2787, %v3314
      %v3379 = vmul.f32 %v2678, %v3315
      %v3380 = vmul.f32 %v2680, %v3316
      %v3381 = vmul.f32 %v2791, %v3317
      %v3382 = vmul.f32 %v2793, %v3318
      %v3383 = vmul.f32 %v2682, %v3319
      %v3384 = vmul.f32 %v2684, %v3320
      %v3385 = vmul.f32 %v2795, %v3321
      %v3386 = vmul.f32 %v2797, %v3322
      %v3387 = vmul.f32 %v2688, %v3323
      %v3388 = vmul.f32 %v2690, %v3324
      %v3389 = vmul.f32 %v2801, %v3325
      %v3390 = vmul.f32 %v2803, %v3326
      %v3391 = vmul.f32 %v2692, %v3327
      %v3392 = vmul.f32 %v2694, %v3328
      %v3393 = vmul.f32 %v2805, %v3329
      %v3394 = vmul.f32 %v2807, %v3330
      %v3395 = vmul.f32 %v2698, %v3331
      %v3396 = vmul.f32 %v2700, %v3332
      %v3397 = vmul.f32 %v2811, %v3333
      %v3398 = vmul.f32 %v2813, %v3334
      %v3399 = vmul.f32 %v2702, %v3335
      %v3400 = vmul.f32 %v2704, %v3336
      %v3401 = vmul.f32 %v2815, %v3337
      %v3402 = vmul.f32 %v2817, %v3338
      %v3403 = vmul.f32 %v2708, %v3339
      %v3404 = vmul.f32 %v2710, %v3340
      %v3405 = vmul.f32 %v2821, %v3341
      %v3406 = vmul.f32 %v2823, %v3342
      %v3407 = vmul.f32 %v2712, %v3343
      %v3408 = vmul.f32 %v2714, %v3344
      %v3409 = vmul.f32 %v2825, %v3345
      %v3410 = vmul.f32 %v2827, %v3346
      %v3411 = vmul.f32 %v2718, %v3347
      %v3412 = vmul.f32 %v2720, %v3348
      %v3413 = vmul.f32 %v2831, %v3349
      %v3414 = vmul.f32 %v2833, %v3350
      %v3415 = vmul.f32 %v2722, %v3351
      %v3416 = vmul.f32 %v2724, %v3352
      %v3417 = vmul.f32 %v2835, %v3353
      %v3418 = vmul.f32 %v2837, %v3354
      %v3419 = vmul.f32 %v2728, %v3355
      %v3420 = vmul.f32 %v2730, %v3356
      %v3421 = vmul.f32 %v2841, %v3357
      %v3422 = vmul.f32 %v2843, %v3358
      %v3423 = vmul.f32 %v2732, %v3359
      %v3424 = vmul.f32 %v2734, %v3360
      %v3425 = vmul.f32 %v2845, %v3361
      %v3426 = vmul.f32 %v2847, %v3362
      %v3427 = vmul.f32 %v2738, %v3363
      %v3428 = vmul.f32 %v2740, %v3364
      %v3429 = vmul.f32 %v2851, %v3365
      %v3430 = vmul.f32 %v2853, %v3366
      %v3431 = vmul.f32 %v2742, %v3367
      %v3432 = vmul.f32 %v2744, %v3368
      %v3433 = vmul.f32 %v2855, %v3369
      %v3434 = vmul.f32 %v2857, %v3370
      %v3435 = vpack.c.bf16 %v3375, %v3371
      %v3436 = vpack.c.bf16 %v3376, %v3372
      %v3437 = vpack.c.bf16 %v3377, %v3373
      %v3438 = vpack.c.bf16 %v3378, %v3374
      %v3439 = vpack.c.bf16 %v3383, %v3379
      %v3440 = vpack.c.bf16 %v3384, %v3380
      %v3441 = vpack.c.bf16 %v3385, %v3381
      %v3442 = vpack.c.bf16 %v3386, %v3382
      %v3443 = vpack.c.bf16 %v3391, %v3387
      %v3444 = vpack.c.bf16 %v3392, %v3388
      %v3445 = vpack.c.bf16 %v3393, %v3389
      %v3446 = vpack.c.bf16 %v3394, %v3390
      %v3447 = vpack.c.bf16 %v3399, %v3395
      %v3448 = vpack.c.bf16 %v3400, %v3396
      %v3449 = vpack.c.bf16 %v3401, %v3397
      %v3450 = vpack.c.bf16 %v3402, %v3398
      %v3451 = vpack.c.bf16 %v3407, %v3403
      %v3452 = vpack.c.bf16 %v3408, %v3404
      %v3453 = vpack.c.bf16 %v3409, %v3405
      %v3454 = vpack.c.bf16 %v3410, %v3406
      %v3455 = vpack.c.bf16 %v3415, %v3411
      %v3456 = vpack.c.bf16 %v3416, %v3412
      %v3457 = vpack.c.bf16 %v3417, %v3413
      %v3458 = vpack.c.bf16 %v3418, %v3414
      %v3459 = vpack.c.bf16 %v3423, %v3419
      %v3460 = vpack.c.bf16 %v3424, %v3420
      %v3461 = vpack.c.bf16 %v3425, %v3421
      %v3462 = vpack.c.bf16 %v3426, %v3422
      %v3463 = vpack.c.bf16 %v3431, %v3427
      %v3464 = vpack.c.bf16 %v3432, %v3428
      %v3465 = vpack.c.bf16 %v3433, %v3429
      %v3466 = vpack.c.bf16 %v3434, %v3430
      %v3467 = vld [vmem:[%s10] sm:$0xf]
      %v3468 = vld [vmem:[%s10 + $0x4] sm:$0xf]
      %v3469 = vld [vmem:[%s10 + $0x8] sm:$0xf]
      %v3470 = vld [vmem:[%s10 + $0xc] sm:$0xf]
      %v3471 = vld [vmem:[%s10 + $0x10] sm:$0xf]
      %v3472 = vld [vmem:[%s10 + $0x14] sm:$0xf]
      %v3473 = vld [vmem:[%s10 + $0x18] sm:$0xf]
      %v3474 = vld [vmem:[%s10 + $0x1c] sm:$0xf]
      %v3475 = vld [vmem:[%s10 + $0x20] sm:$0xf]
      %v3476 = vld [vmem:[%s10 + $0x24] sm:$0xf]
      %v3477 = vld [vmem:[%s10 + $0x28] sm:$0xf]
      %v3478 = vld [vmem:[%s10 + $0x2c] sm:$0xf]
      %v3479 = vld [vmem:[%s10 + $0x30] sm:$0xf]
      %v3480 = vld [vmem:[%s10 + $0x34] sm:$0xf]
      %v3481 = vld [vmem:[%s10 + $0x38] sm:$0xf]
      %v3482 = vld [vmem:[%s10 + $0x3c] sm:$0xf]
      %v3483 = vld [vmem:[%s10 + $0x40] sm:$0xf]
      %v3484 = vld [vmem:[%s10 + $0x44] sm:$0xf]
      %v3485 = vld [vmem:[%s10 + $0x48] sm:$0xf]
      %v3486 = vld [vmem:[%s10 + $0x4c] sm:$0xf]
      %v3487 = vld [vmem:[%s10 + $0x50] sm:$0xf]
      %v3488 = vld [vmem:[%s10 + $0x54] sm:$0xf]
      %v3489 = vld [vmem:[%s10 + $0x58] sm:$0xf]
      %v3490 = vld [vmem:[%s10 + $0x5c] sm:$0xf]
      %v3491 = vld [vmem:[%s10 + $0x60] sm:$0xf]
      %v3492 = vld [vmem:[%s10 + $0x64] sm:$0xf]
      %v3493 = vld [vmem:[%s10 + $0x68] sm:$0xf]
      %v3494 = vld [vmem:[%s10 + $0x6c] sm:$0xf]
      %v3495 = vld [vmem:[%s10 + $0x70] sm:$0xf]
      %v3496 = vld [vmem:[%s10 + $0x74] sm:$0xf]
      %v3497 = vld [vmem:[%s10 + $0x78] sm:$0xf]
      %v3498 = vld [vmem:[%s10 + $0x7c] sm:$0xf]
      %v3499 = vld [vmem:[%s10 + $0x80] sm:$0xf]
      %v3500 = vld [vmem:[%s10 + $0x84] sm:$0xf]
      %v3501 = vld [vmem:[%s10 + $0x88] sm:$0xf]
      %v3502 = vld [vmem:[%s10 + $0x8c] sm:$0xf]
      %v3503 = vld [vmem:[%s10 + $0x90] sm:$0xf]
      %v3504 = vld [vmem:[%s10 + $0x94] sm:$0xf]
      %v3505 = vld [vmem:[%s10 + $0x98] sm:$0xf]
      %v3506 = vld [vmem:[%s10 + $0x9c] sm:$0xf]
      %v3507 = vld [vmem:[%s10 + $0xa0] sm:$0xf]
      %v3508 = vld [vmem:[%s10 + $0xa4] sm:$0xf]
      %v3509 = vld [vmem:[%s10 + $0xa8] sm:$0xf]
      %v3510 = vld [vmem:[%s10 + $0xac] sm:$0xf]
      %v3511 = vld [vmem:[%s10 + $0xb0] sm:$0xf]
      %v3512 = vld [vmem:[%s10 + $0xb4] sm:$0xf]
      %v3513 = vld [vmem:[%s10 + $0xb8] sm:$0xf]
      %v3514 = vld [vmem:[%s10 + $0xbc] sm:$0xf]
      %v3515 = vld [vmem:[%s10 + $0xc0] sm:$0xf]
      %v3516 = vld [vmem:[%s10 + $0xc4] sm:$0xf]
      %v3517 = vld [vmem:[%s10 + $0xc8] sm:$0xf]
      %v3518 = vld [vmem:[%s10 + $0xcc] sm:$0xf]
      %v3519 = vld [vmem:[%s10 + $0xd0] sm:$0xf]
      %v3520 = vld [vmem:[%s10 + $0xd4] sm:$0xf]
      %v3521 = vld [vmem:[%s10 + $0xd8] sm:$0xf]
      %v3522 = vld [vmem:[%s10 + $0xdc] sm:$0xf]
      %v3523 = vld [vmem:[%s10 + $0xe0] sm:$0xf]
      %v3524 = vld [vmem:[%s10 + $0xe4] sm:$0xf]
      %v3525 = vld [vmem:[%s10 + $0xe8] sm:$0xf]
      %v3526 = vld [vmem:[%s10 + $0xec] sm:$0xf]
      %v3527 = vld [vmem:[%s10 + $0xf0] sm:$0xf]
      %v3528 = vld [vmem:[%s10 + $0xf4] sm:$0xf]
      %v3529 = vld [vmem:[%s10 + $0xf8] sm:$0xf]
      %v3530 = vld [vmem:[%s10 + $0xfc] sm:$0xf]
      %v3531 = vld [vmem:[%s11] sm:$0x1]
      %v3533 = vlaneseq
      %v3534 = vshrl.u32 %v3533, 7
      %v3535 = vsub.s32 0, %v3534
      %v3536 = vrot.slane %v3531, %v3535
      %v3602 = vunpack.c.l.b16 %v3467
      %v3603 = vunpack.c.l.b16 %v3468
      %v3604 = vunpack.c.l.b16 %v3469
      %v3605 = vunpack.c.l.b16 %v3470
      %v3606 = vunpack.c.l.b16 %v3471
      %v3607 = vunpack.c.l.b16 %v3472
      %v3608 = vunpack.c.l.b16 %v3473
      %v3609 = vunpack.c.l.b16 %v3474
      %v3610 = vunpack.c.l.b16 %v3475
      %v3611 = vunpack.c.l.b16 %v3476
      %v3612 = vunpack.c.l.b16 %v3477
      %v3613 = vunpack.c.l.b16 %v3478
      %v3614 = vunpack.c.l.b16 %v3479
      %v3615 = vunpack.c.l.b16 %v3480
      %v3616 = vunpack.c.l.b16 %v3481
      %v3617 = vunpack.c.l.b16 %v3482
      %v3618 = vunpack.c.l.b16 %v3483
      %v3619 = vunpack.c.l.b16 %v3484
      %v3620 = vunpack.c.l.b16 %v3485
      %v3621 = vunpack.c.l.b16 %v3486
      %v3622 = vunpack.c.l.b16 %v3487
      %v3623 = vunpack.c.l.b16 %v3488
      %v3624 = vunpack.c.l.b16 %v3489
      %v3625 = vunpack.c.l.b16 %v3490
      %v3626 = vunpack.c.l.b16 %v3491
      %v3627 = vunpack.c.l.b16 %v3492
      %v3628 = vunpack.c.l.b16 %v3493
      %v3629 = vunpack.c.l.b16 %v3494
      %v3630 = vunpack.c.l.b16 %v3495
      %v3631 = vunpack.c.l.b16 %v3496
      %v3632 = vunpack.c.l.b16 %v3497
      %v3633 = vunpack.c.l.b16 %v3498
      %v3634 = vunpack.c.l.b16 %v3499
      %v3635 = vunpack.c.l.b16 %v3500
      %v3636 = vunpack.c.l.b16 %v3501
      %v3637 = vunpack.c.l.b16 %v3502
      %v3638 = vunpack.c.l.b16 %v3503
      %v3639 = vunpack.c.l.b16 %v3504
      %v3640 = vunpack.c.l.b16 %v3505
      %v3641 = vunpack.c.l.b16 %v3506
      %v3642 = vunpack.c.l.b16 %v3507
      %v3643 = vunpack.c.l.b16 %v3508
      %v3644 = vunpack.c.l.b16 %v3509
      %v3645 = vunpack.c.l.b16 %v3510
      %v3646 = vunpack.c.l.b16 %v3511
      %v3647 = vunpack.c.l.b16 %v3512
      %v3648 = vunpack.c.l.b16 %v3513
      %v3649 = vunpack.c.l.b16 %v3514
      %v3650 = vunpack.c.l.b16 %v3515
      %v3651 = vunpack.c.l.b16 %v3516
      %v3652 = vunpack.c.l.b16 %v3517
      %v3653 = vunpack.c.l.b16 %v3518
      %v3654 = vunpack.c.l.b16 %v3519
      %v3655 = vunpack.c.l.b16 %v3520
      %v3656 = vunpack.c.l.b16 %v3521
      %v3657 = vunpack.c.l.b16 %v3522
      %v3658 = vunpack.c.l.b16 %v3523
      %v3659 = vunpack.c.l.b16 %v3524
      %v3660 = vunpack.c.l.b16 %v3525
      %v3661 = vunpack.c.l.b16 %v3526
      %v3662 = vunpack.c.l.b16 %v3527
      %v3663 = vunpack.c.l.b16 %v3528
      %v3664 = vunpack.c.l.b16 %v3529
      %v3665 = vunpack.c.l.b16 %v3530
      %v3666 = vpack.c.b16 %v3603, %v3602
      %v3667 = vpack.c.b16 %v3605, %v3604
      %v3668 = vpack.c.b16 %v3607, %v3606
      %v3669 = vpack.c.b16 %v3609, %v3608
      %v3670 = vpack.c.b16 %v3611, %v3610
      %v3671 = vpack.c.b16 %v3613, %v3612
      %v3672 = vpack.c.b16 %v3615, %v3614
      %v3673 = vpack.c.b16 %v3617, %v3616
      %v3674 = vpack.c.b16 %v3619, %v3618
      %v3675 = vpack.c.b16 %v3621, %v3620
      %v3676 = vpack.c.b16 %v3623, %v3622
      %v3677 = vpack.c.b16 %v3625, %v3624
      %v3678 = vpack.c.b16 %v3627, %v3626
      %v3679 = vpack.c.b16 %v3629, %v3628
      %v3680 = vpack.c.b16 %v3631, %v3630
      %v3681 = vpack.c.b16 %v3633, %v3632
      %v3682 = vpack.c.b16 %v3635, %v3634
      %v3683 = vpack.c.b16 %v3637, %v3636
      %v3684 = vpack.c.b16 %v3639, %v3638
      %v3685 = vpack.c.b16 %v3641, %v3640
      %v3686 = vpack.c.b16 %v3643, %v3642
      %v3687 = vpack.c.b16 %v3645, %v3644
      %v3688 = vpack.c.b16 %v3647, %v3646
      %v3689 = vpack.c.b16 %v3649, %v3648
      %v3690 = vpack.c.b16 %v3651, %v3650
      %v3691 = vpack.c.b16 %v3653, %v3652
      %v3692 = vpack.c.b16 %v3655, %v3654
      %v3693 = vpack.c.b16 %v3657, %v3656
      %v3694 = vpack.c.b16 %v3659, %v3658
      %v3695 = vpack.c.b16 %v3661, %v3660
      %v3696 = vpack.c.b16 %v3663, %v3662
      %v3697 = vpack.c.b16 %v3665, %v3664
      %3730 = vmatprep.subr.bf16.mxu0 0
      %3731 = vmatpush1.bf16.msra.mxu0 %v3666
      %3732 = vmatprep.subr.bf16.mxu0 0
      %3733 = vmatpush1.bf16.msra.mxu0 %v3667
      %3734 = vmatprep.subr.bf16.mxu0 0
      %3735 = vmatpush1.bf16.msra.mxu0 %v3668
      %3736 = vmatprep.subr.bf16.mxu0 0
      %3737 = vmatpush1.bf16.msra.mxu0 %v3669
      %3738 = vmatprep.subr.bf16.mxu0 0
      %3739 = vmatpush1.bf16.msra.mxu0 %v3670
      %3740 = vmatprep.subr.bf16.mxu0 0
      %3741 = vmatpush1.bf16.msra.mxu0 %v3671
      %3742 = vmatprep.subr.bf16.mxu0 0
      %3743 = vmatpush1.bf16.msra.mxu0 %v3672
      %3744 = vmatprep.subr.bf16.mxu0 0
      %3745 = vmatpush1.bf16.msra.mxu0 %v3673
      %3746 = vmatprep.subr.bf16.mxu0 0
      %3747 = vmatpush1.bf16.msra.mxu0 %v3674
      %3748 = vmatprep.subr.bf16.mxu0 0
      %3749 = vmatpush1.bf16.msra.mxu0 %v3675
      %3750 = vmatprep.subr.bf16.mxu0 0
      %3751 = vmatpush1.bf16.msra.mxu0 %v3676
      %3752 = vmatprep.subr.bf16.mxu0 0
      %3753 = vmatpush1.bf16.msra.mxu0 %v3677
      %3754 = vmatprep.subr.bf16.mxu0 0
      %3755 = vmatpush1.bf16.msra.mxu0 %v3678
      %3756 = vmatprep.subr.bf16.mxu0 0
      %3757 = vmatpush1.bf16.msra.mxu0 %v3679
      %3758 = vmatprep.subr.bf16.mxu0 0
      %3759 = vmatpush1.bf16.msra.mxu0 %v3680
      %3760 = vmatprep.subr.bf16.mxu0 0
      %3761 = vmatpush1.bf16.msra.mxu0 %v3681
      %3762 = vmatprep.mubr.bf16.mxu0 %v3436
      %3763 = vmatmul.mubr.bf16.gmra.mrb[0].mxu0 %v3435
      %v3764 = vpop.f32.mrb[0].mxu0
      %v3765 = vadd.f32 %v3536, %v3764
      %v3766 = vpop.f32.mrb[0].mxu0
      %v3767 = vpop.f32.mrb[0].mxu0
      %v3768 = vadd.f32 %v3536, %v3767
      %v3769 = vpop.f32.mrb[0].mxu0
      %3770 = vmatprep.mubr.bf16.mxu0 %v3440
      %3771 = vmatmul.mubr.bf16.gmra.mrb[0].mxu0 %v3439
      %v3772 = vpop.f32.mrb[0].mxu0
      %v3773 = vadd.f32 %v3536, %v3772
      %v3774 = vpop.f32.mrb[0].mxu0
      %v3775 = vpop.f32.mrb[0].mxu0
      %v3776 = vadd.f32 %v3536, %v3775
      %v3777 = vpop.f32.mrb[0].mxu0
      %3778 = vmatprep.mubr.bf16.mxu0 %v3444
      %3779 = vmatmul.mubr.bf16.gmra.mrb[0].mxu0 %v3443
      %v3780 = vpop.f32.mrb[0].mxu0
      %v3781 = vadd.f32 %v3536, %v3780
      %v3782 = vpop.f32.mrb[0].mxu0
      %v3783 = vpop.f32.mrb[0].mxu0
      %v3784 = vadd.f32 %v3536, %v3783
      %v3785 = vpop.f32.mrb[0].mxu0
      %3786 = vmatprep.mubr.bf16.mxu0 %v3448
      %3787 = vmatmul.mubr.bf16.gmra.mrb[0].mxu0 %v3447
      %v3788 = vpop.f32.mrb[0].mxu0
      %v3789 = vadd.f32 %v3536, %v3788
      %v3790 = vpop.f32.mrb[0].mxu0
      %v3791 = vpop.f32.mrb[0].mxu0
      %v3792 = vadd.f32 %v3536, %v3791
      %v3793 = vpop.f32.mrb[0].mxu0
      %3794 = vmatprep.mubr.bf16.mxu0 %v3452
      %3795 = vmatmul.mubr.bf16.gmra.mrb[0].mxu0 %v3451
      %v3796 = vpop.f32.mrb[0].mxu0
      %v3797 = vadd.f32 %v3536, %v3796
      %v3798 = vpop.f32.mrb[0].mxu0
      %v3799 = vpop.f32.mrb[0].mxu0
      %v3800 = vadd.f32 %v3536, %v3799
      %v3801 = vpop.f32.mrb[0].mxu0
      %3802 = vmatprep.mubr.bf16.mxu0 %v3456
      %3803 = vmatmul.mubr.bf16.gmra.mrb[0].mxu0 %v3455
      %v3804 = vpop.f32.mrb[0].mxu0
      %v3805 = vadd.f32 %v3536, %v3804
      %v3806 = vpop.f32.mrb[0].mxu0
      %v3807 = vpop.f32.mrb[0].mxu0
      %v3808 = vadd.f32 %v3536, %v3807
      %v3809 = vpop.f32.mrb[0].mxu0
      %3810 = vmatprep.mubr.bf16.mxu0 %v3460
      %3811 = vmatmul.mubr.bf16.gmra.mrb[0].mxu0 %v3459
      %v3812 = vpop.f32.mrb[0].mxu0
      %v3813 = vadd.f32 %v3536, %v3812
      %v3814 = vpop.f32.mrb[0].mxu0
      %v3815 = vpop.f32.mrb[0].mxu0
      %v3816 = vadd.f32 %v3536, %v3815
      %v3817 = vpop.f32.mrb[0].mxu0
      %3818 = vmatprep.mubr.bf16.mxu0 %v3464
      %3819 = vmatmul.mubr.bf16.gmra.mrb[0].mxu0 %v3463
      %v3820 = vpop.f32.mrb[0].mxu0
      %v3821 = vadd.f32 %v3536, %v3820
      %v3822 = vpop.f32.mrb[0].mxu0
      %v3823 = vpop.f32.mrb[0].mxu0
      %v3824 = vadd.f32 %v3536, %v3823
      %v3825 = vpop.f32.mrb[0].mxu0
      %3826 = vdwg.mxu0
      %3827 = vmatprep.subr.bf16.mxu0 0
      %3828 = vmatpush1.bf16.msra.mxu0 %v3682
      %3829 = vmatprep.subr.bf16.mxu0 0
      %3830 = vmatpush1.bf16.msra.mxu0 %v3683
      %3831 = vmatprep.subr.bf16.mxu0 0
      %3832 = vmatpush1.bf16.msra.mxu0 %v3684
      %3833 = vmatprep.subr.bf16.mxu0 0
      %3834 = vmatpush1.bf16.msra.mxu0 %v3685
      %3835 = vmatprep.subr.bf16.mxu0 0
      %3836 = vmatpush1.bf16.msra.mxu0 %v3686
      %3837 = vmatprep.subr.bf16.mxu0 0
      %3838 = vmatpush1.bf16.msra.mxu0 %v3687
      %3839 = vmatprep.subr.bf16.mxu0 0
      %3840 = vmatpush1.bf16.msra.mxu0 %v3688
      %3841 = vmatprep.subr.bf16.mxu0 0
      %3842 = vmatpush1.bf16.msra.mxu0 %v3689
      %3843 = vmatprep.subr.bf16.mxu0 0
      %3844 = vmatpush1.bf16.msra.mxu0 %v3690
      %3845 = vmatprep.subr.bf16.mxu0 0
      %3846 = vmatpush1.bf16.msra.mxu0 %v3691
      %3847 = vmatprep.subr.bf16.mxu0 0
      %3848 = vmatpush1.bf16.msra.mxu0 %v3692
      %3849 = vmatprep.subr.bf16.mxu0 0
      %3850 = vmatpush1.bf16.msra.mxu0 %v3693
      %3851 = vmatprep.subr.bf16.mxu0 0
      %3852 = vmatpush1.bf16.msra.mxu0 %v3694
      %3853 = vmatprep.subr.bf16.mxu0 0
      %3854 = vmatpush1.bf16.msra.mxu0 %v3695
      %3855 = vmatprep.subr.bf16.mxu0 0
      %3856 = vmatpush1.bf16.msra.mxu0 %v3696
      %3857 = vmatprep.subr.bf16.mxu0 0
      %3858 = vmatpush1.bf16.msra.mxu0 %v3697
      %3859 = vmatprep.mubr.bf16.mxu0 %v3438
      %3860 = vmatmul.mubr.bf16.gmra.mrb[0].mxu0 %v3437
      %v3861 = vpop.f32.mrb[0].mxu0
      %v3862 = vadd.f32 %v3765, %v3861
      %v3863 = vpop.f32.mrb[0].mxu0
      %v3864 = vpop.f32.mrb[0].mxu0
      %v3865 = vadd.f32 %v3768, %v3864
      %v3866 = vpop.f32.mrb[0].mxu0
      %3867 = vmatprep.mubr.bf16.mxu0 %v3442
      %3868 = vmatmul.mubr.bf16.gmra.mrb[0].mxu0 %v3441
      %v3869 = vpop.f32.mrb[0].mxu0
      %v3870 = vadd.f32 %v3773, %v3869
      %v3871 = vpop.f32.mrb[0].mxu0
      %v3872 = vpop.f32.mrb[0].mxu0
      %v3873 = vadd.f32 %v3776, %v3872
      %v3874 = vpop.f32.mrb[0].mxu0
      %3875 = vmatprep.mubr.bf16.mxu0 %v3446
      %3876 = vmatmul.mubr.bf16.gmra.mrb[0].mxu0 %v3445
      %v3877 = vpop.f32.mrb[0].mxu0
      %v3878 = vadd.f32 %v3781, %v3877
      %v3879 = vpop.f32.mrb[0].mxu0
      %v3880 = vpop.f32.mrb[0].mxu0
      %v3881 = vadd.f32 %v3784, %v3880
      %v3882 = vpop.f32.mrb[0].mxu0
      %3883 = vmatprep.mubr.bf16.mxu0 %v3450
      %3884 = vmatmul.mubr.bf16.gmra.mrb[0].mxu0 %v3449
      %v3885 = vpop.f32.mrb[0].mxu0
      %v3886 = vadd.f32 %v3789, %v3885
      %v3887 = vpop.f32.mrb[0].mxu0
      %v3888 = vpop.f32.mrb[0].mxu0
      %v3889 = vadd.f32 %v3792, %v3888
      %v3890 = vpop.f32.mrb[0].mxu0
      %3891 = vmatprep.mubr.bf16.mxu0 %v3454
      %3892 = vmatmul.mubr.bf16.gmra.mrb[0].mxu0 %v3453
      %v3893 = vpop.f32.mrb[0].mxu0
      %v3894 = vadd.f32 %v3797, %v3893
      %v3895 = vpop.f32.mrb[0].mxu0
      %v3896 = vpop.f32.mrb[0].mxu0
      %v3897 = vadd.f32 %v3800, %v3896
      %v3898 = vpop.f32.mrb[0].mxu0
      %3899 = vmatprep.mubr.bf16.mxu0 %v3458
      %3900 = vmatmul.mubr.bf16.gmra.mrb[0].mxu0 %v3457
      %v3901 = vpop.f32.mrb[0].mxu0
      %v3902 = vadd.f32 %v3805, %v3901
      %v3903 = vpop.f32.mrb[0].mxu0
      %v3904 = vpop.f32.mrb[0].mxu0
      %v3905 = vadd.f32 %v3808, %v3904
      %v3906 = vpop.f32.mrb[0].mxu0
      %3907 = vmatprep.mubr.bf16.mxu0 %v3462
      %3908 = vmatmul.mubr.bf16.gmra.mrb[0].mxu0 %v3461
      %v3909 = vpop.f32.mrb[0].mxu0
      %v3910 = vadd.f32 %v3813, %v3909
      %v3911 = vpop.f32.mrb[0].mxu0
      %v3912 = vpop.f32.mrb[0].mxu0
      %v3913 = vadd.f32 %v3816, %v3912
      %v3914 = vpop.f32.mrb[0].mxu0
      %3915 = vmatprep.mubr.bf16.mxu0 %v3466
      %3916 = vmatmul.mubr.bf16.gmra.mrb[0].mxu0 %v3465
      %v3917 = vpop.f32.mrb[0].mxu0
      %v3918 = vadd.f32 %v3821, %v3917
      %v3919 = vpop.f32.mrb[0].mxu0
      %v3920 = vpop.f32.mrb[0].mxu0
      %v3921 = vadd.f32 %v3824, %v3920
      %v3922 = vpop.f32.mrb[0].mxu0
      %3923 = vdwg.mxu0
      %v3924 = vadd.f32 %v3862, %v2395
      %v3925 = vadd.f32 %v3865, %v2396
      %v3926 = vadd.f32 %v3870, %v2397
      %v3927 = vadd.f32 %v3873, %v2398
      %v3928 = vadd.f32 %v3878, %v2399
      %v3929 = vadd.f32 %v3881, %v2400
      %v3930 = vadd.f32 %v3886, %v2401
      %v3931 = vadd.f32 %v3889, %v2402
      %v3932 = vadd.f32 %v3894, %v2403
      %v3933 = vadd.f32 %v3897, %v2404
      %v3934 = vadd.f32 %v3902, %v2405
      %v3935 = vadd.f32 %v3905, %v2406
      %v3936 = vadd.f32 %v3910, %v2407
      %v3937 = vadd.f32 %v3913, %v2408
      %v3938 = vadd.f32 %v3918, %v2409
      %v3939 = vadd.f32 %v3921, %v2410
      %v3940 = vld [vmem:[%s12] sm:$0x1]
      %v3941 = vld [vmem:[%s13] sm:$0x1]
      %3942 = vadd.xlane.f32.xlu0 %v3924
      %v3943 = vpop.xlane.xlu0 %3942
      %3944 = vadd.xlane.f32.xlu0 %v3925
      %v3945 = vpop.xlane.xlu0 %3944
      %3946 = vadd.xlane.f32.xlu0 %v3926
      %v3947 = vpop.xlane.xlu0 %3946
      %3948 = vadd.xlane.f32.xlu0 %v3927
      %v3949 = vpop.xlane.xlu0 %3948
      %3950 = vadd.xlane.f32.xlu0 %v3928
      %v3951 = vpop.xlane.xlu0 %3950
      %3952 = vadd.xlane.f32.xlu0 %v3929
      %v3953 = vpop.xlane.xlu0 %3952
      %3954 = vadd.xlane.f32.xlu0 %v3930
      %v3955 = vpop.xlane.xlu0 %3954
      %3956 = vadd.xlane.f32.xlu0 %v3931
      %v3957 = vpop.xlane.xlu0 %3956
      %3958 = vadd.xlane.f32.xlu0 %v3932
      %v3959 = vpop.xlane.xlu0 %3958
      %3960 = vadd.xlane.f32.xlu0 %v3933
      %v3961 = vpop.xlane.xlu0 %3960
      %3962 = vadd.xlane.f32.xlu0 %v3934
      %v3963 = vpop.xlane.xlu0 %3962
      %3964 = vadd.xlane.f32.xlu0 %v3935
      %v3965 = vpop.xlane.xlu0 %3964
      %3966 = vadd.xlane.f32.xlu0 %v3936
      %v3967 = vpop.xlane.xlu0 %3966
      %3968 = vadd.xlane.f32.xlu0 %v3937
      %v3969 = vpop.xlane.xlu0 %3968
      %3970 = vadd.xlane.f32.xlu0 %v3938
      %v3971 = vpop.xlane.xlu0 %3970
      %3972 = vadd.xlane.f32.xlu0 %v3939
      %v3973 = vpop.xlane.xlu0 %3972
      %v3974 = vmul.f32 %v3943, %v2222
      %v3975 = vmul.f32 %v3945, %v2222
      %v3976 = vmul.f32 %v3947, %v2222
      %v3977 = vmul.f32 %v3949, %v2222
      %v3978 = vmul.f32 %v3951, %v2222
      %v3979 = vmul.f32 %v3953, %v2222
      %v3980 = vmul.f32 %v3955, %v2222
      %v3981 = vmul.f32 %v3957, %v2222
      %v3982 = vmul.f32 %v3959, %v2222
      %v3983 = vmul.f32 %v3961, %v2222
      %v3984 = vmul.f32 %v3963, %v2222
      %v3985 = vmul.f32 %v3965, %v2222
      %v3986 = vmul.f32 %v3967, %v2222
      %v3987 = vmul.f32 %v3969, %v2222
      %v3988 = vmul.f32 %v3971, %v2222
      %v3989 = vmul.f32 %v3973, %v2222
      %v3990 = vsub.f32 %v3924, %v3974
      %v3991 = vsub.f32 %v3925, %v3975
      %v3992 = vsub.f32 %v3926, %v3976
      %v3993 = vsub.f32 %v3927, %v3977
      %v3994 = vsub.f32 %v3928, %v3978
      %v3995 = vsub.f32 %v3929, %v3979
      %v3996 = vsub.f32 %v3930, %v3980
      %v3997 = vsub.f32 %v3931, %v3981
      %v3998 = vsub.f32 %v3932, %v3982
      %v3999 = vsub.f32 %v3933, %v3983
      %v4000 = vsub.f32 %v3934, %v3984
      %v4001 = vsub.f32 %v3935, %v3985
      %v4002 = vsub.f32 %v3936, %v3986
      %v4003 = vsub.f32 %v3937, %v3987
      %v4004 = vsub.f32 %v3938, %v3988
      %v4005 = vsub.f32 %v3939, %v3989
      %v4006 = vmul.f32 %v3990, %v3990
      %v4007 = vmul.f32 %v3991, %v3991
      %v4008 = vmul.f32 %v3992, %v3992
      %v4009 = vmul.f32 %v3993, %v3993
      %v4010 = vmul.f32 %v3994, %v3994
      %v4011 = vmul.f32 %v3995, %v3995
      %v4012 = vmul.f32 %v3996, %v3996
      %v4013 = vmul.f32 %v3997, %v3997
      %v4014 = vmul.f32 %v3998, %v3998
      %v4015 = vmul.f32 %v3999, %v3999
      %v4016 = vmul.f32 %v4000, %v4000
      %v4017 = vmul.f32 %v4001, %v4001
      %v4018 = vmul.f32 %v4002, %v4002
      %v4019 = vmul.f32 %v4003, %v4003
      %v4020 = vmul.f32 %v4004, %v4004
      %v4021 = vmul.f32 %v4005, %v4005
      %4022 = vadd.xlane.f32.xlu0 %v4006
      %v4023 = vpop.xlane.xlu0 %4022
      %4024 = vadd.xlane.f32.xlu0 %v4007
      %v4025 = vpop.xlane.xlu0 %4024
      %4026 = vadd.xlane.f32.xlu0 %v4008
      %v4027 = vpop.xlane.xlu0 %4026
      %4028 = vadd.xlane.f32.xlu0 %v4009
      %v4029 = vpop.xlane.xlu0 %4028
      %4030 = vadd.xlane.f32.xlu0 %v4010
      %v4031 = vpop.xlane.xlu0 %4030
      %4032 = vadd.xlane.f32.xlu0 %v4011
      %v4033 = vpop.xlane.xlu0 %4032
      %4034 = vadd.xlane.f32.xlu0 %v4012
      %v4035 = vpop.xlane.xlu0 %4034
      %4036 = vadd.xlane.f32.xlu0 %v4013
      %v4037 = vpop.xlane.xlu0 %4036
      %4038 = vadd.xlane.f32.xlu0 %v4014
      %v4039 = vpop.xlane.xlu0 %4038
      %4040 = vadd.xlane.f32.xlu0 %v4015
      %v4041 = vpop.xlane.xlu0 %4040
      %4042 = vadd.xlane.f32.xlu0 %v4016
      %v4043 = vpop.xlane.xlu0 %4042
      %4044 = vadd.xlane.f32.xlu0 %v4017
      %v4045 = vpop.xlane.xlu0 %4044
      %4046 = vadd.xlane.f32.xlu0 %v4018
      %v4047 = vpop.xlane.xlu0 %4046
      %4048 = vadd.xlane.f32.xlu0 %v4019
      %v4049 = vpop.xlane.xlu0 %4048
      %4050 = vadd.xlane.f32.xlu0 %v4020
      %v4051 = vpop.xlane.xlu0 %4050
      %4052 = vadd.xlane.f32.xlu0 %v4021
      %v4053 = vpop.xlane.xlu0 %4052
      %v4054 = vmul.f32 %v4023, %v2222
      %v4055 = vmul.f32 %v4025, %v2222
      %v4056 = vmul.f32 %v4027, %v2222
      %v4057 = vmul.f32 %v4029, %v2222
      %v4058 = vmul.f32 %v4031, %v2222
      %v4059 = vmul.f32 %v4033, %v2222
      %v4060 = vmul.f32 %v4035, %v2222
      %v4061 = vmul.f32 %v4037, %v2222
      %v4062 = vmul.f32 %v4039, %v2222
      %v4063 = vmul.f32 %v4041, %v2222
      %v4064 = vmul.f32 %v4043, %v2222
      %v4065 = vmul.f32 %v4045, %v2222
      %v4066 = vmul.f32 %v4047, %v2222
      %v4067 = vmul.f32 %v4049, %v2222
      %v4068 = vmul.f32 %v4051, %v2222
      %v4069 = vmul.f32 %v4053, %v2222
      %v4070 = vadd.f32 %v4054, 1e-05
      %v4071 = vadd.f32 %v4055, 1e-05
      %v4072 = vadd.f32 %v4056, 1e-05
      %v4073 = vadd.f32 %v4057, 1e-05
      %v4074 = vadd.f32 %v4058, 1e-05
      %v4075 = vadd.f32 %v4059, 1e-05
      %v4076 = vadd.f32 %v4060, 1e-05
      %v4077 = vadd.f32 %v4061, 1e-05
      %v4078 = vadd.f32 %v4062, 1e-05
      %v4079 = vadd.f32 %v4063, 1e-05
      %v4080 = vadd.f32 %v4064, 1e-05
      %v4081 = vadd.f32 %v4065, 1e-05
      %v4082 = vadd.f32 %v4066, 1e-05
      %v4083 = vadd.f32 %v4067, 1e-05
      %v4084 = vadd.f32 %v4068, 1e-05
      %v4085 = vadd.f32 %v4069, 1e-05
      %v4086 = vrsqrt.pop %v4070
      %v4087 = vrsqrt.pop %v4071
      %v4088 = vrsqrt.pop %v4072
      %v4089 = vrsqrt.pop %v4073
      %v4090 = vrsqrt.pop %v4074
      %v4091 = vrsqrt.pop %v4075
      %v4092 = vrsqrt.pop %v4076
      %v4093 = vrsqrt.pop %v4077
      %v4094 = vrsqrt.pop %v4078
      %v4095 = vrsqrt.pop %v4079
      %v4096 = vrsqrt.pop %v4080
      %v4097 = vrsqrt.pop %v4081
      %v4098 = vrsqrt.pop %v4082
      %v4099 = vrsqrt.pop %v4083
      %v4100 = vrsqrt.pop %v4084
      %v4101 = vrsqrt.pop %v4085
      %v4102 = vmul.f32 %v3990, %v4086
      %v4103 = vmul.f32 %v3991, %v4087
      %v4104 = vmul.f32 %v3992, %v4088
      %v4105 = vmul.f32 %v3993, %v4089
      %v4106 = vmul.f32 %v3994, %v4090
      %v4107 = vmul.f32 %v3995, %v4091
      %v4108 = vmul.f32 %v3996, %v4092
      %v4109 = vmul.f32 %v3997, %v4093
      %v4110 = vmul.f32 %v3998, %v4094
      %v4111 = vmul.f32 %v3999, %v4095
      %v4112 = vmul.f32 %v4000, %v4096
      %v4113 = vmul.f32 %v4001, %v4097
      %v4114 = vmul.f32 %v4002, %v4098
      %v4115 = vmul.f32 %v4003, %v4099
      %v4116 = vmul.f32 %v4004, %v4100
      %v4117 = vmul.f32 %v4005, %v4101
      %v4119 = vlaneseq
      %v4120 = vshrl.u32 %v4119, 7
      %v4121 = vsub.s32 0, %v4120
      %v4122 = vrot.slane %v3940, %v4121
      %v4124 = vmul.f32 %v4102, %v4122
      %v4125 = vmul.f32 %v4103, %v4122
      %v4126 = vmul.f32 %v4104, %v4122
      %v4127 = vmul.f32 %v4105, %v4122
      %v4128 = vmul.f32 %v4106, %v4122
      %v4129 = vmul.f32 %v4107, %v4122
      %v4130 = vmul.f32 %v4108, %v4122
      %v4131 = vmul.f32 %v4109, %v4122
      %v4132 = vmul.f32 %v4110, %v4122
      %v4133 = vmul.f32 %v4111, %v4122
      %v4134 = vmul.f32 %v4112, %v4122
      %v4135 = vmul.f32 %v4113, %v4122
      %v4136 = vmul.f32 %v4114, %v4122
      %v4137 = vmul.f32 %v4115, %v4122
      %v4138 = vmul.f32 %v4116, %v4122
      %v4139 = vmul.f32 %v4117, %v4122
      %v4141 = vlaneseq
      %v4142 = vshrl.u32 %v4141, 7
      %v4143 = vsub.s32 0, %v4142
      %v4144 = vrot.slane %v3941, %v4143
      %v4146 = vadd.f32 %v4124, %v4144
      %v4147 = vadd.f32 %v4125, %v4144
      %v4148 = vadd.f32 %v4126, %v4144
      %v4149 = vadd.f32 %v4127, %v4144
      %v4150 = vadd.f32 %v4128, %v4144
      %v4151 = vadd.f32 %v4129, %v4144
      %v4152 = vadd.f32 %v4130, %v4144
      %v4153 = vadd.f32 %v4131, %v4144
      %v4154 = vadd.f32 %v4132, %v4144
      %v4155 = vadd.f32 %v4133, %v4144
      %v4156 = vadd.f32 %v4134, %v4144
      %v4157 = vadd.f32 %v4135, %v4144
      %v4158 = vadd.f32 %v4136, %v4144
      %v4159 = vadd.f32 %v4137, %v4144
      %v4160 = vadd.f32 %v4138, %v4144
      %v4161 = vadd.f32 %v4139, %v4144
      %v4162 = vpack.c.bf16 %v4147, %v4146
      %v4163 = vpack.c.bf16 %v4149, %v4148
      %v4164 = vpack.c.bf16 %v4151, %v4150
      %v4165 = vpack.c.bf16 %v4153, %v4152
      %v4166 = vpack.c.bf16 %v4155, %v4154
      %v4167 = vpack.c.bf16 %v4157, %v4156
      %v4168 = vpack.c.bf16 %v4159, %v4158
      %v4169 = vpack.c.bf16 %v4161, %v4160
      %v4178 = vunpack.c.l.b16 %v4162
      %v4179 = vunpack.c.h.b16 %v4162
      %v4180 = vunpack.c.l.b16 %v4163
      %v4181 = vunpack.c.h.b16 %v4163
      %v4182 = vunpack.c.l.b16 %v4164
      %v4183 = vunpack.c.h.b16 %v4164
      %v4184 = vunpack.c.l.b16 %v4165
      %v4185 = vunpack.c.h.b16 %v4165
      %v4186 = vunpack.c.l.b16 %v4166
      %v4187 = vunpack.c.h.b16 %v4166
      %v4188 = vunpack.c.l.b16 %v4167
      %v4189 = vunpack.c.h.b16 %v4167
      %v4190 = vunpack.c.l.b16 %v4168
      %v4191 = vunpack.c.h.b16 %v4168
      %v4192 = vunpack.c.l.b16 %v4169
      %v4193 = vunpack.c.h.b16 %v4169
      %v4194 = vpack.c.b16 %v4178, %v4178
      %v4195 = vpack.c.b16 %v4179, %v4179
      %v4196 = vpack.c.b16 %v4180, %v4180
      %v4197 = vpack.c.b16 %v4181, %v4181
      %v4198 = vpack.c.b16 %v4182, %v4182
      %v4199 = vpack.c.b16 %v4183, %v4183
      %v4200 = vpack.c.b16 %v4184, %v4184
      %v4201 = vpack.c.b16 %v4185, %v4185
      %v4202 = vpack.c.b16 %v4186, %v4186
      %v4203 = vpack.c.b16 %v4187, %v4187
      %v4204 = vpack.c.b16 %v4188, %v4188
      %v4205 = vpack.c.b16 %v4189, %v4189
      %v4206 = vpack.c.b16 %v4190, %v4190
      %v4207 = vpack.c.b16 %v4191, %v4191
      %v4208 = vpack.c.b16 %v4192, %v4192
      %v4209 = vpack.c.b16 %v4193, %v4193
      %4226 = vst [vmem:[%s481] sm:$0xf] %v4194
      %4227 = vst [vmem:[%s481 + $0x4] sm:$0xf] %v4195
      %4228 = vst [vmem:[%s481 + $0x8] sm:$0xf] %v4196
      %4229 = vst [vmem:[%s481 + $0xc] sm:$0xf] %v4197
      %4230 = vst [vmem:[%s481 + $0x10] sm:$0xf] %v4198
      %4231 = vst [vmem:[%s481 + $0x14] sm:$0xf] %v4199
      %4232 = vst [vmem:[%s481 + $0x18] sm:$0xf] %v4200
      %4233 = vst [vmem:[%s481 + $0x1c] sm:$0xf] %v4201
      %4234 = vst [vmem:[%s481 + $0x20] sm:$0xf] %v4202
      %4235 = vst [vmem:[%s481 + $0x24] sm:$0xf] %v4203
      %4236 = vst [vmem:[%s481 + $0x28] sm:$0xf] %v4204
      %4237 = vst [vmem:[%s481 + $0x2c] sm:$0xf] %v4205
      %4238 = vst [vmem:[%s481 + $0x30] sm:$0xf] %v4206
      %4239 = vst [vmem:[%s481 + $0x34] sm:$0xf] %v4207
      %4240 = vst [vmem:[%s481 + $0x38] sm:$0xf] %v4208
      %4241 = vst [vmem:[%s481 + $0x3c] sm:$0xf] %v4209
      %p4242 = scmp.lt.s32.totalorder %s25, 1
      %s4243 = scalar_select %p4242, %s25, 1
      %s4244 = smul.addr %s4243, 16
      %s4245 = smul.addr %s4244, 4
      %s4246 = scalar_lea.vmem %s14, %s4245
      // Predicated region
      $region77: #{easyrec_forward.5} parent=75 // pred_check
        %p4247 = pneg %p347
      $region78: #{easyrec_forward.5} parent=75 // pred_check_branch
        %4249 = sbr.rel (%p4247) target = $region80
      $region79: #{easyrec_forward.5} parent=75 // pred_region
        _
      $region80: #{easyrec_forward.5} parent=75 // pred_fallthru
        _
    $region76: #{easyrec_forward.5} parent=5 // pred_fallthru
      _
    %p4250 = scmp.le.s32.totalorder 2, %s20
    // Predicated region
    $region81: #{easyrec_forward.5} parent=5 // pred_check
      %p4251 = pneg %p4250
    $region82: #{easyrec_forward.5} parent=5 // pred_check_branch
      %4253 = sbr.rel (%p4251) target = $region84
    $region83: #{easyrec_forward.5} parent=5 // pred_region
      %s4254 = ssub.s32 %s20, 2
      // Predicated region
      $region85: #{easyrec_forward.5} parent=83 // pred_check
        %p4255 = pneg %p353
      $region86: #{easyrec_forward.5} parent=83 // pred_check_branch
        %4257 = sbr.rel (%p4255) target = $region88
      $region87: #{easyrec_forward.5} parent=83 // pred_region
        %p4258 = scmp.lt.s32.totalorder %s26, 1
        %s4259 = scalar_select %p4258, %s26, 1
        %s4260 = smul.addr %s4259, 16
        %s4261 = smul.addr %s4260, 4
        %s4262 = scalar_lea.vmem %s14, %s4261
      $region88: #{easyrec_forward.5} parent=83 // pred_fallthru
        _
    $region84: #{easyrec_forward.5} parent=5 // pred_fallthru
      _
  $region6: #{easyrec_forward.5} parent=0 // loop_footer
    %s24 = sadd.s32 1, %s20
  $region7: #{easyrec_forward.5} parent=0 // loop_footer_branch
    %19 = sbr.rel target = $region3
  $region8: #{easyrec_forward.5} parent=0 // loop_exit
    _

</llo_original>
